<compile_context>
chip_gen: v5e
topology: v5e:2x2
jax: 0.10.0
libtpu: 0.0.40
codegen_flags: <defaults>
</compile_context>

<pallas_src>
import numpy as np
import jax
import jax.numpy as jnp
from jax.experimental import pallas as pl
from jax.experimental.pallas import tpu as pltpu


def _round_up(n, m):
    return ((n + m - 1) // m) * m


# ----------------------------------------------------------------------------
# Pallas kernels
# ----------------------------------------------------------------------------
def _bigru_body(x_ref, wih_ref, whh_ref, bgx_ref, bhn_ref, lens_ref,
                pool_ref, hid_ref, gx_sc):
    """One direction of a bidirectional GRU + fused length-masked max-pool.

    Grid axis 0 selects the direction (0 = forward, 1 = backward); the per-
    direction weights and the per-direction halves of the outputs are routed
    by the BlockSpecs, so only the time order differs inside the body.

    x_ref:    (L, N, E)    time-major inputs (shared by both directions)
    wih_ref:  (E, 3Hp)     gate-padded input->hidden weights (gates [r,z,n])
    whh_ref:  (Hp, 3Hp)    gate-padded hidden->hidden weights
    bgx_ref:  (1, 3Hp)     b_ih + [b_hr, b_hz, 0]  (folded r/z hidden biases)
    bhn_ref:  (1, Hp)      n-gate hidden bias (stays inside r*(...))
    lens_ref: (N, 1) int32 valid timesteps per row
    pool_ref: (N, Hp)      this direction's half of the pooled output
    hid_ref:  (L, N, Hp)   this direction's half of the full hiddens (or None)
    gx_sc:    (L, N, 3Hp)  VMEM scratch: hoisted input projection
    """
    d = pl.program_id(0)
    L, N, E = x_ref.shape
    Hp = whh_ref.shape[0]

    # Read weights / biases once (no per-step re-broadcast).
    w_ih = wih_ref[...]
    w_hh = whh_ref[...]
    b_gx = bgx_ref[...]
    b_hn = bhn_ref[...]
    lens = lens_ref[...]                                    # (N, 1) int32

    # Hoisted input projection: one matmul for all timesteps, biases folded in.
    x_all = x_ref[...].reshape(L * N, E)
    gx_sc[...] = (jnp.dot(x_all, w_ih, preferred_element_type=jnp.float32)
                  + b_gx).reshape(L, N, 3 * Hp)

    def run(time_order):
        h = jnp.zeros((N, Hp), jnp.float32)                 # running hidden
        mx = jnp.full((N, Hp), -1e30, jnp.float32)          # running max
        for t in time_order:                                # STATIC time index
            gx = gx_sc[t]                                   # (N, 3Hp)
            gh = jnp.dot(h, w_hh, preferred_element_type=jnp.float32)
            r = jax.nn.sigmoid(gx[:, :Hp] + gh[:, :Hp])
            z = jax.nn.sigmoid(gx[:, Hp:2 * Hp] + gh[:, Hp:2 * Hp])
            n = jnp.tanh(gx[:, 2 * Hp:] + r * (gh[:, 2 * Hp:] + b_hn))
            h = (1.0 - z) * n + z * h
            valid = lens > t                                # (N, 1)
            mx = jnp.where(valid, jnp.maximum(mx, h), mx)
            if hid_ref is not None:
                hid_ref[t] = h                              # static store
        pool_ref[...] = mx

    @pl.when(d == 0)
    def _():
        run(range(L))

    @pl.when(d == 1)
    def _():
        run(range(L - 1, -1, -1))


def _bigru_pool_kernel(x_ref, wih_ref, whh_ref, bgx_ref, bhn_ref, lens_ref,
                       pool_ref, gx_sc):
    _bigru_body(x_ref, wih_ref, whh_ref, bgx_ref, bhn_ref, lens_ref,
                pool_ref, None, gx_sc)


def _bigru_hidden_pool_kernel(x_ref, wih_ref, whh_ref, bgx_ref, bhn_ref,
                              lens_ref, hid_ref, pool_ref, gx_sc):
    _bigru_body(x_ref, wih_ref, whh_ref, bgx_ref, bhn_ref, lens_ref,
                pool_ref, hid_ref, gx_sc)


# ----------------------------------------------------------------------------
# Pallas wrapper
# ----------------------------------------------------------------------------
def bi_gru_pool_pallas(xt, lens2d, wih2, whh2, bgx2, bhn2, *, emit_hidden):
    """Bidirectional GRU with fused length-masked max-pool.

    xt:     (L, N, E) time-major inputs (N padded to a multiple of 8)
    lens2d: (N, 1) int32 valid lengths
    wih2:   (2, E, 3Hp), whh2: (2, Hp, 3Hp), bgx2: (2, 1, 3Hp), bhn2: (2, 1, Hp)

    Returns pooled (N, 2Hp); if emit_hidden also the full hiddens (L, N, 2Hp),
    fwd in [..., :Hp], bwd in [..., Hp:] (lane-dense combined output).
    """
    L, N, E = xt.shape
    Hp = whh2.shape[1]

    in_specs = [
        pl.BlockSpec((L, N, E), lambda d: (0, 0, 0)),           # shared x
        pl.BlockSpec((None, E, 3 * Hp), lambda d: (d, 0, 0)),   # per-dir W_ih
        pl.BlockSpec((None, Hp, 3 * Hp), lambda d: (d, 0, 0)),  # per-dir W_hh
        pl.BlockSpec((None, 1, 3 * Hp), lambda d: (d, 0, 0)),   # per-dir b_gx
        pl.BlockSpec((None, 1, Hp), lambda d: (d, 0, 0)),       # per-dir b_hn
        pl.BlockSpec((N, 1), lambda d: (0, 0)),                 # shared lens
    ]
    pool_spec = pl.BlockSpec((N, Hp), lambda d: (0, d))         # dir -> Hp half
    pool_shape = jax.ShapeDtypeStruct((N, 2 * Hp), jnp.float32)

    if emit_hidden:
        out_shape = (jax.ShapeDtypeStruct((L, N, 2 * Hp), jnp.float32),
                     pool_shape)
        out_specs = (pl.BlockSpec((L, N, Hp), lambda d: (0, 0, d)), pool_spec)
        kernel = _bigru_hidden_pool_kernel
    else:
        out_shape = pool_shape
        out_specs = pool_spec
        kernel = _bigru_pool_kernel

    return pl.pallas_call(
        kernel,
        out_shape=out_shape,
        grid=(2,),
        in_specs=in_specs,
        out_specs=out_specs,
        scratch_shapes=[pltpu.VMEM((L, N, 3 * Hp), jnp.float32)],
        compiler_params=pltpu.CompilerParams(
            dimension_semantics=("parallel",)),
    )(xt, wih2, whh2, bgx2, bhn2, lens2d)


# ----------------------------------------------------------------------------
# Parameter preparation (done ONCE: transpose, fold biases, gate-pad, stack)
# ----------------------------------------------------------------------------
def _prep_dir(p, H, Hp):
    w_ih, w_hh, b_ih, b_hh = p
    pad_h = Hp - H

    def pad_gates_last(a):
        # a: (..., 3H) -> (..., 3Hp), each gate block zero-padded to Hp lanes.
        widths = [(0, 0)] * (a.ndim - 1) + [(0, pad_h)]
        parts = [jnp.pad(a[..., g * H:(g + 1) * H], widths) for g in range(3)]
        return jnp.concatenate(parts, axis=-1)

    wih = pad_gates_last(jnp.transpose(w_ih))                            # (E, 3Hp)
    whh = pad_gates_last(
        jnp.pad(jnp.transpose(w_hh), ((0, pad_h), (0, 0))))              # (Hp, 3Hp)
    # Fold r/z hidden biases into the input projection; keep b_hn separate
    # (it must stay inside r*(W_hn h + b_hn) to match PyTorch GRU semantics).
    b_gx = b_ih + jnp.concatenate([b_hh[:2 * H], jnp.zeros((H,), b_hh.dtype)])
    bgx = pad_gates_last(b_gx[None, :])                                  # (1, 3Hp)
    bhn = jnp.pad(b_hh[None, 2 * H:3 * H], ((0, 0), (0, pad_h)))         # (1, Hp)
    return wih, whh, bgx, bhn


def prepare_params(raw, hidden_size):
    H = hidden_size
    Hp = _round_up(H, 128)          # lane-align gates (no-op when H % 128 == 0)

    def prep(pf, pb):
        f = _prep_dir(pf, H, Hp)
        b = _prep_dir(pb, H, Hp)
        return tuple(jnp.stack([fi, bi]) for fi, bi in zip(f, b))

    return {
        "embedding": raw["embedding"],
        "word": prep(raw["word_f"], raw["word_b"]),
        "sent": prep(raw["sent_f"], raw["sent_b"]),
        "H": H,
        "Hp": Hp,
    }


# ----------------------------------------------------------------------------
# Module glue (matches stack_encoder.forward)
# ----------------------------------------------------------------------------
def pad_doc(words_out, doc_lens):
    """words_out: (sum(doc_lens), D).  Returns (B, max_doc_len, D)."""
    max_doc_len = max(doc_lens)
    D = words_out.shape[1]
    chunks, start = [], 0
    for dl in doc_lens:
        valid = words_out[start:start + dl]
        start += dl
        if dl < max_doc_len:
            pad = jnp.zeros((max_doc_len - dl, D), words_out.dtype)
            valid = jnp.concatenate([valid, pad], axis=0)
        chunks.append(valid[None])
    return jnp.concatenate(chunks, axis=0)


def stack_encoder_forward(x, doc_lens, params):
    """x: (N_sents, L) int32 token ids (0 = pad); doc_lens: Python list of ints."""
    N, L = x.shape
    H, Hp = params["H"], params["Hp"]

    # ---- word level: bi-GRU + fused max-pool (no (L,N,H) hiddens in HBM) ----
    N_pad = _round_up(max(N, 8), 8)                      # sublane-pad the batch
    x_pad = jnp.pad(x, ((0, N_pad - N), (0, 0)))
    sent_lens = jnp.sum(jnp.sign(x_pad), axis=1).astype(jnp.int32)     # (N_pad,)
    word_embed = params["embedding"][x_pad]                            # (N_pad, L, E)
    xt = jnp.transpose(word_embed, (1, 0, 2))                          # (L, N_pad, E)
    wpool = bi_gru_pool_pallas(xt, sent_lens.reshape(N_pad, 1),
                               *params["word"], emit_hidden=False)     # (N_pad, 2Hp)
    sent_embed = jnp.concatenate(
        [wpool[:N, :H], wpool[:N, Hp:Hp + H]], axis=1)                 # (N, 2H)

    # ---- doc re-batching (ragged, static Python doc_lens) ----
    sent_embed_doc = pad_doc(sent_embed, doc_lens)                     # (B, Dmax, 2H)
    B, Dmax, _ = sent_embed_doc.shape
    B_pad = _round_up(max(B, 8), 8)
    se_pad = jnp.pad(sent_embed_doc, ((0, B_pad - B), (0, 0), (0, 0)))

    # ---- sentence level: bi-GRU emits full hiddens + fused doc-level pool ----
    st = jnp.transpose(se_pad, (1, 0, 2))                              # (Dmax, B_pad, 2H)
    dl = jnp.zeros((B_pad,), jnp.int32).at[:B].set(
        jnp.asarray(doc_lens, jnp.int32))
    shid, dpool = bi_gru_pool_pallas(st, dl.reshape(B_pad, 1),
                                     *params["sent"], emit_hidden=True)
    sh = jnp.transpose(shid, (1, 0, 2))[:B]                            # (B, Dmax, 2Hp)
    sent_hidden = jnp.concatenate(
        [sh[..., :H], sh[..., Hp:Hp + H]], axis=-1)                    # (B, Dmax, 2H)
    doc_embed = jnp.concatenate(
        [dpool[:B, :H], dpool[:B, Hp:Hp + H]], axis=1)                 # (B, 2H)
    return sent_hidden, doc_embed, sent_embed_doc


# ----------------------------------------------------------------------------
# Pure-JAX reference (PyTorch GRU semantics) for correctness check
# ----------------------------------------------------------------------------
def _ref_gru_dir(x, w_ih, w_hh, b_ih, b_hh):
    H = w_hh.shape[1]

    def step(h, x_t):
        gx = x_t @ w_ih.T + b_ih
        gh = h @ w_hh.T + b_hh
        r = jax.nn.sigmoid(gx[:, :H] + gh[:, :H])
        z = jax.nn.sigmoid(gx[:, H:2 * H] + gh[:, H:2 * H])
        n = jnp.tanh(gx[:, 2 * H:] + r * gh[:, 2 * H:])
        h_new = (1.0 - z) * n + z * h
        return h_new, h_new

    h0 = jnp.zeros((x.shape[0], H), jnp.float32)
    _, hs = jax.lax.scan(step, h0, jnp.transpose(x, (1, 0, 2)))
    return jnp.transpose(hs, (1, 0, 2))


def _ref_bi_gru(x, pf, pb):
    hf = _ref_gru_dir(x, *pf)
    hb = _ref_gru_dir(x[:, ::-1], *pb)[:, ::-1]
    return jnp.concatenate([hf, hb], axis=-1)


def _ref_maxpool(x, lens):
    mask = jnp.arange(x.shape[1])[None, :, None] < lens[:, None, None]
    return jnp.max(jnp.where(mask, x, -1e30), axis=1)


def _ref_forward(x, doc_lens, raw):
    sent_lens = jnp.sum(jnp.sign(x), axis=1).astype(jnp.int32)
    we = raw["embedding"][x]
    wh = _ref_bi_gru(we, raw["word_f"], raw["word_b"])
    se = _ref_maxpool(wh, sent_lens)
    se = pad_doc(se, doc_lens)
    sh = _ref_bi_gru(se, raw["sent_f"], raw["sent_b"])
    de = _ref_maxpool(sh, jnp.asarray(doc_lens, jnp.int32))
    return sh, de, se


# ----------------------------------------------------------------------------
# Parameter init (deterministic, matches PyTorch GRU parameter shapes)
# ----------------------------------------------------------------------------
def init_gru_dir(key, input_size, hidden_size):
    k = 1.0 / np.sqrt(hidden_size)
    k0, k1, k2, k3 = jax.random.split(key, 4)
    w_ih = jax.random.uniform(k0, (3 * hidden_size, input_size), jnp.float32, -k, k)
    w_hh = jax.random.uniform(k1, (3 * hidden_size, hidden_size), jnp.float32, -k, k)
    b_ih = jax.random.uniform(k2, (3 * hidden_size,), jnp.float32, -k, k)
    b_hh = jax.random.uniform(k3, (3 * hidden_size,), jnp.float32, -k, k)
    return (w_ih, w_hh, b_ih, b_hh)


if __name__ == "__main__":
    # args: vocab_size=50, embed_dim=32, hidden_size=32, bidirectional=True
    VOCAB, E, H = 50, 32, 32
    doc_lens = [3, 2]          # B=2 docs, 5 sentences total
    N, L = sum(doc_lens), 8    # 5 sentences, max 8 words each

    key = jax.random.PRNGKey(0)
    k_emb, k_wf, k_wb, k_sf, k_sb, k_tok = jax.random.split(key, 6)

    raw_params = {
        "embedding": jax.random.normal(k_emb, (VOCAB, E), jnp.float32),
        "word_f": init_gru_dir(k_wf, E, H),
        "word_b": init_gru_dir(k_wb, E, H),
        "sent_f": init_gru_dir(k_sf, 2 * H, H),
        "sent_b": init_gru_dir(k_sb, 2 * H, H),
    }
    params = prepare_params(raw_params, H)

    # deterministic token ids, 0 = padding, every sentence has >=1 real token
    tokens = jax.random.randint(k_tok, (N, L), 1, VOCAB, dtype=jnp.int32)
    sent_lens = jnp.array([8, 5, 3, 6, 4], jnp.int32)
    pad_mask = (jnp.arange(L)[None, :] < sent_lens[:, None]).astype(jnp.int32)
    x = tokens * pad_mask                                   # (N, L) int32

    sent_hidden, doc_embed, sent_embed = stack_encoder_forward(x, doc_lens, params)
    jax.block_until_ready((sent_hidden, doc_embed, sent_embed))

    # correctness check against pure-JAX reference
    ref_sh, ref_de, ref_se = _ref_forward(x, doc_lens, raw_params)
    np.testing.assert_allclose(np.asarray(sent_hidden), np.asarray(ref_sh), atol=1e-5, rtol=1e-5)
    np.testing.assert_allclose(np.asarray(doc_embed), np.asarray(ref_de), atol=1e-5, rtol=1e-5)
    np.testing.assert_allclose(np.asarray(sent_embed), np.asarray(ref_se), atol=1e-5, rtol=1e-5)

    assert sent_hidden.shape == (len(doc_lens), max(doc_lens), 2 * H)
    assert doc_embed.shape == (len(doc_lens), 2 * H)
    assert sent_embed.shape == (len(doc_lens), max(doc_lens), 2 * H)

    print("KERNEL_OK")
</pallas_src>

<mosaic_0001>
module attributes {stable_mosaic.version = 11 : i64} {
  func.func @_bigru_pool_kernel(%arg0: i32, %arg1: memref<8x8x32xf32, #tpu.memory_space<vmem>>, %arg2: memref<1x32x384xf32, #tpu.memory_space<vmem>>, %arg3: memref<1x128x384xf32, #tpu.memory_space<vmem>>, %arg4: memref<1x1x384xf32, #tpu.memory_space<vmem>>, %arg5: memref<1x1x128xf32, #tpu.memory_space<vmem>>, %arg6: memref<8x1xi32, #tpu.memory_space<vmem>>, %arg7: memref<8x128xf32, #tpu.memory_space<vmem>>, %arg8: memref<8x8x384xf32, #tpu.memory_space<vmem>>) attributes {dimension_semantics = [#tpu.dimension_semantics<parallel>], iteration_bounds = array<i64: 2>, scalar_prefetch = 0 : i64, scratch_operands = 1 : i64, tpu.core_type = #tpu.core_type<tc>, window_params = [{pipeline_mode = #tpu.pipeline_mode<synchronous>, transform_indices = @transform_0, window_bounds = array<i64: 8, 8, 32>}, {transform_indices = @transform_1, window_bounds = array<i64: 1, 32, 384>}, {transform_indices = @transform_2, window_bounds = array<i64: 1, 128, 384>}, {transform_indices = @transform_3, window_bounds = array<i64: 1, 1, 384>}, {transform_indices = @transform_4, window_bounds = array<i64: 1, 1, 128>}, {pipeline_mode = #tpu.pipeline_mode<synchronous>, transform_indices = @transform_5, window_bounds = array<i64: 8, 1>}, {transform_indices = @transform_6, window_bounds = array<i64: 8, 128>}]} {
    %c0 = arith.constant 0 : index
    %c0_0 = arith.constant 0 : index
    %c0_1 = arith.constant 0 : index
    %0 = vector.load %arg2[%c0, %c0_0, %c0_1] : memref<1x32x384xf32, #tpu.memory_space<vmem>>, vector<1x32x384xf32>
    %1 = vector.shape_cast %0 : vector<1x32x384xf32> to vector<32x384xf32>
    %c0_2 = arith.constant 0 : index
    %c0_3 = arith.constant 0 : index
    %c0_4 = arith.constant 0 : index
    %2 = vector.load %arg3[%c0_2, %c0_3, %c0_4] : memref<1x128x384xf32, #tpu.memory_space<vmem>>, vector<1x128x384xf32>
    %3 = vector.shape_cast %2 : vector<1x128x384xf32> to vector<128x384xf32>
    %c0_5 = arith.constant 0 : index
    %c0_6 = arith.constant 0 : index
    %c0_7 = arith.constant 0 : index
    %4 = vector.load %arg4[%c0_5, %c0_6, %c0_7] : memref<1x1x384xf32, #tpu.memory_space<vmem>>, vector<1x1x384xf32>
    %5 = vector.shape_cast %4 : vector<1x1x384xf32> to vector<1x384xf32>
    %c0_8 = arith.constant 0 : index
    %c0_9 = arith.constant 0 : index
    %c0_10 = arith.constant 0 : index
    %6 = vector.load %arg5[%c0_8, %c0_9, %c0_10] : memref<1x1x128xf32, #tpu.memory_space<vmem>>, vector<1x1x128xf32>
    %7 = vector.shape_cast %6 : vector<1x1x128xf32> to vector<1x128xf32>
    %c0_11 = arith.constant 0 : index
    %c0_12 = arith.constant 0 : index
    %8 = vector.load %arg6[%c0_11, %c0_12] : memref<8x1xi32, #tpu.memory_space<vmem>>, vector<8x1xi32>
    %c0_13 = arith.constant 0 : index
    %c0_14 = arith.constant 0 : index
    %c0_15 = arith.constant 0 : index
    %9 = vector.load %arg1[%c0_13, %c0_14, %c0_15] : memref<8x8x32xf32, #tpu.memory_space<vmem>>, vector<8x8x32xf32>
    %10 = vector.shape_cast %9 : vector<8x8x32xf32> to vector<64x32xf32>
    %cst = arith.constant dense<0.000000e+00> : vector<64x384xf32>
    %11 = tpu.matmul %10, %1, %cst {dimension_numbers = #tpu.dot_dimension_numbers<[1], [0], [0], [1], [0, 0, 1, 1], [], []>} : vector<64x32xf32>, vector<32x384xf32>, vector<64x384xf32> -> vector<64x384xf32>
    %12 = vector.broadcast %5 : vector<1x384xf32> to vector<64x384xf32>
    %13 = arith.addf %11, %12 : vector<64x384xf32>
    %14 = vector.shape_cast %13 : vector<64x384xf32> to vector<8x8x384xf32>
    %c0_16 = arith.constant 0 : index
    %c0_17 = arith.constant 0 : index
    %c0_18 = arith.constant 0 : index
    %15 = vector.load %arg8[%c0_16, %c0_17, %c0_18] : memref<8x8x384xf32, #tpu.memory_space<vmem>>, vector<8x8x384xf32>
    tpu.vector_store %arg8[%c0_16, %c0_17, %c0_18], %14 {strides = array<i32>} : memref<8x8x384xf32, #tpu.memory_space<vmem>>, vector<8x8x384xf32>,
    %c0_i32 = arith.constant 0 : i32
    %16 = arith.cmpi eq, %arg0, %c0_i32 : i32
    %17 = arith.extui %16 : i1 to i32
    %c0_i32_19 = arith.constant 0 : i32
    %18 = arith.cmpi ne, %17, %c0_i32_19 : i32
    scf.if %18 {
      %cst_21 = arith.constant 0.000000e+00 : f32
      %22 = vector.broadcast %cst_21 : f32 to vector<8x128xf32>
      %cst_22 = arith.constant -1.000000e+30 : f32
      %23 = vector.broadcast %cst_22 : f32 to vector<8x128xf32>
      %c0_23 = arith.constant 0 : index
      %c0_24 = arith.constant 0 : index
      %c0_25 = arith.constant 0 : index
      %24 = vector.load %arg8[%c0_23, %c0_24, %c0_25] : memref<8x8x384xf32, #tpu.memory_space<vmem>>, vector<1x8x384xf32>
      %25 = vector.shape_cast %24 : vector<1x8x384xf32> to vector<8x384xf32>
      %cst_26 = arith.constant dense<0.000000e+00> : vector<8x384xf32>
      %26 = tpu.matmul %22, %3, %cst_26 {dimension_numbers = #tpu.dot_dimension_numbers<[1], [0], [0], [1], [0, 0, 1, 1], [], []>} : vector<8x128xf32>, vector<128x384xf32>, vector<8x384xf32> -> vector<8x384xf32>
      %27 = vector.extract_strided_slice %25 {offsets = [0, 0], sizes = [8, 128], strides = [1, 1]} : vector<8x384xf32> to vector<8x128xf32>
      %28 = vector.extract_strided_slice %26 {offsets = [0, 0], sizes = [8, 128], strides = [1, 1]} : vector<8x384xf32> to vector<8x128xf32>
      %29 = arith.addf %27, %28 : vector<8x128xf32>
      %30 = arith.negf %29 : vector<8x128xf32>
      %31 = math.exp %30 : vector<8x128xf32>
      %cst_27 = arith.constant 1.000000e+00 : f32
      %32 = vector.broadcast %cst_27 : f32 to vector<8x128xf32>
      %33 = arith.addf %32, %31 : vector<8x128xf32>
      %34 = arith.divf %32, %33 : vector<8x128xf32>
      %35 = vector.extract_strided_slice %25 {offsets = [0, 128], sizes = [8, 128], strides = [1, 1]} : vector<8x384xf32> to vector<8x128xf32>
      %36 = vector.extract_strided_slice %26 {offsets = [0, 128], sizes = [8, 128], strides = [1, 1]} : vector<8x384xf32> to vector<8x128xf32>
      %37 = arith.addf %35, %36 : vector<8x128xf32>
      %38 = arith.negf %37 : vector<8x128xf32>
      %39 = math.exp %38 : vector<8x128xf32>
      %cst_28 = arith.constant 1.000000e+00 : f32
      %40 = vector.broadcast %cst_28 : f32 to vector<8x128xf32>
      %41 = arith.addf %40, %39 : vector<8x128xf32>
      %42 = arith.divf %40, %41 : vector<8x128xf32>
      %43 = vector.extract_strided_slice %25 {offsets = [0, 256], sizes = [8, 128], strides = [1, 1]} : vector<8x384xf32> to vector<8x128xf32>
      %44 = vector.extract_strided_slice %26 {offsets = [0, 256], sizes = [8, 128], strides = [1, 1]} : vector<8x384xf32> to vector<8x128xf32>
      %45 = vector.broadcast %7 : vector<1x128xf32> to vector<8x128xf32>
      %46 = arith.addf %44, %45 : vector<8x128xf32>
      %47 = arith.mulf %34, %46 : vector<8x128xf32>
      %48 = arith.addf %43, %47 : vector<8x128xf32>
      %49 = math.tanh %48 : vector<8x128xf32>
      %cst_29 = arith.constant 1.000000e+00 : f32
      %50 = vector.broadcast %cst_29 : f32 to vector<8x128xf32>
      %51 = arith.subf %50, %42 : vector<8x128xf32>
      %52 = arith.mulf %51, %49 : vector<8x128xf32>
      %53 = arith.mulf %42, %22 : vector<8x128xf32>
      %54 = arith.addf %52, %53 : vector<8x128xf32>
      %c0_i32_30 = arith.constant 0 : i32
      %55 = vector.broadcast %c0_i32_30 : i32 to vector<8x1xi32>
      %56 = arith.cmpi sgt, %8, %55 : vector<8x1xi32>
      %57 = arith.maximumf %23, %54 : vector<8x128xf32>
      %58 = vector.shape_cast %56 : vector<8x1xi1> to vector<8x1xi1>
      %59 = vector.broadcast %58 : vector<8x1xi1> to vector<8x128xi1>
      %60 = arith.select %59, %57, %23 : vector<8x128xi1>, vector<8x128xf32>
      %c1 = arith.constant 1 : index
      %c0_31 = arith.constant 0 : index
      %c0_32 = arith.constant 0 : index
      %61 = vector.load %arg8[%c1, %c0_31, %c0_32] : memref<8x8x384xf32, #tpu.memory_space<vmem>>, vector<1x8x384xf32>
      %62 = vector.shape_cast %61 : vector<1x8x384xf32> to vector<8x384xf32>
      %cst_33 = arith.constant dense<0.000000e+00> : vector<8x384xf32>
      %63 = tpu.matmul %54, %3, %cst_33 {dimension_numbers = #tpu.dot_dimension_numbers<[1], [0], [0], [1], [0, 0, 1, 1], [], []>} : vector<8x128xf32>, vector<128x384xf32>, vector<8x384xf32> -> vector<8x384xf32>
      %64 = vector.extract_strided_slice %62 {offsets = [0, 0], sizes = [8, 128], strides = [1, 1]} : vector<8x384xf32> to vector<8x128xf32>
      %65 = vector.extract_strided_slice %63 {offsets = [0, 0], sizes = [8, 128], strides = [1, 1]} : vector<8x384xf32> to vector<8x128xf32>
      %66 = arith.addf %64, %65 : vector<8x128xf32>
      %67 = arith.negf %66 : vector<8x128xf32>
      %68 = math.exp %67 : vector<8x128xf32>
      %cst_34 = arith.constant 1.000000e+00 : f32
      %69 = vector.broadcast %cst_34 : f32 to vector<8x128xf32>
      %70 = arith.addf %69, %68 : vector<8x128xf32>
      %71 = arith.divf %69, %70 : vector<8x128xf32>
      %72 = vector.extract_strided_slice %62 {offsets = [0, 128], sizes = [8, 128], strides = [1, 1]} : vector<8x384xf32> to vector<8x128xf32>
      %73 = vector.extract_strided_slice %63 {offsets = [0, 128], sizes = [8, 128], strides = [1, 1]} : vector<8x384xf32> to vector<8x128xf32>
      %74 = arith.addf %72, %73 : vector<8x128xf32>
      %75 = arith.negf %74 : vector<8x128xf32>
      %76 = math.exp %75 : vector<8x128xf32>
      %cst_35 = arith.constant 1.000000e+00 : f32
      %77 = vector.broadcast %cst_35 : f32 to vector<8x128xf32>
      %78 = arith.addf %77, %76 : vector<8x128xf32>
      %79 = arith.divf %77, %78 : vector<8x128xf32>
      %80 = vector.extract_strided_slice %62 {offsets = [0, 256], sizes = [8, 128], strides = [1, 1]} : vector<8x384xf32> to vector<8x128xf32>
      %81 = vector.extract_strided_slice %63 {offsets = [0, 256], sizes = [8, 128], strides = [1, 1]} : vector<8x384xf32> to vector<8x128xf32>
      %82 = vector.broadcast %7 : vector<1x128xf32> to vector<8x128xf32>
      %83 = arith.addf %81, %82 : vector<8x128xf32>
      %84 = arith.mulf %71, %83 : vector<8x128xf32>
      %85 = arith.addf %80, %84 : vector<8x128xf32>
      %86 = math.tanh %85 : vector<8x128xf32>
      %cst_36 = arith.constant 1.000000e+00 : f32
      %87 = vector.broadcast %cst_36 : f32 to vector<8x128xf32>
      %88 = arith.subf %87, %79 : vector<8x128xf32>
      %89 = arith.mulf %88, %86 : vector<8x128xf32>
      %90 = arith.mulf %79, %54 : vector<8x128xf32>
      %91 = arith.addf %89, %90 : vector<8x128xf32>
      %c1_i32_37 = arith.constant 1 : i32
      %92 = vector.broadcast %c1_i32_37 : i32 to vector<8x1xi32>
      %93 = arith.cmpi sgt, %8, %92 : vector<8x1xi32>
      %94 = arith.maximumf %60, %91 : vector<8x128xf32>
      %95 = vector.shape_cast %93 : vector<8x1xi1> to vector<8x1xi1>
      %96 = vector.broadcast %95 : vector<8x1xi1> to vector<8x128xi1>
      %97 = arith.select %96, %94, %60 : vector<8x128xi1>, vector<8x128xf32>
      %c2 = arith.constant 2 : index
      %c0_38 = arith.constant 0 : index
      %c0_39 = arith.constant 0 : index
      %98 = vector.load %arg8[%c2, %c0_38, %c0_39] : memref<8x8x384xf32, #tpu.memory_space<vmem>>, vector<1x8x384xf32>
      %99 = vector.shape_cast %98 : vector<1x8x384xf32> to vector<8x384xf32>
      %cst_40 = arith.constant dense<0.000000e+00> : vector<8x384xf32>
      %100 = tpu.matmul %91, %3, %cst_40 {dimension_numbers = #tpu.dot_dimension_numbers<[1], [0], [0], [1], [0, 0, 1, 1], [], []>} : vector<8x128xf32>, vector<128x384xf32>, vector<8x384xf32> -> vector<8x384xf32>
      %101 = vector.extract_strided_slice %99 {offsets = [0, 0], sizes = [8, 128], strides = [1, 1]} : vector<8x384xf32> to vector<8x128xf32>
      %102 = vector.extract_strided_slice %100 {offsets = [0, 0], sizes = [8, 128], strides = [1, 1]} : vector<8x384xf32> to vector<8x128xf32>
      %103 = arith.addf %101, %102 : vector<8x128xf32>
      %104 = arith.negf %103 : vector<8x128xf32>
      %105 = math.exp %104 : vector<8x128xf32>
      %cst_41 = arith.constant 1.000000e+00 : f32
      %106 = vector.broadcast %cst_41 : f32 to vector<8x128xf32>
      %107 = arith.addf %106, %105 : vector<8x128xf32>
      %108 = arith.divf %106, %107 : vector<8x128xf32>
      %109 = vector.extract_strided_slice %99 {offsets = [0, 128], sizes = [8, 128], strides = [1, 1]} : vector<8x384xf32> to vector<8x128xf32>
      %110 = vector.extract_strided_slice %100 {offsets = [0, 128], sizes = [8, 128], strides = [1, 1]} : vector<8x384xf32> to vector<8x128xf32>
      %111 = arith.addf %109, %110 : vector<8x128xf32>
      %112 = arith.negf %111 : vector<8x128xf32>
      %113 = math.exp %112 : vector<8x128xf32>
      %cst_42 = arith.constant 1.000000e+00 : f32
      %114 = vector.broadcast %cst_42 : f32 to vector<8x128xf32>
      %115 = arith.addf %114, %113 : vector<8x128xf32>
      %116 = arith.divf %114, %115 : vector<8x128xf32>
      %117 = vector.extract_strided_slice %99 {offsets = [0, 256], sizes = [8, 128], strides = [1, 1]} : vector<8x384xf32> to vector<8x128xf32>
      %118 = vector.extract_strided_slice %100 {offsets = [0, 256], sizes = [8, 128], strides = [1, 1]} : vector<8x384xf32> to vector<8x128xf32>
      %119 = vector.broadcast %7 : vector<1x128xf32> to vector<8x128xf32>
      %120 = arith.addf %118, %119 : vector<8x128xf32>
      %121 = arith.mulf %108, %120 : vector<8x128xf32>
      %122 = arith.addf %117, %121 : vector<8x128xf32>
      %123 = math.tanh %122 : vector<8x128xf32>
      %cst_43 = arith.constant 1.000000e+00 : f32
      %124 = vector.broadcast %cst_43 : f32 to vector<8x128xf32>
      %125 = arith.subf %124, %116 : vector<8x128xf32>
      %126 = arith.mulf %125, %123 : vector<8x128xf32>
      %127 = arith.mulf %116, %91 : vector<8x128xf32>
      %128 = arith.addf %126, %127 : vector<8x128xf32>
      %c2_i32 = arith.constant 2 : i32
      %129 = vector.broadcast %c2_i32 : i32 to vector<8x1xi32>
      %130 = arith.cmpi sgt, %8, %129 : vector<8x1xi32>
      %131 = arith.maximumf %97, %128 : vector<8x128xf32>
      %132 = vector.shape_cast %130 : vector<8x1xi1> to vector<8x1xi1>
      %133 = vector.broadcast %132 : vector<8x1xi1> to vector<8x128xi1>
      %134 = arith.select %133, %131, %97 : vector<8x128xi1>, vector<8x128xf32>
      %c3 = arith.constant 3 : index
      %c0_44 = arith.constant 0 : index
      %c0_45 = arith.constant 0 : index
      %135 = vector.load %arg8[%c3, %c0_44, %c0_45] : memref<8x8x384xf32, #tpu.memory_space<vmem>>, vector<1x8x384xf32>
      %136 = vector.shape_cast %135 : vector<1x8x384xf32> to vector<8x384xf32>
      %cst_46 = arith.constant dense<0.000000e+00> : vector<8x384xf32>
      %137 = tpu.matmul %128, %3, %cst_46 {dimension_numbers = #tpu.dot_dimension_numbers<[1], [0], [0], [1], [0, 0, 1, 1], [], []>} : vector<8x128xf32>, vector<128x384xf32>, vector<8x384xf32> -> vector<8x384xf32>
      %138 = vector.extract_strided_slice %136 {offsets = [0, 0], sizes = [8, 128], strides = [1, 1]} : vector<8x384xf32> to vector<8x128xf32>
      %139 = vector.extract_strided_slice %137 {offsets = [0, 0], sizes = [8, 128], strides = [1, 1]} : vector<8x384xf32> to vector<8x128xf32>
      %140 = arith.addf %138, %139 : vector<8x128xf32>
      %141 = arith.negf %140 : vector<8x128xf32>
      %142 = math.exp %141 : vector<8x128xf32>
      %cst_47 = arith.constant 1.000000e+00 : f32
      %143 = vector.broadcast %cst_47 : f32 to vector<8x128xf32>
      %144 = arith.addf %143, %142 : vector<8x128xf32>
      %145 = arith.divf %143, %144 : vector<8x128xf32>
      %146 = vector.extract_strided_slice %136 {offsets = [0, 128], sizes = [8, 128], strides = [1, 1]} : vector<8x384xf32> to vector<8x128xf32>
      %147 = vector.extract_strided_slice %137 {offsets = [0, 128], sizes = [8, 128], strides = [1, 1]} : vector<8x384xf32> to vector<8x128xf32>
      %148 = arith.addf %146, %147 : vector<8x128xf32>
      %149 = arith.negf %148 : vector<8x128xf32>
      %150 = math.exp %149 : vector<8x128xf32>
      %cst_48 = arith.constant 1.000000e+00 : f32
      %151 = vector.broadcast %cst_48 : f32 to vector<8x128xf32>
      %152 = arith.addf %151, %150 : vector<8x128xf32>
      %153 = arith.divf %151, %152 : vector<8x128xf32>
      %154 = vector.extract_strided_slice %136 {offsets = [0, 256], sizes = [8, 128], strides = [1, 1]} : vector<8x384xf32> to vector<8x128xf32>
      %155 = vector.extract_strided_slice %137 {offsets = [0, 256], sizes = [8, 128], strides = [1, 1]} : vector<8x384xf32> to vector<8x128xf32>
      %156 = vector.broadcast %7 : vector<1x128xf32> to vector<8x128xf32>
      %157 = arith.addf %155, %156 : vector<8x128xf32>
      %158 = arith.mulf %145, %157 : vector<8x128xf32>
      %159 = arith.addf %154, %158 : vector<8x128xf32>
      %160 = math.tanh %159 : vector<8x128xf32>
      %cst_49 = arith.constant 1.000000e+00 : f32
      %161 = vector.broadcast %cst_49 : f32 to vector<8x128xf32>
      %162 = arith.subf %161, %153 : vector<8x128xf32>
      %163 = arith.mulf %162, %160 : vector<8x128xf32>
      %164 = arith.mulf %153, %128 : vector<8x128xf32>
      %165 = arith.addf %163, %164 : vector<8x128xf32>
      %c3_i32 = arith.constant 3 : i32
      %166 = vector.broadcast %c3_i32 : i32 to vector<8x1xi32>
      %167 = arith.cmpi sgt, %8, %166 : vector<8x1xi32>
      %168 = arith.maximumf %134, %165 : vector<8x128xf32>
      %169 = vector.shape_cast %167 : vector<8x1xi1> to vector<8x1xi1>
      %170 = vector.broadcast %169 : vector<8x1xi1> to vector<8x128xi1>
      %171 = arith.select %170, %168, %134 : vector<8x128xi1>, vector<8x128xf32>
      %c4 = arith.constant 4 : index
      %c0_50 = arith.constant 0 : index
      %c0_51 = arith.constant 0 : index
      %172 = vector.load %arg8[%c4, %c0_50, %c0_51] : memref<8x8x384xf32, #tpu.memory_space<vmem>>, vector<1x8x384xf32>
      %173 = vector.shape_cast %172 : vector<1x8x384xf32> to vector<8x384xf32>
      %cst_52 = arith.constant dense<0.000000e+00> : vector<8x384xf32>
      %174 = tpu.matmul %165, %3, %cst_52 {dimension_numbers = #tpu.dot_dimension_numbers<[1], [0], [0], [1], [0, 0, 1, 1], [], []>} : vector<8x128xf32>, vector<128x384xf32>, vector<8x384xf32> -> vector<8x384xf32>
      %175 = vector.extract_strided_slice %173 {offsets = [0, 0], sizes = [8, 128], strides = [1, 1]} : vector<8x384xf32> to vector<8x128xf32>
      %176 = vector.extract_strided_slice %174 {offsets = [0, 0], sizes = [8, 128], strides = [1, 1]} : vector<8x384xf32> to vector<8x128xf32>
      %177 = arith.addf %175, %176 : vector<8x128xf32>
      %178 = arith.negf %177 : vector<8x128xf32>
      %179 = math.exp %178 : vector<8x128xf32>
      %cst_53 = arith.constant 1.000000e+00 : f32
      %180 = vector.broadcast %cst_53 : f32 to vector<8x128xf32>
      %181 = arith.addf %180, %179 : vector<8x128xf32>
      %182 = arith.divf %180, %181 : vector<8x128xf32>
      %183 = vector.extract_strided_slice %173 {offsets = [0, 128], sizes = [8, 128], strides = [1, 1]} : vector<8x384xf32> to vector<8x128xf32>
      %184 = vector.extract_strided_slice %174 {offsets = [0, 128], sizes = [8, 128], strides = [1, 1]} : vector<8x384xf32> to vector<8x128xf32>
      %185 = arith.addf %183, %184 : vector<8x128xf32>
      %186 = arith.negf %185 : vector<8x128xf32>
      %187 = math.exp %186 : vector<8x128xf32>
      %cst_54 = arith.constant 1.000000e+00 : f32
      %188 = vector.broadcast %cst_54 : f32 to vector<8x128xf32>
      %189 = arith.addf %188, %187 : vector<8x128xf32>
      %190 = arith.divf %188, %189 : vector<8x128xf32>
      %191 = vector.extract_strided_slice %173 {offsets = [0, 256], sizes = [8, 128], strides = [1, 1]} : vector<8x384xf32> to vector<8x128xf32>
      %192 = vector.extract_strided_slice %174 {offsets = [0, 256], sizes = [8, 128], strides = [1, 1]} : vector<8x384xf32> to vector<8x128xf32>
      %193 = vector.broadcast %7 : vector<1x128xf32> to vector<8x128xf32>
      %194 = arith.addf %192, %193 : vector<8x128xf32>
      %195 = arith.mulf %182, %194 : vector<8x128xf32>
      %196 = arith.addf %191, %195 : vector<8x128xf32>
      %197 = math.tanh %196 : vector<8x128xf32>
      %cst_55 = arith.constant 1.000000e+00 : f32
      %198 = vector.broadcast %cst_55 : f32 to vector<8x128xf32>
      %199 = arith.subf %198, %190 : vector<8x128xf32>
      %200 = arith.mulf %199, %197 : vector<8x128xf32>
      %201 = arith.mulf %190, %165 : vector<8x128xf32>
      %202 = arith.addf %200, %201 : vector<8x128xf32>
      %c4_i32 = arith.constant 4 : i32
      %203 = vector.broadcast %c4_i32 : i32 to vector<8x1xi32>
      %204 = arith.cmpi sgt, %8, %203 : vector<8x1xi32>
      %205 = arith.maximumf %171, %202 : vector<8x128xf32>
      %206 = vector.shape_cast %204 : vector<8x1xi1> to vector<8x1xi1>
      %207 = vector.broadcast %206 : vector<8x1xi1> to vector<8x128xi1>
      %208 = arith.select %207, %205, %171 : vector<8x128xi1>, vector<8x128xf32>
      %c5 = arith.constant 5 : index
      %c0_56 = arith.constant 0 : index
      %c0_57 = arith.constant 0 : index
      %209 = vector.load %arg8[%c5, %c0_56, %c0_57] : memref<8x8x384xf32, #tpu.memory_space<vmem>>, vector<1x8x384xf32>
      %210 = vector.shape_cast %209 : vector<1x8x384xf32> to vector<8x384xf32>
      %cst_58 = arith.constant dense<0.000000e+00> : vector<8x384xf32>
      %211 = tpu.matmul %202, %3, %cst_58 {dimension_numbers = #tpu.dot_dimension_numbers<[1], [0], [0], [1], [0, 0, 1, 1], [], []>} : vector<8x128xf32>, vector<128x384xf32>, vector<8x384xf32> -> vector<8x384xf32>
      %212 = vector.extract_strided_slice %210 {offsets = [0, 0], sizes = [8, 128], strides = [1, 1]} : vector<8x384xf32> to vector<8x128xf32>
      %213 = vector.extract_strided_slice %211 {offsets = [0, 0], sizes = [8, 128], strides = [1, 1]} : vector<8x384xf32> to vector<8x128xf32>
      %214 = arith.addf %212, %213 : vector<8x128xf32>
      %215 = arith.negf %214 : vector<8x128xf32>
      %216 = math.exp %215 : vector<8x128xf32>
      %cst_59 = arith.constant 1.000000e+00 : f32
      %217 = vector.broadcast %cst_59 : f32 to vector<8x128xf32>
      %218 = arith.addf %217, %216 : vector<8x128xf32>
      %219 = arith.divf %217, %218 : vector<8x128xf32>
      %220 = vector.extract_strided_slice %210 {offsets = [0, 128], sizes = [8, 128], strides = [1, 1]} : vector<8x384xf32> to vector<8x128xf32>
      %221 = vector.extract_strided_slice %211 {offsets = [0, 128], sizes = [8, 128], strides = [1, 1]} : vector<8x384xf32> to vector<8x128xf32>
      %222 = arith.addf %220, %221 : vector<8x128xf32>
      %223 = arith.negf %222 : vector<8x128xf32>
      %224 = math.exp %223 : vector<8x128xf32>
      %cst_60 = arith.constant 1.000000e+00 : f32
      %225 = vector.broadcast %cst_60 : f32 to vector<8x128xf32>
      %226 = arith.addf %225, %224 : vector<8x128xf32>
      %227 = arith.divf %225, %226 : vector<8x128xf32>
      %228 = vector.extract_strided_slice %210 {offsets = [0, 256], sizes = [8, 128], strides = [1, 1]} : vector<8x384xf32> to vector<8x128xf32>
      %229 = vector.extract_strided_slice %211 {offsets = [0, 256], sizes = [8, 128], strides = [1, 1]} : vector<8x384xf32> to vector<8x128xf32>
      %230 = vector.broadcast %7 : vector<1x128xf32> to vector<8x128xf32>
      %231 = arith.addf %229, %230 : vector<8x128xf32>
      %232 = arith.mulf %219, %231 : vector<8x128xf32>
      %233 = arith.addf %228, %232 : vector<8x128xf32>
      %234 = math.tanh %233 : vector<8x128xf32>
      %cst_61 = arith.constant 1.000000e+00 : f32
      %235 = vector.broadcast %cst_61 : f32 to vector<8x128xf32>
      %236 = arith.subf %235, %227 : vector<8x128xf32>
      %237 = arith.mulf %236, %234 : vector<8x128xf32>
      %238 = arith.mulf %227, %202 : vector<8x128xf32>
      %239 = arith.addf %237, %238 : vector<8x128xf32>
      %c5_i32 = arith.constant 5 : i32
      %240 = vector.broadcast %c5_i32 : i32 to vector<8x1xi32>
      %241 = arith.cmpi sgt, %8, %240 : vector<8x1xi32>
      %242 = arith.maximumf %208, %239 : vector<8x128xf32>
      %243 = vector.shape_cast %241 : vector<8x1xi1> to vector<8x1xi1>
      %244 = vector.broadcast %243 : vector<8x1xi1> to vector<8x128xi1>
      %245 = arith.select %244, %242, %208 : vector<8x128xi1>, vector<8x128xf32>
      %c6 = arith.constant 6 : index
      %c0_62 = arith.constant 0 : index
      %c0_63 = arith.constant 0 : index
      %246 = vector.load %arg8[%c6, %c0_62, %c0_63] : memref<8x8x384xf32, #tpu.memory_space<vmem>>, vector<1x8x384xf32>
      %247 = vector.shape_cast %246 : vector<1x8x384xf32> to vector<8x384xf32>
      %cst_64 = arith.constant dense<0.000000e+00> : vector<8x384xf32>
      %248 = tpu.matmul %239, %3, %cst_64 {dimension_numbers = #tpu.dot_dimension_numbers<[1], [0], [0], [1], [0, 0, 1, 1], [], []>} : vector<8x128xf32>, vector<128x384xf32>, vector<8x384xf32> -> vector<8x384xf32>
      %249 = vector.extract_strided_slice %247 {offsets = [0, 0], sizes = [8, 128], strides = [1, 1]} : vector<8x384xf32> to vector<8x128xf32>
      %250 = vector.extract_strided_slice %248 {offsets = [0, 0], sizes = [8, 128], strides = [1, 1]} : vector<8x384xf32> to vector<8x128xf32>
      %251 = arith.addf %249, %250 : vector<8x128xf32>
      %252 = arith.negf %251 : vector<8x128xf32>
      %253 = math.exp %252 : vector<8x128xf32>
      %cst_65 = arith.constant 1.000000e+00 : f32
      %254 = vector.broadcast %cst_65 : f32 to vector<8x128xf32>
      %255 = arith.addf %254, %253 : vector<8x128xf32>
      %256 = arith.divf %254, %255 : vector<8x128xf32>
      %257 = vector.extract_strided_slice %247 {offsets = [0, 128], sizes = [8, 128], strides = [1, 1]} : vector<8x384xf32> to vector<8x128xf32>
      %258 = vector.extract_strided_slice %248 {offsets = [0, 128], sizes = [8, 128], strides = [1, 1]} : vector<8x384xf32> to vector<8x128xf32>
      %259 = arith.addf %257, %258 : vector<8x128xf32>
      %260 = arith.negf %259 : vector<8x128xf32>
      %261 = math.exp %260 : vector<8x128xf32>
      %cst_66 = arith.constant 1.000000e+00 : f32
      %262 = vector.broadcast %cst_66 : f32 to vector<8x128xf32>
      %263 = arith.addf %262, %261 : vector<8x128xf32>
      %264 = arith.divf %262, %263 : vector<8x128xf32>
      %265 = vector.extract_strided_slice %247 {offsets = [0, 256], sizes = [8, 128], strides = [1, 1]} : vector<8x384xf32> to vector<8x128xf32>
      %266 = vector.extract_strided_slice %248 {offsets = [0, 256], sizes = [8, 128], strides = [1, 1]} : vector<8x384xf32> to vector<8x128xf32>
      %267 = vector.broadcast %7 : vector<1x128xf32> to vector<8x128xf32>
      %268 = arith.addf %266, %267 : vector<8x128xf32>
      %269 = arith.mulf %256, %268 : vector<8x128xf32>
      %270 = arith.addf %265, %269 : vector<8x128xf32>
      %271 = math.tanh %270 : vector<8x128xf32>
      %cst_67 = arith.constant 1.000000e+00 : f32
      %272 = vector.broadcast %cst_67 : f32 to vector<8x128xf32>
      %273 = arith.subf %272, %264 : vector<8x128xf32>
      %274 = arith.mulf %273, %271 : vector<8x128xf32>
      %275 = arith.mulf %264, %239 : vector<8x128xf32>
      %276 = arith.addf %274, %275 : vector<8x128xf32>
      %c6_i32 = arith.constant 6 : i32
      %277 = vector.broadcast %c6_i32 : i32 to vector<8x1xi32>
      %278 = arith.cmpi sgt, %8, %277 : vector<8x1xi32>
      %279 = arith.maximumf %245, %276 : vector<8x128xf32>
      %280 = vector.shape_cast %278 : vector<8x1xi1> to vector<8x1xi1>
      %281 = vector.broadcast %280 : vector<8x1xi1> to vector<8x128xi1>
      %282 = arith.select %281, %279, %245 : vector<8x128xi1>, vector<8x128xf32>
      %c7 = arith.constant 7 : index
      %c0_68 = arith.constant 0 : index
      %c0_69 = arith.constant 0 : index
      %283 = vector.load %arg8[%c7, %c0_68, %c0_69] : memref<8x8x384xf32, #tpu.memory_space<vmem>>, vector<1x8x384xf32>
      %284 = vector.shape_cast %283 : vector<1x8x384xf32> to vector<8x384xf32>
      %cst_70 = arith.constant dense<0.000000e+00> : vector<8x384xf32>
      %285 = tpu.matmul %276, %3, %cst_70 {dimension_numbers = #tpu.dot_dimension_numbers<[1], [0], [0], [1], [0, 0, 1, 1], [], []>} : vector<8x128xf32>, vector<128x384xf32>, vector<8x384xf32> -> vector<8x384xf32>
      %286 = vector.extract_strided_slice %284 {offsets = [0, 0], sizes = [8, 128], strides = [1, 1]} : vector<8x384xf32> to vector<8x128xf32>
      %287 = vector.extract_strided_slice %285 {offsets = [0, 0], sizes = [8, 128], strides = [1, 1]} : vector<8x384xf32> to vector<8x128xf32>
      %288 = arith.addf %286, %287 : vector<8x128xf32>
      %289 = arith.negf %288 : vector<8x128xf32>
      %290 = math.exp %289 : vector<8x128xf32>
      %cst_71 = arith.constant 1.000000e+00 : f32
      %291 = vector.broadcast %cst_71 : f32 to vector<8x128xf32>
      %292 = arith.addf %291, %290 : vector<8x128xf32>
      %293 = arith.divf %291, %292 : vector<8x128xf32>
      %294 = vector.extract_strided_slice %284 {offsets = [0, 128], sizes = [8, 128], strides = [1, 1]} : vector<8x384xf32> to vector<8x128xf32>
      %295 = vector.extract_strided_slice %285 {offsets = [0, 128], sizes = [8, 128], strides = [1, 1]} : vector<8x384xf32> to vector<8x128xf32>
      %296 = arith.addf %294, %295 : vector<8x128xf32>
      %297 = arith.negf %296 : vector<8x128xf32>
      %298 = math.exp %297 : vector<8x128xf32>
      %cst_72 = arith.constant 1.000000e+00 : f32
      %299 = vector.broadcast %cst_72 : f32 to vector<8x128xf32>
      %300 = arith.addf %299, %298 : vector<8x128xf32>
      %301 = arith.divf %299, %300 : vector<8x128xf32>
      %302 = vector.extract_strided_slice %284 {offsets = [0, 256], sizes = [8, 128], strides = [1, 1]} : vector<8x384xf32> to vector<8x128xf32>
      %303 = vector.extract_strided_slice %285 {offsets = [0, 256], sizes = [8, 128], strides = [1, 1]} : vector<8x384xf32> to vector<8x128xf32>
      %304 = vector.broadcast %7 : vector<1x128xf32> to vector<8x128xf32>
      %305 = arith.addf %303, %304 : vector<8x128xf32>
      %306 = arith.mulf %293, %305 : vector<8x128xf32>
      %307 = arith.addf %302, %306 : vector<8x128xf32>
      %308 = math.tanh %307 : vector<8x128xf32>
      %cst_73 = arith.constant 1.000000e+00 : f32
      %309 = vector.broadcast %cst_73 : f32 to vector<8x128xf32>
      %310 = arith.subf %309, %301 : vector<8x128xf32>
      %311 = arith.mulf %310, %308 : vector<8x128xf32>
      %312 = arith.mulf %301, %276 : vector<8x128xf32>
      %313 = arith.addf %311, %312 : vector<8x128xf32>
      %c7_i32 = arith.constant 7 : i32
      %314 = vector.broadcast %c7_i32 : i32 to vector<8x1xi32>
      %315 = arith.cmpi sgt, %8, %314 : vector<8x1xi32>
      %316 = arith.maximumf %282, %313 : vector<8x128xf32>
      %317 = vector.shape_cast %315 : vector<8x1xi1> to vector<8x1xi1>
      %318 = vector.broadcast %317 : vector<8x1xi1> to vector<8x128xi1>
      %319 = arith.select %318, %316, %282 : vector<8x128xi1>, vector<8x128xf32>
      %c0_74 = arith.constant 0 : index
      %c0_75 = arith.constant 0 : index
      %320 = vector.load %arg7[%c0_74, %c0_75] : memref<8x128xf32, #tpu.memory_space<vmem>>, vector<8x128xf32>
      tpu.vector_store %arg7[%c0_74, %c0_75], %319 {strides = array<i32>} : memref<8x128xf32, #tpu.memory_space<vmem>>, vector<8x128xf32>,
    } else {
    }
    %c1_i32 = arith.constant 1 : i32
    %19 = arith.cmpi eq, %arg0, %c1_i32 : i32
    %20 = arith.extui %19 : i1 to i32
    %c0_i32_20 = arith.constant 0 : i32
    %21 = arith.cmpi ne, %20, %c0_i32_20 : i32
    scf.if %21 {
      %cst_21 = arith.constant 0.000000e+00 : f32
      %22 = vector.broadcast %cst_21 : f32 to vector<8x128xf32>
      %cst_22 = arith.constant -1.000000e+30 : f32
      %23 = vector.broadcast %cst_22 : f32 to vector<8x128xf32>
      %c7 = arith.constant 7 : index
      %c0_23 = arith.constant 0 : index
      %c0_24 = arith.constant 0 : index
      %24 = vector.load %arg8[%c7, %c0_23, %c0_24] : memref<8x8x384xf32, #tpu.memory_space<vmem>>, vector<1x8x384xf32>
      %25 = vector.shape_cast %24 : vector<1x8x384xf32> to vector<8x384xf32>
      %cst_25 = arith.constant dense<0.000000e+00> : vector<8x384xf32>
      %26 = tpu.matmul %22, %3, %cst_25 {dimension_numbers = #tpu.dot_dimension_numbers<[1], [0], [0], [1], [0, 0, 1, 1], [], []>} : vector<8x128xf32>, vector<128x384xf32>, vector<8x384xf32> -> vector<8x384xf32>
      %27 = vector.extract_strided_slice %25 {offsets = [0, 0], sizes = [8, 128], strides = [1, 1]} : vector<8x384xf32> to vector<8x128xf32>
      %28 = vector.extract_strided_slice %26 {offsets = [0, 0], sizes = [8, 128], strides = [1, 1]} : vector<8x384xf32> to vector<8x128xf32>
      %29 = arith.addf %27, %28 : vector<8x128xf32>
      %30 = arith.negf %29 : vector<8x128xf32>
      %31 = math.exp %30 : vector<8x128xf32>
      %cst_26 = arith.constant 1.000000e+00 : f32
      %32 = vector.broadcast %cst_26 : f32 to vector<8x128xf32>
      %33 = arith.addf %32, %31 : vector<8x128xf32>
      %34 = arith.divf %32, %33 : vector<8x128xf32>
      %35 = vector.extract_strided_slice %25 {offsets = [0, 128], sizes = [8, 128], strides = [1, 1]} : vector<8x384xf32> to vector<8x128xf32>
      %36 = vector.extract_strided_slice %26 {offsets = [0, 128], sizes = [8, 128], strides = [1, 1]} : vector<8x384xf32> to vector<8x128xf32>
      %37 = arith.addf %35, %36 : vector<8x128xf32>
      %38 = arith.negf %37 : vector<8x128xf32>
      %39 = math.exp %38 : vector<8x128xf32>
      %cst_27 = arith.constant 1.000000e+00 : f32
      %40 = vector.broadcast %cst_27 : f32 to vector<8x128xf32>
      %41 = arith.addf %40, %39 : vector<8x128xf32>
      %42 = arith.divf %40, %41 : vector<8x128xf32>
      %43 = vector.extract_strided_slice %25 {offsets = [0, 256], sizes = [8, 128], strides = [1, 1]} : vector<8x384xf32> to vector<8x128xf32>
      %44 = vector.extract_strided_slice %26 {offsets = [0, 256], sizes = [8, 128], strides = [1, 1]} : vector<8x384xf32> to vector<8x128xf32>
      %45 = vector.broadcast %7 : vector<1x128xf32> to vector<8x128xf32>
      %46 = arith.addf %44, %45 : vector<8x128xf32>
      %47 = arith.mulf %34, %46 : vector<8x128xf32>
      %48 = arith.addf %43, %47 : vector<8x128xf32>
      %49 = math.tanh %48 : vector<8x128xf32>
      %cst_28 = arith.constant 1.000000e+00 : f32
      %50 = vector.broadcast %cst_28 : f32 to vector<8x128xf32>
      %51 = arith.subf %50, %42 : vector<8x128xf32>
      %52 = arith.mulf %51, %49 : vector<8x128xf32>
      %53 = arith.mulf %42, %22 : vector<8x128xf32>
      %54 = arith.addf %52, %53 : vector<8x128xf32>
      %c7_i32 = arith.constant 7 : i32
      %55 = vector.broadcast %c7_i32 : i32 to vector<8x1xi32>
      %56 = arith.cmpi sgt, %8, %55 : vector<8x1xi32>
      %57 = arith.maximumf %23, %54 : vector<8x128xf32>
      %58 = vector.shape_cast %56 : vector<8x1xi1> to vector<8x1xi1>
      %59 = vector.broadcast %58 : vector<8x1xi1> to vector<8x128xi1>
      %60 = arith.select %59, %57, %23 : vector<8x128xi1>, vector<8x128xf32>
      %c6 = arith.constant 6 : index
      %c0_29 = arith.constant 0 : index
      %c0_30 = arith.constant 0 : index
      %61 = vector.load %arg8[%c6, %c0_29, %c0_30] : memref<8x8x384xf32, #tpu.memory_space<vmem>>, vector<1x8x384xf32>
      %62 = vector.shape_cast %61 : vector<1x8x384xf32> to vector<8x384xf32>
      %cst_31 = arith.constant dense<0.000000e+00> : vector<8x384xf32>
      %63 = tpu.matmul %54, %3, %cst_31 {dimension_numbers = #tpu.dot_dimension_numbers<[1], [0], [0], [1], [0, 0, 1, 1], [], []>} : vector<8x128xf32>, vector<128x384xf32>, vector<8x384xf32> -> vector<8x384xf32>
      %64 = vector.extract_strided_slice %62 {offsets = [0, 0], sizes = [8, 128], strides = [1, 1]} : vector<8x384xf32> to vector<8x128xf32>
      %65 = vector.extract_strided_slice %63 {offsets = [0, 0], sizes = [8, 128], strides = [1, 1]} : vector<8x384xf32> to vector<8x128xf32>
      %66 = arith.addf %64, %65 : vector<8x128xf32>
      %67 = arith.negf %66 : vector<8x128xf32>
      %68 = math.exp %67 : vector<8x128xf32>
      %cst_32 = arith.constant 1.000000e+00 : f32
      %69 = vector.broadcast %cst_32 : f32 to vector<8x128xf32>
      %70 = arith.addf %69, %68 : vector<8x128xf32>
      %71 = arith.divf %69, %70 : vector<8x128xf32>
      %72 = vector.extract_strided_slice %62 {offsets = [0, 128], sizes = [8, 128], strides = [1, 1]} : vector<8x384xf32> to vector<8x128xf32>
      %73 = vector.extract_strided_slice %63 {offsets = [0, 128], sizes = [8, 128], strides = [1, 1]} : vector<8x384xf32> to vector<8x128xf32>
      %74 = arith.addf %72, %73 : vector<8x128xf32>
      %75 = arith.negf %74 : vector<8x128xf32>
      %76 = math.exp %75 : vector<8x128xf32>
      %cst_33 = arith.constant 1.000000e+00 : f32
      %77 = vector.broadcast %cst_33 : f32 to vector<8x128xf32>
      %78 = arith.addf %77, %76 : vector<8x128xf32>
      %79 = arith.divf %77, %78 : vector<8x128xf32>
      %80 = vector.extract_strided_slice %62 {offsets = [0, 256], sizes = [8, 128], strides = [1, 1]} : vector<8x384xf32> to vector<8x128xf32>
      %81 = vector.extract_strided_slice %63 {offsets = [0, 256], sizes = [8, 128], strides = [1, 1]} : vector<8x384xf32> to vector<8x128xf32>
      %82 = vector.broadcast %7 : vector<1x128xf32> to vector<8x128xf32>
      %83 = arith.addf %81, %82 : vector<8x128xf32>
      %84 = arith.mulf %71, %83 : vector<8x128xf32>
      %85 = arith.addf %80, %84 : vector<8x128xf32>
      %86 = math.tanh %85 : vector<8x128xf32>
      %cst_34 = arith.constant 1.000000e+00 : f32
      %87 = vector.broadcast %cst_34 : f32 to vector<8x128xf32>
      %88 = arith.subf %87, %79 : vector<8x128xf32>
      %89 = arith.mulf %88, %86 : vector<8x128xf32>
      %90 = arith.mulf %79, %54 : vector<8x128xf32>
      %91 = arith.addf %89, %90 : vector<8x128xf32>
      %c6_i32 = arith.constant 6 : i32
      %92 = vector.broadcast %c6_i32 : i32 to vector<8x1xi32>
      %93 = arith.cmpi sgt, %8, %92 : vector<8x1xi32>
      %94 = arith.maximumf %60, %91 : vector<8x128xf32>
      %95 = vector.shape_cast %93 : vector<8x1xi1> to vector<8x1xi1>
      %96 = vector.broadcast %95 : vector<8x1xi1> to vector<8x128xi1>
      %97 = arith.select %96, %94, %60 : vector<8x128xi1>, vector<8x128xf32>
      %c5 = arith.constant 5 : index
      %c0_35 = arith.constant 0 : index
      %c0_36 = arith.constant 0 : index
      %98 = vector.load %arg8[%c5, %c0_35, %c0_36] : memref<8x8x384xf32, #tpu.memory_space<vmem>>, vector<1x8x384xf32>
      %99 = vector.shape_cast %98 : vector<1x8x384xf32> to vector<8x384xf32>
      %cst_37 = arith.constant dense<0.000000e+00> : vector<8x384xf32>
      %100 = tpu.matmul %91, %3, %cst_37 {dimension_numbers = #tpu.dot_dimension_numbers<[1], [0], [0], [1], [0, 0, 1, 1], [], []>} : vector<8x128xf32>, vector<128x384xf32>, vector<8x384xf32> -> vector<8x384xf32>
      %101 = vector.extract_strided_slice %99 {offsets = [0, 0], sizes = [8, 128], strides = [1, 1]} : vector<8x384xf32> to vector<8x128xf32>
      %102 = vector.extract_strided_slice %100 {offsets = [0, 0], sizes = [8, 128], strides = [1, 1]} : vector<8x384xf32> to vector<8x128xf32>
      %103 = arith.addf %101, %102 : vector<8x128xf32>
      %104 = arith.negf %103 : vector<8x128xf32>
      %105 = math.exp %104 : vector<8x128xf32>
      %cst_38 = arith.constant 1.000000e+00 : f32
      %106 = vector.broadcast %cst_38 : f32 to vector<8x128xf32>
      %107 = arith.addf %106, %105 : vector<8x128xf32>
      %108 = arith.divf %106, %107 : vector<8x128xf32>
      %109 = vector.extract_strided_slice %99 {offsets = [0, 128], sizes = [8, 128], strides = [1, 1]} : vector<8x384xf32> to vector<8x128xf32>
      %110 = vector.extract_strided_slice %100 {offsets = [0, 128], sizes = [8, 128], strides = [1, 1]} : vector<8x384xf32> to vector<8x128xf32>
      %111 = arith.addf %109, %110 : vector<8x128xf32>
      %112 = arith.negf %111 : vector<8x128xf32>
      %113 = math.exp %112 : vector<8x128xf32>
      %cst_39 = arith.constant 1.000000e+00 : f32
      %114 = vector.broadcast %cst_39 : f32 to vector<8x128xf32>
      %115 = arith.addf %114, %113 : vector<8x128xf32>
      %116 = arith.divf %114, %115 : vector<8x128xf32>
      %117 = vector.extract_strided_slice %99 {offsets = [0, 256], sizes = [8, 128], strides = [1, 1]} : vector<8x384xf32> to vector<8x128xf32>
      %118 = vector.extract_strided_slice %100 {offsets = [0, 256], sizes = [8, 128], strides = [1, 1]} : vector<8x384xf32> to vector<8x128xf32>
      %119 = vector.broadcast %7 : vector<1x128xf32> to vector<8x128xf32>
      %120 = arith.addf %118, %119 : vector<8x128xf32>
      %121 = arith.mulf %108, %120 : vector<8x128xf32>
      %122 = arith.addf %117, %121 : vector<8x128xf32>
      %123 = math.tanh %122 : vector<8x128xf32>
      %cst_40 = arith.constant 1.000000e+00 : f32
      %124 = vector.broadcast %cst_40 : f32 to vector<8x128xf32>
      %125 = arith.subf %124, %116 : vector<8x128xf32>
      %126 = arith.mulf %125, %123 : vector<8x128xf32>
      %127 = arith.mulf %116, %91 : vector<8x128xf32>
      %128 = arith.addf %126, %127 : vector<8x128xf32>
      %c5_i32 = arith.constant 5 : i32
      %129 = vector.broadcast %c5_i32 : i32 to vector<8x1xi32>
      %130 = arith.cmpi sgt, %8, %129 : vector<8x1xi32>
      %131 = arith.maximumf %97, %128 : vector<8x128xf32>
      %132 = vector.shape_cast %130 : vector<8x1xi1> to vector<8x1xi1>
      %133 = vector.broadcast %132 : vector<8x1xi1> to vector<8x128xi1>
      %134 = arith.select %133, %131, %97 : vector<8x128xi1>, vector<8x128xf32>
      %c4 = arith.constant 4 : index
      %c0_41 = arith.constant 0 : index
      %c0_42 = arith.constant 0 : index
      %135 = vector.load %arg8[%c4, %c0_41, %c0_42] : memref<8x8x384xf32, #tpu.memory_space<vmem>>, vector<1x8x384xf32>
      %136 = vector.shape_cast %135 : vector<1x8x384xf32> to vector<8x384xf32>
      %cst_43 = arith.constant dense<0.000000e+00> : vector<8x384xf32>
      %137 = tpu.matmul %128, %3, %cst_43 {dimension_numbers = #tpu.dot_dimension_numbers<[1], [0], [0], [1], [0, 0, 1, 1], [], []>} : vector<8x128xf32>, vector<128x384xf32>, vector<8x384xf32> -> vector<8x384xf32>
      %138 = vector.extract_strided_slice %136 {offsets = [0, 0], sizes = [8, 128], strides = [1, 1]} : vector<8x384xf32> to vector<8x128xf32>
      %139 = vector.extract_strided_slice %137 {offsets = [0, 0], sizes = [8, 128], strides = [1, 1]} : vector<8x384xf32> to vector<8x128xf32>
      %140 = arith.addf %138, %139 : vector<8x128xf32>
      %141 = arith.negf %140 : vector<8x128xf32>
      %142 = math.exp %141 : vector<8x128xf32>
      %cst_44 = arith.constant 1.000000e+00 : f32
      %143 = vector.broadcast %cst_44 : f32 to vector<8x128xf32>
      %144 = arith.addf %143, %142 : vector<8x128xf32>
      %145 = arith.divf %143, %144 : vector<8x128xf32>
      %146 = vector.extract_strided_slice %136 {offsets = [0, 128], sizes = [8, 128], strides = [1, 1]} : vector<8x384xf32> to vector<8x128xf32>
      %147 = vector.extract_strided_slice %137 {offsets = [0, 128], sizes = [8, 128], strides = [1, 1]} : vector<8x384xf32> to vector<8x128xf32>
      %148 = arith.addf %146, %147 : vector<8x128xf32>
      %149 = arith.negf %148 : vector<8x128xf32>
      %150 = math.exp %149 : vector<8x128xf32>
      %cst_45 = arith.constant 1.000000e+00 : f32
      %151 = vector.broadcast %cst_45 : f32 to vector<8x128xf32>
      %152 = arith.addf %151, %150 : vector<8x128xf32>
      %153 = arith.divf %151, %152 : vector<8x128xf32>
      %154 = vector.extract_strided_slice %136 {offsets = [0, 256], sizes = [8, 128], strides = [1, 1]} : vector<8x384xf32> to vector<8x128xf32>
      %155 = vector.extract_strided_slice %137 {offsets = [0, 256], sizes = [8, 128], strides = [1, 1]} : vector<8x384xf32> to vector<8x128xf32>
      %156 = vector.broadcast %7 : vector<1x128xf32> to vector<8x128xf32>
      %157 = arith.addf %155, %156 : vector<8x128xf32>
      %158 = arith.mulf %145, %157 : vector<8x128xf32>
      %159 = arith.addf %154, %158 : vector<8x128xf32>
      %160 = math.tanh %159 : vector<8x128xf32>
      %cst_46 = arith.constant 1.000000e+00 : f32
      %161 = vector.broadcast %cst_46 : f32 to vector<8x128xf32>
      %162 = arith.subf %161, %153 : vector<8x128xf32>
      %163 = arith.mulf %162, %160 : vector<8x128xf32>
      %164 = arith.mulf %153, %128 : vector<8x128xf32>
      %165 = arith.addf %163, %164 : vector<8x128xf32>
      %c4_i32 = arith.constant 4 : i32
      %166 = vector.broadcast %c4_i32 : i32 to vector<8x1xi32>
      %167 = arith.cmpi sgt, %8, %166 : vector<8x1xi32>
      %168 = arith.maximumf %134, %165 : vector<8x128xf32>
      %169 = vector.shape_cast %167 : vector<8x1xi1> to vector<8x1xi1>
      %170 = vector.broadcast %169 : vector<8x1xi1> to vector<8x128xi1>
      %171 = arith.select %170, %168, %134 : vector<8x128xi1>, vector<8x128xf32>
      %c3 = arith.constant 3 : index
      %c0_47 = arith.constant 0 : index
      %c0_48 = arith.constant 0 : index
      %172 = vector.load %arg8[%c3, %c0_47, %c0_48] : memref<8x8x384xf32, #tpu.memory_space<vmem>>, vector<1x8x384xf32>
      %173 = vector.shape_cast %172 : vector<1x8x384xf32> to vector<8x384xf32>
      %cst_49 = arith.constant dense<0.000000e+00> : vector<8x384xf32>
      %174 = tpu.matmul %165, %3, %cst_49 {dimension_numbers = #tpu.dot_dimension_numbers<[1], [0], [0], [1], [0, 0, 1, 1], [], []>} : vector<8x128xf32>, vector<128x384xf32>, vector<8x384xf32> -> vector<8x384xf32>
      %175 = vector.extract_strided_slice %173 {offsets = [0, 0], sizes = [8, 128], strides = [1, 1]} : vector<8x384xf32> to vector<8x128xf32>
      %176 = vector.extract_strided_slice %174 {offsets = [0, 0], sizes = [8, 128], strides = [1, 1]} : vector<8x384xf32> to vector<8x128xf32>
      %177 = arith.addf %175, %176 : vector<8x128xf32>
      %178 = arith.negf %177 : vector<8x128xf32>
      %179 = math.exp %178 : vector<8x128xf32>
      %cst_50 = arith.constant 1.000000e+00 : f32
      %180 = vector.broadcast %cst_50 : f32 to vector<8x128xf32>
      %181 = arith.addf %180, %179 : vector<8x128xf32>
      %182 = arith.divf %180, %181 : vector<8x128xf32>
      %183 = vector.extract_strided_slice %173 {offsets = [0, 128], sizes = [8, 128], strides = [1, 1]} : vector<8x384xf32> to vector<8x128xf32>
      %184 = vector.extract_strided_slice %174 {offsets = [0, 128], sizes = [8, 128], strides = [1, 1]} : vector<8x384xf32> to vector<8x128xf32>
      %185 = arith.addf %183, %184 : vector<8x128xf32>
      %186 = arith.negf %185 : vector<8x128xf32>
      %187 = math.exp %186 : vector<8x128xf32>
      %cst_51 = arith.constant 1.000000e+00 : f32
      %188 = vector.broadcast %cst_51 : f32 to vector<8x128xf32>
      %189 = arith.addf %188, %187 : vector<8x128xf32>
      %190 = arith.divf %188, %189 : vector<8x128xf32>
      %191 = vector.extract_strided_slice %173 {offsets = [0, 256], sizes = [8, 128], strides = [1, 1]} : vector<8x384xf32> to vector<8x128xf32>
      %192 = vector.extract_strided_slice %174 {offsets = [0, 256], sizes = [8, 128], strides = [1, 1]} : vector<8x384xf32> to vector<8x128xf32>
      %193 = vector.broadcast %7 : vector<1x128xf32> to vector<8x128xf32>
      %194 = arith.addf %192, %193 : vector<8x128xf32>
      %195 = arith.mulf %182, %194 : vector<8x128xf32>
      %196 = arith.addf %191, %195 : vector<8x128xf32>
      %197 = math.tanh %196 : vector<8x128xf32>
      %cst_52 = arith.constant 1.000000e+00 : f32
      %198 = vector.broadcast %cst_52 : f32 to vector<8x128xf32>
      %199 = arith.subf %198, %190 : vector<8x128xf32>
      %200 = arith.mulf %199, %197 : vector<8x128xf32>
      %201 = arith.mulf %190, %165 : vector<8x128xf32>
      %202 = arith.addf %200, %201 : vector<8x128xf32>
      %c3_i32 = arith.constant 3 : i32
      %203 = vector.broadcast %c3_i32 : i32 to vector<8x1xi32>
      %204 = arith.cmpi sgt, %8, %203 : vector<8x1xi32>
      %205 = arith.maximumf %171, %202 : vector<8x128xf32>
      %206 = vector.shape_cast %204 : vector<8x1xi1> to vector<8x1xi1>
      %207 = vector.broadcast %206 : vector<8x1xi1> to vector<8x128xi1>
      %208 = arith.select %207, %205, %171 : vector<8x128xi1>, vector<8x128xf32>
      %c2 = arith.constant 2 : index
      %c0_53 = arith.constant 0 : index
      %c0_54 = arith.constant 0 : index
      %209 = vector.load %arg8[%c2, %c0_53, %c0_54] : memref<8x8x384xf32, #tpu.memory_space<vmem>>, vector<1x8x384xf32>
      %210 = vector.shape_cast %209 : vector<1x8x384xf32> to vector<8x384xf32>
      %cst_55 = arith.constant dense<0.000000e+00> : vector<8x384xf32>
      %211 = tpu.matmul %202, %3, %cst_55 {dimension_numbers = #tpu.dot_dimension_numbers<[1], [0], [0], [1], [0, 0, 1, 1], [], []>} : vector<8x128xf32>, vector<128x384xf32>, vector<8x384xf32> -> vector<8x384xf32>
      %212 = vector.extract_strided_slice %210 {offsets = [0, 0], sizes = [8, 128], strides = [1, 1]} : vector<8x384xf32> to vector<8x128xf32>
      %213 = vector.extract_strided_slice %211 {offsets = [0, 0], sizes = [8, 128], strides = [1, 1]} : vector<8x384xf32> to vector<8x128xf32>
      %214 = arith.addf %212, %213 : vector<8x128xf32>
      %215 = arith.negf %214 : vector<8x128xf32>
      %216 = math.exp %215 : vector<8x128xf32>
      %cst_56 = arith.constant 1.000000e+00 : f32
      %217 = vector.broadcast %cst_56 : f32 to vector<8x128xf32>
      %218 = arith.addf %217, %216 : vector<8x128xf32>
      %219 = arith.divf %217, %218 : vector<8x128xf32>
      %220 = vector.extract_strided_slice %210 {offsets = [0, 128], sizes = [8, 128], strides = [1, 1]} : vector<8x384xf32> to vector<8x128xf32>
      %221 = vector.extract_strided_slice %211 {offsets = [0, 128], sizes = [8, 128], strides = [1, 1]} : vector<8x384xf32> to vector<8x128xf32>
      %222 = arith.addf %220, %221 : vector<8x128xf32>
      %223 = arith.negf %222 : vector<8x128xf32>
      %224 = math.exp %223 : vector<8x128xf32>
      %cst_57 = arith.constant 1.000000e+00 : f32
      %225 = vector.broadcast %cst_57 : f32 to vector<8x128xf32>
      %226 = arith.addf %225, %224 : vector<8x128xf32>
      %227 = arith.divf %225, %226 : vector<8x128xf32>
      %228 = vector.extract_strided_slice %210 {offsets = [0, 256], sizes = [8, 128], strides = [1, 1]} : vector<8x384xf32> to vector<8x128xf32>
      %229 = vector.extract_strided_slice %211 {offsets = [0, 256], sizes = [8, 128], strides = [1, 1]} : vector<8x384xf32> to vector<8x128xf32>
      %230 = vector.broadcast %7 : vector<1x128xf32> to vector<8x128xf32>
      %231 = arith.addf %229, %230 : vector<8x128xf32>
      %232 = arith.mulf %219, %231 : vector<8x128xf32>
      %233 = arith.addf %228, %232 : vector<8x128xf32>
      %234 = math.tanh %233 : vector<8x128xf32>
      %cst_58 = arith.constant 1.000000e+00 : f32
      %235 = vector.broadcast %cst_58 : f32 to vector<8x128xf32>
      %236 = arith.subf %235, %227 : vector<8x128xf32>
      %237 = arith.mulf %236, %234 : vector<8x128xf32>
      %238 = arith.mulf %227, %202 : vector<8x128xf32>
      %239 = arith.addf %237, %238 : vector<8x128xf32>
      %c2_i32 = arith.constant 2 : i32
      %240 = vector.broadcast %c2_i32 : i32 to vector<8x1xi32>
      %241 = arith.cmpi sgt, %8, %240 : vector<8x1xi32>
      %242 = arith.maximumf %208, %239 : vector<8x128xf32>
      %243 = vector.shape_cast %241 : vector<8x1xi1> to vector<8x1xi1>
      %244 = vector.broadcast %243 : vector<8x1xi1> to vector<8x128xi1>
      %245 = arith.select %244, %242, %208 : vector<8x128xi1>, vector<8x128xf32>
      %c1 = arith.constant 1 : index
      %c0_59 = arith.constant 0 : index
      %c0_60 = arith.constant 0 : index
      %246 = vector.load %arg8[%c1, %c0_59, %c0_60] : memref<8x8x384xf32, #tpu.memory_space<vmem>>, vector<1x8x384xf32>
      %247 = vector.shape_cast %246 : vector<1x8x384xf32> to vector<8x384xf32>
      %cst_61 = arith.constant dense<0.000000e+00> : vector<8x384xf32>
      %248 = tpu.matmul %239, %3, %cst_61 {dimension_numbers = #tpu.dot_dimension_numbers<[1], [0], [0], [1], [0, 0, 1, 1], [], []>} : vector<8x128xf32>, vector<128x384xf32>, vector<8x384xf32> -> vector<8x384xf32>
      %249 = vector.extract_strided_slice %247 {offsets = [0, 0], sizes = [8, 128], strides = [1, 1]} : vector<8x384xf32> to vector<8x128xf32>
      %250 = vector.extract_strided_slice %248 {offsets = [0, 0], sizes = [8, 128], strides = [1, 1]} : vector<8x384xf32> to vector<8x128xf32>
      %251 = arith.addf %249, %250 : vector<8x128xf32>
      %252 = arith.negf %251 : vector<8x128xf32>
      %253 = math.exp %252 : vector<8x128xf32>
      %cst_62 = arith.constant 1.000000e+00 : f32
      %254 = vector.broadcast %cst_62 : f32 to vector<8x128xf32>
      %255 = arith.addf %254, %253 : vector<8x128xf32>
      %256 = arith.divf %254, %255 : vector<8x128xf32>
      %257 = vector.extract_strided_slice %247 {offsets = [0, 128], sizes = [8, 128], strides = [1, 1]} : vector<8x384xf32> to vector<8x128xf32>
      %258 = vector.extract_strided_slice %248 {offsets = [0, 128], sizes = [8, 128], strides = [1, 1]} : vector<8x384xf32> to vector<8x128xf32>
      %259 = arith.addf %257, %258 : vector<8x128xf32>
      %260 = arith.negf %259 : vector<8x128xf32>
      %261 = math.exp %260 : vector<8x128xf32>
      %cst_63 = arith.constant 1.000000e+00 : f32
      %262 = vector.broadcast %cst_63 : f32 to vector<8x128xf32>
      %263 = arith.addf %262, %261 : vector<8x128xf32>
      %264 = arith.divf %262, %263 : vector<8x128xf32>
      %265 = vector.extract_strided_slice %247 {offsets = [0, 256], sizes = [8, 128], strides = [1, 1]} : vector<8x384xf32> to vector<8x128xf32>
      %266 = vector.extract_strided_slice %248 {offsets = [0, 256], sizes = [8, 128], strides = [1, 1]} : vector<8x384xf32> to vector<8x128xf32>
      %267 = vector.broadcast %7 : vector<1x128xf32> to vector<8x128xf32>
      %268 = arith.addf %266, %267 : vector<8x128xf32>
      %269 = arith.mulf %256, %268 : vector<8x128xf32>
      %270 = arith.addf %265, %269 : vector<8x128xf32>
      %271 = math.tanh %270 : vector<8x128xf32>
      %cst_64 = arith.constant 1.000000e+00 : f32
      %272 = vector.broadcast %cst_64 : f32 to vector<8x128xf32>
      %273 = arith.subf %272, %264 : vector<8x128xf32>
      %274 = arith.mulf %273, %271 : vector<8x128xf32>
      %275 = arith.mulf %264, %239 : vector<8x128xf32>
      %276 = arith.addf %274, %275 : vector<8x128xf32>
      %c1_i32_65 = arith.constant 1 : i32
      %277 = vector.broadcast %c1_i32_65 : i32 to vector<8x1xi32>
      %278 = arith.cmpi sgt, %8, %277 : vector<8x1xi32>
      %279 = arith.maximumf %245, %276 : vector<8x128xf32>
      %280 = vector.shape_cast %278 : vector<8x1xi1> to vector<8x1xi1>
      %281 = vector.broadcast %280 : vector<8x1xi1> to vector<8x128xi1>
      %282 = arith.select %281, %279, %245 : vector<8x128xi1>, vector<8x128xf32>
      %c0_66 = arith.constant 0 : index
      %c0_67 = arith.constant 0 : index
      %c0_68 = arith.constant 0 : index
      %283 = vector.load %arg8[%c0_66, %c0_67, %c0_68] : memref<8x8x384xf32, #tpu.memory_space<vmem>>, vector<1x8x384xf32>
      %284 = vector.shape_cast %283 : vector<1x8x384xf32> to vector<8x384xf32>
      %cst_69 = arith.constant dense<0.000000e+00> : vector<8x384xf32>
      %285 = tpu.matmul %276, %3, %cst_69 {dimension_numbers = #tpu.dot_dimension_numbers<[1], [0], [0], [1], [0, 0, 1, 1], [], []>} : vector<8x128xf32>, vector<128x384xf32>, vector<8x384xf32> -> vector<8x384xf32>
      %286 = vector.extract_strided_slice %284 {offsets = [0, 0], sizes = [8, 128], strides = [1, 1]} : vector<8x384xf32> to vector<8x128xf32>
      %287 = vector.extract_strided_slice %285 {offsets = [0, 0], sizes = [8, 128], strides = [1, 1]} : vector<8x384xf32> to vector<8x128xf32>
      %288 = arith.addf %286, %287 : vector<8x128xf32>
      %289 = arith.negf %288 : vector<8x128xf32>
      %290 = math.exp %289 : vector<8x128xf32>
      %cst_70 = arith.constant 1.000000e+00 : f32
      %291 = vector.broadcast %cst_70 : f32 to vector<8x128xf32>
      %292 = arith.addf %291, %290 : vector<8x128xf32>
      %293 = arith.divf %291, %292 : vector<8x128xf32>
      %294 = vector.extract_strided_slice %284 {offsets = [0, 128], sizes = [8, 128], strides = [1, 1]} : vector<8x384xf32> to vector<8x128xf32>
      %295 = vector.extract_strided_slice %285 {offsets = [0, 128], sizes = [8, 128], strides = [1, 1]} : vector<8x384xf32> to vector<8x128xf32>
      %296 = arith.addf %294, %295 : vector<8x128xf32>
      %297 = arith.negf %296 : vector<8x128xf32>
      %298 = math.exp %297 : vector<8x128xf32>
      %cst_71 = arith.constant 1.000000e+00 : f32
      %299 = vector.broadcast %cst_71 : f32 to vector<8x128xf32>
      %300 = arith.addf %299, %298 : vector<8x128xf32>
      %301 = arith.divf %299, %300 : vector<8x128xf32>
      %302 = vector.extract_strided_slice %284 {offsets = [0, 256], sizes = [8, 128], strides = [1, 1]} : vector<8x384xf32> to vector<8x128xf32>
      %303 = vector.extract_strided_slice %285 {offsets = [0, 256], sizes = [8, 128], strides = [1, 1]} : vector<8x384xf32> to vector<8x128xf32>
      %304 = vector.broadcast %7 : vector<1x128xf32> to vector<8x128xf32>
      %305 = arith.addf %303, %304 : vector<8x128xf32>
      %306 = arith.mulf %293, %305 : vector<8x128xf32>
      %307 = arith.addf %302, %306 : vector<8x128xf32>
      %308 = math.tanh %307 : vector<8x128xf32>
      %cst_72 = arith.constant 1.000000e+00 : f32
      %309 = vector.broadcast %cst_72 : f32 to vector<8x128xf32>
      %310 = arith.subf %309, %301 : vector<8x128xf32>
      %311 = arith.mulf %310, %308 : vector<8x128xf32>
      %312 = arith.mulf %301, %276 : vector<8x128xf32>
      %313 = arith.addf %311, %312 : vector<8x128xf32>
      %c0_i32_73 = arith.constant 0 : i32
      %314 = vector.broadcast %c0_i32_73 : i32 to vector<8x1xi32>
      %315 = arith.cmpi sgt, %8, %314 : vector<8x1xi32>
      %316 = arith.maximumf %282, %313 : vector<8x128xf32>
      %317 = vector.shape_cast %315 : vector<8x1xi1> to vector<8x1xi1>
      %318 = vector.broadcast %317 : vector<8x1xi1> to vector<8x128xi1>
      %319 = arith.select %318, %316, %282 : vector<8x128xi1>, vector<8x128xf32>
      %c0_74 = arith.constant 0 : index
      %c0_75 = arith.constant 0 : index
      %320 = vector.load %arg7[%c0_74, %c0_75] : memref<8x128xf32, #tpu.memory_space<vmem>>, vector<8x128xf32>
      tpu.vector_store %arg7[%c0_74, %c0_75], %319 {strides = array<i32>} : memref<8x128xf32, #tpu.memory_space<vmem>>, vector<8x128xf32>,
    } else {
    }
    return
  }
  func.func @transform_0(%arg0: i32) -> (i32, i32, i32) {
    %c0_i32 = arith.constant 0 : i32
    %c0_i32_0 = arith.constant 0 : i32
    %c0_i32_1 = arith.constant 0 : i32
    %c0_i32_2 = arith.constant 0 : i32
    return %c0_i32, %c0_i32_0, %c0_i32_1 : i32, i32, i32
  }
  func.func @transform_1(%arg0: i32) -> (i32, i32, i32) {
    %c0_i32 = arith.constant 0 : i32
    %c0_i32_0 = arith.constant 0 : i32
    %c0_i32_1 = arith.constant 0 : i32
    return %arg0, %c0_i32, %c0_i32_0 : i32, i32, i32
  }
  func.func @transform_2(%arg0: i32) -> (i32, i32, i32) {
    %c0_i32 = arith.constant 0 : i32
    %c0_i32_0 = arith.constant 0 : i32
    %c0_i32_1 = arith.constant 0 : i32
    return %arg0, %c0_i32, %c0_i32_0 : i32, i32, i32
  }
  func.func @transform_3(%arg0: i32) -> (i32, i32, i32) {
    %c0_i32 = arith.constant 0 : i32
    %c0_i32_0 = arith.constant 0 : i32
    %c0_i32_1 = arith.constant 0 : i32
    return %arg0, %c0_i32, %c0_i32_0 : i32, i32, i32
  }
  func.func @transform_4(%arg0: i32) -> (i32, i32, i32) {
    %c0_i32 = arith.constant 0 : i32
    %c0_i32_0 = arith.constant 0 : i32
    %c0_i32_1 = arith.constant 0 : i32
    return %arg0, %c0_i32, %c0_i32_0 : i32, i32, i32
  }
  func.func @transform_5(%arg0: i32) -> (i32, i32) {
    %c0_i32 = arith.constant 0 : i32
    %c0_i32_0 = arith.constant 0 : i32
    %c0_i32_1 = arith.constant 0 : i32
    return %c0_i32, %c0_i32_0 : i32, i32
  }
  func.func @transform_6(%arg0: i32) -> (i32, i32) {
    %c0_i32 = arith.constant 0 : i32
    %c0_i32_0 = arith.constant 0 : i32
    return %c0_i32, %arg0 : i32, i32
  }
}

</mosaic_0001>

<llo_original>
// kernel: tpu_custom_call.1
$region0: #{tpu_custom_call.1}
  #allocation0 [shape = 'u32[]', space=smem, size = 0x4, offset = 0x4, fixed_abs, tag = 'smem constant byte address 0x4 - core index']
  #allocation1 [shape = 'u32[72,128]{1,0:T(1,128)}', space=vmem, size = 0x9000, scoped, tag = 'internal scratch']
  #allocation2 [shape = 'f32[8,8,384]{2,1,0:T(8,128)}', space=vmem, size = 0x18000, scoped, tag = 'scratch operand']
  %s0 = inlined_call_operand.hbm [shape: f32[8,8,32], index: 0, kind: input, shape index: {}]
  %s1 = inlined_call_operand.hbm [shape: f32[2,32,384], index: 1, kind: input, shape index: {}]
  %s2 = inlined_call_operand.hbm [shape: f32[2,128,384], index: 2, kind: input, shape index: {}]
  %s3 = inlined_call_operand.vmem [shape: f32[2,1,384], index: 3, kind: input, shape index: {}]
  %s4 = inlined_call_operand.vmem [shape: f32[2,1,128], index: 4, kind: input, shape index: {}]
  %s5 = inlined_call_operand.vmem [shape: s32[8,1], index: 5, kind: input, shape index: {}]
  %s6 = inlined_call_operand.hbm [shape: f32[8,256], index: 6, kind: output, shape index: {}]
  %s7 = sld [smem:[#allocation0]]
  $region77: #{tpu_custom_call.1} parent=0
    _
  %s9 = ssub.s32 1, %s7
  %s10 = scalar_select 0, %s9, %s7
  $region1: #{tpu_custom_call.1} parent=0
    #allocation3 [shape = 'u8[32768]{0}', space=vmem, size = 0x8000, scoped, tag = 'input window, operand 0, single buffered']
    #allocation4 [shape = 's32[2]{0}', space=sflag, size = 0x8, scoped, tag = 'scoped memory for tpu_custom_call.1']
    #allocation5 [shape = 's32[2]{0}', space=sflag, size = 0x8, scoped, tag = 'scoped memory for tpu_custom_call.1']
    #allocation6 [shape = 'u8[98304]{0}', space=vmem, size = 0x18000, scoped, tag = 'input window, operand 1']
    #allocation7 [shape = 's32[2]{0}', space=sflag, size = 0x8, scoped, tag = 'scoped memory for tpu_custom_call.1']
    #allocation8 [shape = 'u8[393216]{0}', space=vmem, size = 0x60000, scoped, tag = 'input window, operand 2']
    #allocation9 [shape = 'u8[8192]{0}', space=vmem, size = 0x2000, scoped, tag = 'output window, operand 0']
    %11 = vsyncpa [#allocation4], 0
    %12 = vsyncpa [#allocation7], 0
    %s13 = scalar_lea.sflag [#allocation7], 1
    %14 = vsyncpa %s13, 0
    %15 = vsyncpa [#allocation5], 0
    %s16 = scalar_lea.sflag [#allocation5], 1
    %17 = vsyncpa %s16, 0
    loop: start=0, step=1, limit=4
    $region2: #{tpu_custom_call.1} parent=1 // loop_pre_header
      _
    $region3: #{tpu_custom_call.1} parent=1 // loop_header
      %s19 = sphi 0, %s23
      %p20 = scmp.ge.s32.totalorder %s19, 4
      %s27 = sphi 0, %s27
      %s29 = sphi 0, %s27
      %s30 = sphi 0, %s29
      %s44 = sphi 0, %s30
      %s50 = sphi 0, %s52
      %s53 = sphi 0, %s50
      %s54 = sphi 0, %s53
      %s70 = sphi 0, %s54
      %s76 = sphi 0, %s78
      %s79 = sphi 0, %s76
      %s80 = sphi 0, %s79
      %s96 = sphi 0, %s80
      %s102 = sphi 0, %s104
      %s105 = sphi 0, %s102
      %s106 = sphi 0, %s105
      %s122 = sphi 0, %s106
      %s128 = sphi 0, %s130
      %s131 = sphi 0, %s128
      %s132 = sphi 0, %s131
      %s148 = sphi 0, %s132
      %s152 = sphi 0, %s152
      %s154 = sphi 0, %s152
      %s155 = sphi 0, %s154
      %s169 = sphi 0, %s155
      %s175 = sphi 0, %s177
      %s178 = sphi 0, %s175
      %s179 = sphi 0, %s178
      %s195 = sphi 0, %s179
    $region4: #{tpu_custom_call.1} parent=1 // loop_header_branch
      %22 = sbr.rel (%p20) target = $region8
    $region5: #{tpu_custom_call.1} parent=1 // loop_body
      %s24 = ssub.s32 %s19, 1
      %s25 = ssub.s32 %s19, 2
      %s26 = sadd.s32 %s19, 1
      %s28 = sadd.s32 %s27, 1
      %p31 = scmp.eq.s32.totalorder %s19, 1
      %p32 = scmp.ne.s32.totalorder %s27, %s29
      %p33 = scmp.eq.s32.totalorder %s19, 0
      %p34 = por %p32, %p33
      %p35 = scmp.ne.s32.totalorder %s27, %s29
      %p36 = scmp.eq.s32.totalorder %s24, 1
      %p37 = por %p35, %p36
      %p38 = scmp.ne.s32.totalorder %s29, %s30
      %p39 = scmp.eq.s32.totalorder %s24, 0
      %p40 = por %p38, %p39
      %p41 = scmp.ne.s32.totalorder %s29, %s30
      %p42 = scmp.eq.s32.totalorder %s25, 1
      %p43 = por %p41, %p42
      %p45 = scmp.ne.s32.totalorder %s30, %s44
      %p46 = scmp.eq.s32.totalorder %s25, 0
      %p47 = por %p45, %p46
      %s48 = ssub.s32 %s19, %s26
      %p49 = scmp.eq.s32.totalorder %s48, 0
      %s51 = sadd.s32 %s50, 1
      %s52 = scalar_select %p49, %s50, %s51
      %p55 = pneg %p49
      %p56 = scmp.eq.s32.totalorder %s19, 1
      %p57 = por %p55, %p56
      %p58 = scmp.ne.s32.totalorder %s50, %s53
      %p59 = scmp.eq.s32.totalorder %s19, 0
      %p60 = por %p58, %p59
      %p61 = scmp.ne.s32.totalorder %s50, %s53
      %p62 = scmp.eq.s32.totalorder %s24, 1
      %p63 = por %p61, %p62
      %p64 = scmp.ne.s32.totalorder %s53, %s54
      %p65 = scmp.eq.s32.totalorder %s24, 0
      %p66 = por %p64, %p65
      %p67 = scmp.ne.s32.totalorder %s53, %s54
      %p68 = scmp.eq.s32.totalorder %s25, 1
      %p69 = por %p67, %p68
      %p71 = scmp.ne.s32.totalorder %s54, %s70
      %p72 = scmp.eq.s32.totalorder %s25, 0
      %p73 = por %p71, %p72
      %s74 = ssub.s32 %s19, %s26
      %p75 = scmp.eq.s32.totalorder %s74, 0
      %s77 = sadd.s32 %s76, 1
      %s78 = scalar_select %p75, %s76, %s77
      %p81 = pneg %p75
      %p82 = scmp.eq.s32.totalorder %s19, 1
      %p83 = por %p81, %p82
      %p84 = scmp.ne.s32.totalorder %s76, %s79
      %p85 = scmp.eq.s32.totalorder %s19, 0
      %p86 = por %p84, %p85
      %p87 = scmp.ne.s32.totalorder %s76, %s79
      %p88 = scmp.eq.s32.totalorder %s24, 1
      %p89 = por %p87, %p88
      %p90 = scmp.ne.s32.totalorder %s79, %s80
      %p91 = scmp.eq.s32.totalorder %s24, 0
      %p92 = por %p90, %p91
      %p93 = scmp.ne.s32.totalorder %s79, %s80
      %p94 = scmp.eq.s32.totalorder %s25, 1
      %p95 = por %p93, %p94
      %p97 = scmp.ne.s32.totalorder %s80, %s96
      %p98 = scmp.eq.s32.totalorder %s25, 0
      %p99 = por %p97, %p98
      %s100 = ssub.s32 %s19, %s26
      %p101 = scmp.eq.s32.totalorder %s100, 0
      %s103 = sadd.s32 %s102, 1
      %s104 = scalar_select %p101, %s102, %s103
      %p107 = pneg %p101
      %p108 = scmp.eq.s32.totalorder %s19, 1
      %p109 = por %p107, %p108
      %p110 = scmp.ne.s32.totalorder %s102, %s105
      %p111 = scmp.eq.s32.totalorder %s19, 0
      %p112 = por %p110, %p111
      %p113 = scmp.ne.s32.totalorder %s102, %s105
      %p114 = scmp.eq.s32.totalorder %s24, 1
      %p115 = por %p113, %p114
      %p116 = scmp.ne.s32.totalorder %s105, %s106
      %p117 = scmp.eq.s32.totalorder %s24, 0
      %p118 = por %p116, %p117
      %p119 = scmp.ne.s32.totalorder %s105, %s106
      %p120 = scmp.eq.s32.totalorder %s25, 1
      %p121 = por %p119, %p120
      %p123 = scmp.ne.s32.totalorder %s106, %s122
      %p124 = scmp.eq.s32.totalorder %s25, 0
      %p125 = por %p123, %p124
      %s126 = ssub.s32 %s19, %s26
      %p127 = scmp.eq.s32.totalorder %s126, 0
      %s129 = sadd.s32 %s128, 1
      %s130 = scalar_select %p127, %s128, %s129
      %p133 = pneg %p127
      %p134 = scmp.eq.s32.totalorder %s19, 1
      %p135 = por %p133, %p134
      %p136 = scmp.ne.s32.totalorder %s128, %s131
      %p137 = scmp.eq.s32.totalorder %s19, 0
      %p138 = por %p136, %p137
      %p139 = scmp.ne.s32.totalorder %s128, %s131
      %p140 = scmp.eq.s32.totalorder %s24, 1
      %p141 = por %p139, %p140
      %p142 = scmp.ne.s32.totalorder %s131, %s132
      %p143 = scmp.eq.s32.totalorder %s24, 0
      %p144 = por %p142, %p143
      %p145 = scmp.ne.s32.totalorder %s131, %s132
      %p146 = scmp.eq.s32.totalorder %s25, 1
      %p147 = por %p145, %p146
      %p149 = scmp.ne.s32.totalorder %s132, %s148
      %p150 = scmp.eq.s32.totalorder %s25, 0
      %p151 = por %p149, %p150
      %s153 = sadd.s32 %s152, 1
      %p156 = scmp.eq.s32.totalorder %s19, 1
      %p157 = scmp.ne.s32.totalorder %s152, %s154
      %p158 = scmp.eq.s32.totalorder %s19, 0
      %p159 = por %p157, %p158
      %p160 = scmp.ne.s32.totalorder %s152, %s154
      %p161 = scmp.eq.s32.totalorder %s24, 1
      %p162 = por %p160, %p161
      %p163 = scmp.ne.s32.totalorder %s154, %s155
      %p164 = scmp.eq.s32.totalorder %s24, 0
      %p165 = por %p163, %p164
      %p166 = scmp.ne.s32.totalorder %s154, %s155
      %p167 = scmp.eq.s32.totalorder %s25, 1
      %p168 = por %p166, %p167
      %p170 = scmp.ne.s32.totalorder %s155, %s169
      %p171 = scmp.eq.s32.totalorder %s25, 0
      %p172 = por %p170, %p171
      %s173 = ssub.s32 %s19, %s26
      %p174 = scmp.eq.s32.totalorder %s173, 0
      %s176 = sadd.s32 %s175, 1
      %s177 = scalar_select %p174, %s175, %s176
      %p180 = pneg %p174
      %p181 = scmp.eq.s32.totalorder %s19, 1
      %p182 = por %p180, %p181
      %p183 = scmp.ne.s32.totalorder %s175, %s178
      %p184 = scmp.eq.s32.totalorder %s19, 0
      %p185 = por %p183, %p184
      %p186 = scmp.ne.s32.totalorder %s175, %s178
      %p187 = scmp.eq.s32.totalorder %s24, 1
      %p188 = por %p186, %p187
      %p189 = scmp.ne.s32.totalorder %s178, %s179
      %p190 = scmp.eq.s32.totalorder %s24, 0
      %p191 = por %p189, %p190
      %p192 = scmp.ne.s32.totalorder %s178, %s179
      %p193 = scmp.eq.s32.totalorder %s25, 1
      %p194 = por %p192, %p193
      %p196 = scmp.ne.s32.totalorder %s179, %s195
      %p197 = scmp.eq.s32.totalorder %s25, 0
      %p198 = por %p196, %p197
      %p199 = scmp.le.s32.totalorder 1, %s19
      %p200 = scmp.lt.s32.totalorder %s19, 3
      %p201 = pnand %p199, %p200
      %p202 = pneg %p201
      // Predicated region
      $region9: #{tpu_custom_call.1} parent=5 // pred_check
        _
      $region10: #{tpu_custom_call.1} parent=5 // pred_check_branch
        %204 = sbr.rel (%p201) target = $region12
      $region11: #{tpu_custom_call.1} parent=5 // pred_region
        %s205 = ssub.s32 %s19, 1
        // Predicated region
        $region13: #{tpu_custom_call.1} parent=11 // pred_check
          %p206 = pneg %p40
        $region14: #{tpu_custom_call.1} parent=11 // pred_check_branch
          %208 = sbr.rel (%p206) target = $region16
        $region15: #{tpu_custom_call.1} parent=11 // pred_region
          %210 = vsyncadd [#allocation4], 0
          %s211 = sshll.u32 %s0, 4
          %s212 = int_to_ptr.hbm [resolvable:$true] %s211
          %s213 = sshll.u32 [#allocation3], 4
          %s214 = int_to_ptr.vmem [resolvable:$true] %s213
          %219 = dma.hbm_to_vmem [thread:$0]  %s212, 1024, %s214, [#allocation4], 128, 128, 8
        $region16: #{tpu_custom_call.1} parent=11 // pred_fallthru
          _
        // Predicated region
        $region17: #{tpu_custom_call.1} parent=11 // pred_check
          %p220 = pneg %p165
        $region18: #{tpu_custom_call.1} parent=11 // pred_check_branch
          %222 = sbr.rel (%p220) target = $region20
        $region19: #{tpu_custom_call.1} parent=11 // pred_region
          _
        $region20: #{tpu_custom_call.1} parent=11 // pred_fallthru
          _
      $region12: #{tpu_custom_call.1} parent=5 // pred_fallthru
        _
      %p223 = scmp.lt.s32.totalorder %s19, 2
      // Predicated region
      $region21: #{tpu_custom_call.1} parent=5 // pred_check
        %p224 = pneg %p223
      $region22: #{tpu_custom_call.1} parent=5 // pred_check_branch
        %226 = sbr.rel (%p224) target = $region24
      $region23: #{tpu_custom_call.1} parent=5 // pred_region
        // Predicated region
        $region25: #{tpu_custom_call.1} parent=23 // pred_check
          %p227 = pneg %p60
        $region26: #{tpu_custom_call.1} parent=23 // pred_check_branch
          %229 = sbr.rel (%p227) target = $region28
        $region27: #{tpu_custom_call.1} parent=23 // pred_region
          %s230 = sand.u32 %s19, 1
          %s231 = scalar_lea.sflag [#allocation7], %s230
          %s232 = sand.u32 %s50, 1
          %s233 = smul.addr %s232, 96
          %s234 = scalar_lea.vmem [#allocation6], %s233
          %236 = vsyncadd %s231, 0
          %s237 = smul.addr %s19, 12
          %s238 = smul.addr %s237, 8
          %s239 = scalar_lea.hbm %s1, %s238
          %s240 = sshll.u32 %s239, 4
          %s241 = int_to_ptr.hbm [resolvable:$true] %s240
          %s242 = sshll.u32 %s234, 4
          %s243 = int_to_ptr.vmem [resolvable:$true] %s242
          %248 = dma.hbm_to_vmem [thread:$0]  %s241, 1536, %s243, %s231, 384, 384, 24
        $region28: #{tpu_custom_call.1} parent=23 // pred_fallthru
          _
        // Predicated region
        $region29: #{tpu_custom_call.1} parent=23 // pred_check
          %p249 = pneg %p86
        $region30: #{tpu_custom_call.1} parent=23 // pred_check_branch
          %251 = sbr.rel (%p249) target = $region32
        $region31: #{tpu_custom_call.1} parent=23 // pred_region
          %s252 = sand.u32 %s19, 1
          %s253 = scalar_lea.sflag [#allocation7], %s252
          %s254 = sand.u32 %s76, 1
          %s255 = smul.addr %s254, 384
          %s256 = scalar_lea.vmem [#allocation8], %s255
          %258 = vsyncadd %s253, 0
          %s259 = smul.addr %s19, 48
          %s260 = smul.addr %s259, 8
          %s261 = scalar_lea.hbm %s2, %s260
          %s262 = sshll.u32 %s261, 4
          %s263 = int_to_ptr.hbm [resolvable:$true] %s262
          %s264 = sshll.u32 %s256, 4
          %s265 = int_to_ptr.vmem [resolvable:$true] %s264
          %270 = dma.hbm_to_vmem [thread:$0]  %s263, 6144, %s265, %s253, 384, 384, 24
        $region32: #{tpu_custom_call.1} parent=23 // pred_fallthru
          _
        // Predicated region
        $region33: #{tpu_custom_call.1} parent=23 // pred_check
          %p271 = pneg %p112
        $region34: #{tpu_custom_call.1} parent=23 // pred_check_branch
          %273 = sbr.rel (%p271) target = $region36
        $region35: #{tpu_custom_call.1} parent=23 // pred_region
          %p274 = scmp.lt.s32.totalorder %s19, 1
          %s275 = scalar_select %p274, %s19, 1
          %s276 = smul.addr %s275, 3
          %s277 = scalar_lea.vmem %s3, %s276
        $region36: #{tpu_custom_call.1} parent=23 // pred_fallthru
          _
        // Predicated region
        $region37: #{tpu_custom_call.1} parent=23 // pred_check
          %p278 = pneg %p138
        $region38: #{tpu_custom_call.1} parent=23 // pred_check_branch
          %280 = sbr.rel (%p278) target = $region40
        $region39: #{tpu_custom_call.1} parent=23 // pred_region
          %p281 = scmp.lt.s32.totalorder %s19, 1
          %s282 = scalar_select %p281, %s19, 1
          %s283 = scalar_lea.vmem %s4, %s282
        $region40: #{tpu_custom_call.1} parent=23 // pred_fallthru
          _
      $region24: #{tpu_custom_call.1} parent=5 // pred_fallthru
        _
      %p284 = scmp.le.s32.totalorder 1, %s19
      %p285 = scmp.lt.s32.totalorder %s19, 3
      %p286 = pnand %p284, %p285
      %p287 = pneg %p286
      // Predicated region
      $region41: #{tpu_custom_call.1} parent=5 // pred_check
        _
      $region42: #{tpu_custom_call.1} parent=5 // pred_check_branch
        %289 = sbr.rel (%p286) target = $region44
      $region43: #{tpu_custom_call.1} parent=5 // pred_region
        %s290 = ssub.s32 %s19, 1
        // Predicated region
        $region45: #{tpu_custom_call.1} parent=43 // pred_check
          %p291 = pneg %p40
        $region46: #{tpu_custom_call.1} parent=43 // pred_check_branch
          %293 = sbr.rel (%p291) target = $region48
        $region47: #{tpu_custom_call.1} parent=43 // pred_region
          %295 = dma.done [#allocation4], 1024
        $region48: #{tpu_custom_call.1} parent=43 // pred_fallthru
          _
        %s296 = sand.u32 %s24, 1
        %s297 = scalar_lea.sflag [#allocation7], %s296
        %s298 = sand.u32 %s53, 1
        %s299 = smul.addr %s298, 96
        %s300 = scalar_lea.vmem [#allocation6], %s299
        // Predicated region
        $region49: #{tpu_custom_call.1} parent=43 // pred_check
          %p301 = pneg %p66
        $region50: #{tpu_custom_call.1} parent=43 // pred_check_branch
          %303 = sbr.rel (%p301) target = $region52
        $region51: #{tpu_custom_call.1} parent=43 // pred_region
          %305 = dma.done %s297, 1536
        $region52: #{tpu_custom_call.1} parent=43 // pred_fallthru
          _
        %s306 = sand.u32 %s24, 1
        %s307 = scalar_lea.sflag [#allocation7], %s306
        %s308 = sand.u32 %s79, 1
        %s309 = smul.addr %s308, 384
        %s310 = scalar_lea.vmem [#allocation8], %s309
        // Predicated region
        $region53: #{tpu_custom_call.1} parent=43 // pred_check
          %p311 = pneg %p92
        $region54: #{tpu_custom_call.1} parent=43 // pred_check_branch
          %313 = sbr.rel (%p311) target = $region56
        $region55: #{tpu_custom_call.1} parent=43 // pred_region
          %315 = dma.done %s307, 6144
        $region56: #{tpu_custom_call.1} parent=43 // pred_fallthru
          _
        %p316 = pneg %p40
        %p317 = pneg %p37
        %s318 = sand.u32 %s24, 1
        %s319 = scalar_lea.sflag [#allocation7], %s318
        %s320 = sand.u32 %s53, 1
        %s321 = smul.addr %s320, 96
        %s322 = scalar_lea.vmem [#allocation6], %s321
        %p323 = pneg %p66
        %p324 = pneg %p63
        %s325 = sand.u32 %s24, 1
        %s326 = scalar_lea.sflag [#allocation7], %s325
        %s327 = sand.u32 %s79, 1
        %s328 = smul.addr %s327, 384
        %s329 = scalar_lea.vmem [#allocation8], %s328
        %p330 = pneg %p92
        %p331 = pneg %p89
        %p332 = scmp.lt.s32.totalorder %s24, 1
        %s333 = scalar_select %p332, %s24, 1
        %s334 = smul.addr %s333, 3
        %s335 = scalar_lea.vmem %s3, %s334
        %p336 = pneg %p118
        %p337 = pneg %p115
        %p338 = scmp.lt.s32.totalorder %s24, 1
        %s339 = scalar_select %p338, %s24, 1
        %s340 = scalar_lea.vmem %s4, %s339
        %p341 = pneg %p144
        %p342 = pneg %p141
        %p343 = pneg %p165
        %p344 = pneg %p162
        %p345 = pneg %p191
        %p346 = pneg %p188
        %s347 = sand.u32 %s178, 1
        %s348 = scalar_lea.sflag [#allocation5], %s347
        %s349 = sand.u32 %s178, 1
        %s350 = smul.addr %s349, 8
        %s351 = scalar_lea.vmem [#allocation9], %s350
        %p352 = scmp.lt.s32.totalorder %s24, 1
        %s353 = scalar_select %p352, %s24, 1
        %s354 = smul.addr %s353, 3
        %s355 = scalar_lea.vmem %s3, %s354
        %p356 = scmp.lt.s32.totalorder %s24, 1
        %s357 = scalar_select %p356, %s24, 1
        %s358 = scalar_lea.vmem %s4, %s357
        %v359 = vld [vmem:[%s300] sm:$0xff]
        %v360 = vld [vmem:[%s300 + $0x8] sm:$0xff]
        %v361 = vld [vmem:[%s300 + $0x10] sm:$0xff]
        %v362 = vld [vmem:[%s300 + $0x18] sm:$0xff]
        %v363 = vld [vmem:[%s300 + $0x20] sm:$0xff]
        %v364 = vld [vmem:[%s300 + $0x28] sm:$0xff]
        %v365 = vld [vmem:[%s300 + $0x30] sm:$0xff]
        %v366 = vld [vmem:[%s300 + $0x38] sm:$0xff]
        %v367 = vld [vmem:[%s300 + $0x40] sm:$0xff]
        %v368 = vld [vmem:[%s300 + $0x48] sm:$0xff]
        %v369 = vld [vmem:[%s300 + $0x50] sm:$0xff]
        %v370 = vld [vmem:[%s300 + $0x58] sm:$0xff]
        %v371 = vld [vmem:[%s310] sm:$0xff]
        %v372 = vld [vmem:[%s310 + $0x8] sm:$0xff]
        %v373 = vld [vmem:[%s310 + $0x10] sm:$0xff]
        %v374 = vld [vmem:[%s310 + $0x18] sm:$0xff]
        %v375 = vld [vmem:[%s310 + $0x20] sm:$0xff]
        %v376 = vld [vmem:[%s310 + $0x28] sm:$0xff]
        %v377 = vld [vmem:[%s310 + $0x30] sm:$0xff]
        %v378 = vld [vmem:[%s310 + $0x38] sm:$0xff]
        %v379 = vld [vmem:[%s310 + $0x40] sm:$0xff]
        %v380 = vld [vmem:[%s310 + $0x48] sm:$0xff]
        %v381 = vld [vmem:[%s310 + $0x50] sm:$0xff]
        %v382 = vld [vmem:[%s310 + $0x58] sm:$0xff]
        %v383 = vld [vmem:[%s310 + $0x60] sm:$0xff]
        %v384 = vld [vmem:[%s310 + $0x68] sm:$0xff]
        %v385 = vld [vmem:[%s310 + $0x70] sm:$0xff]
        %v386 = vld [vmem:[%s310 + $0x78] sm:$0xff]
        %v387 = vld [vmem:[%s310 + $0x80] sm:$0xff]
        %v388 = vld [vmem:[%s310 + $0x88] sm:$0xff]
        %v389 = vld [vmem:[%s310 + $0x90] sm:$0xff]
        %v390 = vld [vmem:[%s310 + $0x98] sm:$0xff]
        %v391 = vld [vmem:[%s310 + $0xa0] sm:$0xff]
        %v392 = vld [vmem:[%s310 + $0xa8] sm:$0xff]
        %v393 = vld [vmem:[%s310 + $0xb0] sm:$0xff]
        %v394 = vld [vmem:[%s310 + $0xb8] sm:$0xff]
        %v395 = vld [vmem:[%s310 + $0xc0] sm:$0xff]
        %v396 = vld [vmem:[%s310 + $0xc8] sm:$0xff]
        %v397 = vld [vmem:[%s310 + $0xd0] sm:$0xff]
        %v398 = vld [vmem:[%s310 + $0xd8] sm:$0xff]
        %v399 = vld [vmem:[%s310 + $0xe0] sm:$0xff]
        %v400 = vld [vmem:[%s310 + $0xe8] sm:$0xff]
        %v401 = vld [vmem:[%s310 + $0xf0] sm:$0xff]
        %v402 = vld [vmem:[%s310 + $0xf8] sm:$0xff]
        %v403 = vld [vmem:[%s310 + $0x100] sm:$0xff]
        %v404 = vld [vmem:[%s310 + $0x108] sm:$0xff]
        %v405 = vld [vmem:[%s310 + $0x110] sm:$0xff]
        %v406 = vld [vmem:[%s310 + $0x118] sm:$0xff]
        %v407 = vld [vmem:[%s310 + $0x120] sm:$0xff]
        %v408 = vld [vmem:[%s310 + $0x128] sm:$0xff]
        %v409 = vld [vmem:[%s310 + $0x130] sm:$0xff]
        %v410 = vld [vmem:[%s310 + $0x138] sm:$0xff]
        %v411 = vld [vmem:[%s310 + $0x140] sm:$0xff]
        %v412 = vld [vmem:[%s310 + $0x148] sm:$0xff]
        %v413 = vld [vmem:[%s310 + $0x150] sm:$0xff]
        %v414 = vld [vmem:[%s310 + $0x158] sm:$0xff]
        %v415 = vld [vmem:[%s310 + $0x160] sm:$0xff]
        %v416 = vld [vmem:[%s310 + $0x168] sm:$0xff]
        %v417 = vld [vmem:[%s310 + $0x170] sm:$0xff]
        %v418 = vld [vmem:[%s310 + $0x178] sm:$0xff]
        %v419 = vld [vmem:[%s355] sm:$0x7]
        %v420 = vld [vmem:[%s358] sm:$0x1]
        %v421 = vld [vmem:[%s5] sm:$0xff]
        %v422 = vld [vmem:[#allocation3] sm:$0xff]
        %v423 = vld [vmem:[#allocation3 + $0x8] sm:$0xff]
        %v424 = vld [vmem:[#allocation3 + $0x10] sm:$0xff]
        %v425 = vld [vmem:[#allocation3 + $0x18] sm:$0xff]
        %v426 = vld [vmem:[#allocation3 + $0x20] sm:$0xff]
        %v427 = vld [vmem:[#allocation3 + $0x28] sm:$0xff]
        %v428 = vld [vmem:[#allocation3 + $0x30] sm:$0xff]
        %v429 = vld [vmem:[#allocation3 + $0x38] sm:$0xff]
        %v431 = vperm.slane %v419, 0
        %v432 = vperm.slane %v419, 1
        %v433 = vperm.slane %v419, 2
        %vm437 = vcmask 261120
        %v439 = vsel %vm437, %v422, 0
        %v442 = vsel %vm437, %v423, 0
        %v445 = vsel %vm437, %v424, 0
        %v448 = vsel %vm437, %v425, 0
        %v451 = vsel %vm437, %v426, 0
        %v454 = vsel %vm437, %v427, 0
        %v457 = vsel %vm437, %v428, 0
        %v460 = vsel %vm437, %v429, 0
        %462 = vmatpush.msra.mxu0 0.0
        %463 = vmatpush.msra.mxu0 0.0
        %464 = vmatpush.msra.mxu0 0.0
        %465 = vmatpush.msra.mxu0 0.0
        %466 = vmatpush.msra.mxu0 0.0
        %467 = vmatpush.msra.mxu0 0.0
        %468 = vmatpush.msra.mxu0 0.0
        %469 = vmatpush.msra.mxu0 0.0
        %470 = vmatpush.msra.mxu0 0.0
        %471 = vmatpush.msra.mxu0 0.0
        %472 = vmatpush.msra.mxu0 0.0
        %473 = vmatpush.msra.mxu0 0.0
        %474 = vmatpush.msra.mxu0 %v368
        %475 = vmatpush.msra.mxu0 %v365
        %476 = vmatpush.msra.mxu0 %v362
        %477 = vmatpush.msra.mxu0 %v359
        %478 = vmatmul.f32.gmra.mxu0 %v439
        %v479 = vpop.f32.mrf.mxu0
        %v480 = vadd.f32 %v431, %v479
        %481 = vmatmul.f32.gmra.mxu0 %v442
        %v482 = vpop.f32.mrf.mxu0
        %v483 = vadd.f32 %v431, %v482
        %484 = vmatmul.f32.gmra.mxu0 %v445
        %v485 = vpop.f32.mrf.mxu0
        %v486 = vadd.f32 %v431, %v485
        %487 = vmatmul.f32.gmra.mxu0 %v448
        %v488 = vpop.f32.mrf.mxu0
        %v489 = vadd.f32 %v431, %v488
        %490 = vmatmul.f32.gmra.mxu0 %v451
        %v491 = vpop.f32.mrf.mxu0
        %v492 = vadd.f32 %v431, %v491
        %493 = vmatmul.f32.gmra.mxu0 %v454
        %v494 = vpop.f32.mrf.mxu0
        %v495 = vadd.f32 %v431, %v494
        %496 = vmatmul.f32.gmra.mxu0 %v457
        %v497 = vpop.f32.mrf.mxu0
        %v498 = vadd.f32 %v431, %v497
        %499 = vmatmul.f32.gmra.mxu0 %v460
        %v500 = vpop.f32.mrf.mxu0
        %v501 = vadd.f32 %v431, %v500
        %502 = vdwg.mxu0
        %503 = vmatpush.msra.mxu0 0.0
        %504 = vmatpush.msra.mxu0 0.0
        %505 = vmatpush.msra.mxu0 0.0
        %506 = vmatpush.msra.mxu0 0.0
        %507 = vmatpush.msra.mxu0 0.0
        %508 = vmatpush.msra.mxu0 0.0
        %509 = vmatpush.msra.mxu0 0.0
        %510 = vmatpush.msra.mxu0 0.0
        %511 = vmatpush.msra.mxu0 0.0
        %512 = vmatpush.msra.mxu0 0.0
        %513 = vmatpush.msra.mxu0 0.0
        %514 = vmatpush.msra.mxu0 0.0
        %515 = vmatpush.msra.mxu0 %v369
        %516 = vmatpush.msra.mxu0 %v366
        %517 = vmatpush.msra.mxu0 %v363
        %518 = vmatpush.msra.mxu0 %v360
        %519 = vmatmul.f32.gmra.mxu0 %v439
        %v520 = vpop.f32.mrf.mxu0
        %v521 = vadd.f32 %v432, %v520
        %522 = vmatmul.f32.gmra.mxu0 %v442
        %v523 = vpop.f32.mrf.mxu0
        %v524 = vadd.f32 %v432, %v523
        %525 = vmatmul.f32.gmra.mxu0 %v445
        %v526 = vpop.f32.mrf.mxu0
        %v527 = vadd.f32 %v432, %v526
        %528 = vmatmul.f32.gmra.mxu0 %v448
        %v529 = vpop.f32.mrf.mxu0
        %v530 = vadd.f32 %v432, %v529
        %531 = vmatmul.f32.gmra.mxu0 %v451
        %v532 = vpop.f32.mrf.mxu0
        %v533 = vadd.f32 %v432, %v532
        %534 = vmatmul.f32.gmra.mxu0 %v454
        %v535 = vpop.f32.mrf.mxu0
        %v536 = vadd.f32 %v432, %v535
        %537 = vmatmul.f32.gmra.mxu0 %v457
        %v538 = vpop.f32.mrf.mxu0
        %v539 = vadd.f32 %v432, %v538
        %540 = vmatmul.f32.gmra.mxu0 %v460
        %v541 = vpop.f32.mrf.mxu0
        %v542 = vadd.f32 %v432, %v541
        %543 = vdwg.mxu0
        %544 = vmatpush.msra.mxu0 0.0
        %545 = vmatpush.msra.mxu0 0.0
        %546 = vmatpush.msra.mxu0 0.0
        %547 = vmatpush.msra.mxu0 0.0
        %548 = vmatpush.msra.mxu0 0.0
        %549 = vmatpush.msra.mxu0 0.0
        %550 = vmatpush.msra.mxu0 0.0
        %551 = vmatpush.msra.mxu0 0.0
        %552 = vmatpush.msra.mxu0 0.0
        %553 = vmatpush.msra.mxu0 0.0
        %554 = vmatpush.msra.mxu0 0.0
        %555 = vmatpush.msra.mxu0 0.0
        %556 = vmatpush.msra.mxu0 %v370
        %557 = vmatpush.msra.mxu0 %v367
        %558 = vmatpush.msra.mxu0 %v364
        %559 = vmatpush.msra.mxu0 %v361
        %560 = vmatmul.f32.gmra.mxu0 %v439
        %v561 = vpop.f32.mrf.mxu0
        %v562 = vadd.f32 %v433, %v561
        %563 = vmatmul.f32.gmra.mxu0 %v442
        %v564 = vpop.f32.mrf.mxu0
        %v565 = vadd.f32 %v433, %v564
        %566 = vmatmul.f32.gmra.mxu0 %v445
        %v567 = vpop.f32.mrf.mxu0
        %v568 = vadd.f32 %v433, %v567
        %569 = vmatmul.f32.gmra.mxu0 %v448
        %v570 = vpop.f32.mrf.mxu0
        %v571 = vadd.f32 %v433, %v570
        %572 = vmatmul.f32.gmra.mxu0 %v451
        %v573 = vpop.f32.mrf.mxu0
        %v574 = vadd.f32 %v433, %v573
        %575 = vmatmul.f32.gmra.mxu0 %v454
        %v576 = vpop.f32.mrf.mxu0
        %v577 = vadd.f32 %v433, %v576
        %578 = vmatmul.f32.gmra.mxu0 %v457
        %v579 = vpop.f32.mrf.mxu0
        %v580 = vadd.f32 %v433, %v579
        %581 = vmatmul.f32.gmra.mxu0 %v460
        %v582 = vpop.f32.mrf.mxu0
        %v583 = vadd.f32 %v433, %v582
        %584 = vdwg.mxu0
        %585 = vst [vmem:[#allocation2] sm:$0xff] %v480
        %586 = vst [vmem:[#allocation2 + $0x8] sm:$0xff] %v521
        %587 = vst [vmem:[#allocation2 + $0x10] sm:$0xff] %v562
        %588 = vst [vmem:[#allocation2 + $0x18] sm:$0xff] %v483
        %589 = vst [vmem:[#allocation2 + $0x20] sm:$0xff] %v524
        %590 = vst [vmem:[#allocation2 + $0x28] sm:$0xff] %v565
        %591 = vst [vmem:[#allocation2 + $0x30] sm:$0xff] %v486
        %592 = vst [vmem:[#allocation2 + $0x38] sm:$0xff] %v527
        %593 = vst [vmem:[#allocation2 + $0x40] sm:$0xff] %v568
        %594 = vst [vmem:[#allocation2 + $0x48] sm:$0xff] %v489
        %595 = vst [vmem:[#allocation2 + $0x50] sm:$0xff] %v530
        %596 = vst [vmem:[#allocation2 + $0x58] sm:$0xff] %v571
        %597 = vst [vmem:[#allocation2 + $0x60] sm:$0xff] %v492
        %598 = vst [vmem:[#allocation2 + $0x68] sm:$0xff] %v533
        %599 = vst [vmem:[#allocation2 + $0x70] sm:$0xff] %v574
        %600 = vst [vmem:[#allocation2 + $0x78] sm:$0xff] %v495
        %601 = vst [vmem:[#allocation2 + $0x80] sm:$0xff] %v536
        %602 = vst [vmem:[#allocation2 + $0x88] sm:$0xff] %v577
        %603 = vst [vmem:[#allocation2 + $0x90] sm:$0xff] %v498
        %604 = vst [vmem:[#allocation2 + $0x98] sm:$0xff] %v539
        %605 = vst [vmem:[#allocation2 + $0xa0] sm:$0xff] %v580
        %606 = vst [vmem:[#allocation2 + $0xa8] sm:$0xff] %v501
        %607 = vst [vmem:[#allocation2 + $0xb0] sm:$0xff] %v542
        %608 = vst [vmem:[#allocation2 + $0xb8] sm:$0xff] %v583
        %p609 = scmp.eq.s32.totalorder %s24, 0
        // Predicated region
        $region57: #{tpu_custom_call.1} parent=43 // pred_check
          %p610 = pneg %p609
        $region58: #{tpu_custom_call.1} parent=43 // pred_check_branch
          %612 = sbr.rel (%p610) target = $region60
        $region59: #{tpu_custom_call.1} parent=43 // pred_region
          %v613 = vld [vmem:[#allocation2] sm:$0xff]
          %v614 = vld [vmem:[#allocation2 + $0x8] sm:$0xff]
          %v615 = vld [vmem:[#allocation2 + $0x10] sm:$0xff]
          %616 = vmatpush.msra.mxu0 %v416
          %617 = vmatpush.msra.mxu0 %v413
          %618 = vmatpush.msra.mxu0 %v410
          %619 = vmatpush.msra.mxu0 %v407
          %620 = vmatpush.msra.mxu0 %v404
          %621 = vmatpush.msra.mxu0 %v401
          %622 = vmatpush.msra.mxu0 %v398
          %623 = vmatpush.msra.mxu0 %v395
          %624 = vmatpush.msra.mxu0 %v392
          %625 = vmatpush.msra.mxu0 %v389
          %626 = vmatpush.msra.mxu0 %v386
          %627 = vmatpush.msra.mxu0 %v383
          %628 = vmatpush.msra.mxu0 %v380
          %629 = vmatpush.msra.mxu0 %v377
          %630 = vmatpush.msra.mxu0 %v374
          %631 = vmatpush.msra.mxu0 %v371
          %632 = vmatmul.f32.gmra.mxu0 0.0
          %v633 = vpop.f32.mrf.mxu0
          %v634 = vadd.f32 0.0, %v633
          %635 = vdwg.mxu0
          %636 = vmatpush.msra.mxu0 %v417
          %637 = vmatpush.msra.mxu0 %v414
          %638 = vmatpush.msra.mxu0 %v411
          %639 = vmatpush.msra.mxu0 %v408
          %640 = vmatpush.msra.mxu0 %v405
          %641 = vmatpush.msra.mxu0 %v402
          %642 = vmatpush.msra.mxu0 %v399
          %643 = vmatpush.msra.mxu0 %v396
          %644 = vmatpush.msra.mxu0 %v393
          %645 = vmatpush.msra.mxu0 %v390
          %646 = vmatpush.msra.mxu0 %v387
          %647 = vmatpush.msra.mxu0 %v384
          %648 = vmatpush.msra.mxu0 %v381
          %649 = vmatpush.msra.mxu0 %v378
          %650 = vmatpush.msra.mxu0 %v375
          %651 = vmatpush.msra.mxu0 %v372
          %652 = vmatmul.f32.gmra.mxu0 0.0
          %v653 = vpop.f32.mrf.mxu0
          %v654 = vadd.f32 0.0, %v653
          %655 = vdwg.mxu0
          %656 = vmatpush.msra.mxu0 %v418
          %657 = vmatpush.msra.mxu0 %v415
          %658 = vmatpush.msra.mxu0 %v412
          %659 = vmatpush.msra.mxu0 %v409
          %660 = vmatpush.msra.mxu0 %v406
          %661 = vmatpush.msra.mxu0 %v403
          %662 = vmatpush.msra.mxu0 %v400
          %663 = vmatpush.msra.mxu0 %v397
          %664 = vmatpush.msra.mxu0 %v394
          %665 = vmatpush.msra.mxu0 %v391
          %666 = vmatpush.msra.mxu0 %v388
          %667 = vmatpush.msra.mxu0 %v385
          %668 = vmatpush.msra.mxu0 %v382
          %669 = vmatpush.msra.mxu0 %v379
          %670 = vmatpush.msra.mxu0 %v376
          %671 = vmatpush.msra.mxu0 %v373
          %672 = vmatmul.f32.gmra.mxu0 0.0
          %v673 = vpop.f32.mrf.mxu0
          %v674 = vadd.f32 0.0, %v673
          %675 = vdwg.mxu0
          %v676 = vadd.f32 %v613, %v634
          %v677 = vxor.u32 %v676, 2147483648
          %v678 = vmul.f32 %v677, 1.442695
          %v679 = vpow.pop %v678
          %v680 = vadd.f32 %v679, 1.0
          %v681 = vrcp.pop %v680
          %v682 = vmul.f32 %v680, %v681
          %v683 = vsub.f32 1.0, %v682
          %v684 = vmul.f32 %v681, %v683
          %v685 = vadd.f32 %v681, %v684
          %vm686 = vweird.f32 %v680
          %vm687 = vweird.f32 %v681
          %vm688 = vmor %vm686, %vm687
          %v689 = vsel %vm688, %v681, %v685
          %v690 = vand.u32 2147483647, %v680
          %vm691 = vcmp.eq.f32.partialorder %v690, 8.507059e+37
          %v692 = vand.u32 %v680, 2147483648
          %v693 = vor.u32 1.1754944e-38, %v692
          %v694 = vsel %vm691, %v693, %v689
          %v695 = vmul.f32 1.0, %v694
          %v696 = vadd.f32 %v614, %v654
          %v697 = vxor.u32 %v696, 2147483648
          %v698 = vmul.f32 %v697, 1.442695
          %v699 = vpow.pop %v698
          %v700 = vadd.f32 %v699, 1.0
          %v701 = vrcp.pop %v700
          %v702 = vmul.f32 %v700, %v701
          %v703 = vsub.f32 1.0, %v702
          %v704 = vmul.f32 %v701, %v703
          %v705 = vadd.f32 %v701, %v704
          %vm706 = vweird.f32 %v700
          %vm707 = vweird.f32 %v701
          %vm708 = vmor %vm706, %vm707
          %v709 = vsel %vm708, %v701, %v705
          %v710 = vand.u32 2147483647, %v700
          %vm711 = vcmp.eq.f32.partialorder %v710, 8.507059e+37
          %v712 = vand.u32 %v700, 2147483648
          %v713 = vor.u32 1.1754944e-38, %v712
          %v714 = vsel %vm711, %v713, %v709
          %v715 = vmul.f32 1.0, %v714
          %v717 = vperm.slane %v420, 0
          %v719 = vadd.f32 %v674, %v717
          %v720 = vmul.f32 %v695, %v719
          %v721 = vadd.f32 %v615, %v720
          %v722 = vtanh.pop %v721
          %v723 = vsub.f32 1.0, %v715
          %v724 = vmul.f32 %v723, %v722
          %v725 = vmul.f32 %v715, 0.0
          %v726 = vadd.f32 %v724, %v725
          %vm727 = vcmp.gt.s32.totalorder %v421, 0
          %v728 = vmax.f32 %v726, -1e+30
          %v729 = vsel %vm727, 1, 0
          %730 = vset.pattern.permute.xlu0 0
          %731 = vperm.xlu0 %730, %v729
          %v732 = vpop.permute.xlu0 %731
          %vm733 = vcmp.eq.s32.totalorder %v732, 1
          %v734 = vsel %vm733, %v728, -1e+30
          %s735 = scalar_lea.vmem [#allocation2], 24
          %v736 = vld [vmem:[%s735] sm:$0xff]
          %v737 = vld [vmem:[%s735 + $0x8] sm:$0xff]
          %v738 = vld [vmem:[%s735 + $0x10] sm:$0xff]
          %739 = vmatpush.msra.mxu0 %v416
          %740 = vmatpush.msra.mxu0 %v413
          %741 = vmatpush.msra.mxu0 %v410
          %742 = vmatpush.msra.mxu0 %v407
          %743 = vmatpush.msra.mxu0 %v404
          %744 = vmatpush.msra.mxu0 %v401
          %745 = vmatpush.msra.mxu0 %v398
          %746 = vmatpush.msra.mxu0 %v395
          %747 = vmatpush.msra.mxu0 %v392
          %748 = vmatpush.msra.mxu0 %v389
          %749 = vmatpush.msra.mxu0 %v386
          %750 = vmatpush.msra.mxu0 %v383
          %751 = vmatpush.msra.mxu0 %v380
          %752 = vmatpush.msra.mxu0 %v377
          %753 = vmatpush.msra.mxu0 %v374
          %754 = vmatpush.msra.mxu0 %v371
          %755 = vmatmul.f32.gmra.mxu0 %v726
          %v756 = vpop.f32.mrf.mxu0
          %v757 = vadd.f32 0.0, %v756
          %758 = vdwg.mxu0
          %759 = vmatpush.msra.mxu0 %v417
          %760 = vmatpush.msra.mxu0 %v414
          %761 = vmatpush.msra.mxu0 %v411
          %762 = vmatpush.msra.mxu0 %v408
          %763 = vmatpush.msra.mxu0 %v405
          %764 = vmatpush.msra.mxu0 %v402
          %765 = vmatpush.msra.mxu0 %v399
          %766 = vmatpush.msra.mxu0 %v396
          %767 = vmatpush.msra.mxu0 %v393
          %768 = vmatpush.msra.mxu0 %v390
          %769 = vmatpush.msra.mxu0 %v387
          %770 = vmatpush.msra.mxu0 %v384
          %771 = vmatpush.msra.mxu0 %v381
          %772 = vmatpush.msra.mxu0 %v378
          %773 = vmatpush.msra.mxu0 %v375
          %774 = vmatpush.msra.mxu0 %v372
          %775 = vmatmul.f32.gmra.mxu0 %v726
          %v776 = vpop.f32.mrf.mxu0
          %v777 = vadd.f32 0.0, %v776
          %778 = vdwg.mxu0
          %779 = vmatpush.msra.mxu0 %v418
          %780 = vmatpush.msra.mxu0 %v415
          %781 = vmatpush.msra.mxu0 %v412
          %782 = vmatpush.msra.mxu0 %v409
          %783 = vmatpush.msra.mxu0 %v406
          %784 = vmatpush.msra.mxu0 %v403
          %785 = vmatpush.msra.mxu0 %v400
          %786 = vmatpush.msra.mxu0 %v397
          %787 = vmatpush.msra.mxu0 %v394
          %788 = vmatpush.msra.mxu0 %v391
          %789 = vmatpush.msra.mxu0 %v388
          %790 = vmatpush.msra.mxu0 %v385
          %791 = vmatpush.msra.mxu0 %v382
          %792 = vmatpush.msra.mxu0 %v379
          %793 = vmatpush.msra.mxu0 %v376
          %794 = vmatpush.msra.mxu0 %v373
          %795 = vmatmul.f32.gmra.mxu0 %v726
          %v796 = vpop.f32.mrf.mxu0
          %v797 = vadd.f32 0.0, %v796
          %798 = vdwg.mxu0
          %v799 = vadd.f32 %v736, %v757
          %v800 = vxor.u32 %v799, 2147483648
          %v801 = vmul.f32 %v800, 1.442695
          %v802 = vpow.pop %v801
          %v803 = vadd.f32 %v802, 1.0
          %v804 = vrcp.pop %v803
          %v805 = vmul.f32 %v803, %v804
          %v806 = vsub.f32 1.0, %v805
          %v807 = vmul.f32 %v804, %v806
          %v808 = vadd.f32 %v804, %v807
          %vm809 = vweird.f32 %v803
          %vm810 = vweird.f32 %v804
          %vm811 = vmor %vm809, %vm810
          %v812 = vsel %vm811, %v804, %v808
          %v813 = vand.u32 2147483647, %v803
          %vm814 = vcmp.eq.f32.partialorder %v813, 8.507059e+37
          %v815 = vand.u32 %v803, 2147483648
          %v816 = vor.u32 1.1754944e-38, %v815
          %v817 = vsel %vm814, %v816, %v812
          %v818 = vmul.f32 1.0, %v817
          %v819 = vadd.f32 %v737, %v777
          %v820 = vxor.u32 %v819, 2147483648
          %v821 = vmul.f32 %v820, 1.442695
          %v822 = vpow.pop %v821
          %v823 = vadd.f32 %v822, 1.0
          %v824 = vrcp.pop %v823
          %v825 = vmul.f32 %v823, %v824
          %v826 = vsub.f32 1.0, %v825
          %v827 = vmul.f32 %v824, %v826
          %v828 = vadd.f32 %v824, %v827
          %vm829 = vweird.f32 %v823
          %vm830 = vweird.f32 %v824
          %vm831 = vmor %vm829, %vm830
          %v832 = vsel %vm831, %v824, %v828
          %v833 = vand.u32 2147483647, %v823
          %vm834 = vcmp.eq.f32.partialorder %v833, 8.507059e+37
          %v835 = vand.u32 %v823, 2147483648
          %v836 = vor.u32 1.1754944e-38, %v835
          %v837 = vsel %vm834, %v836, %v832
          %v838 = vmul.f32 1.0, %v837
          %v839 = vadd.f32 %v797, %v717
          %v840 = vmul.f32 %v818, %v839
          %v841 = vadd.f32 %v738, %v840
          %v842 = vtanh.pop %v841
          %v843 = vsub.f32 1.0, %v838
          %v844 = vmul.f32 %v843, %v842
          %v845 = vmul.f32 %v838, %v726
          %v846 = vadd.f32 %v844, %v845
          %vm847 = vcmp.gt.s32.totalorder %v421, 1
          %v848 = vmax.f32 %v734, %v846
          %v849 = vsel %vm847, 1, 0
          %850 = vset.pattern.permute.xlu0 0
          %851 = vperm.xlu0 %850, %v849
          %v852 = vpop.permute.xlu0 %851
          %vm853 = vcmp.eq.s32.totalorder %v852, 1
          %v854 = vsel %vm853, %v848, %v734
          %s855 = scalar_lea.vmem [#allocation2], 48
          %v856 = vld [vmem:[%s855] sm:$0xff]
          %v857 = vld [vmem:[%s855 + $0x8] sm:$0xff]
          %v858 = vld [vmem:[%s855 + $0x10] sm:$0xff]
          %859 = vmatpush.msra.mxu0 %v416
          %860 = vmatpush.msra.mxu0 %v413
          %861 = vmatpush.msra.mxu0 %v410
          %862 = vmatpush.msra.mxu0 %v407
          %863 = vmatpush.msra.mxu0 %v404
          %864 = vmatpush.msra.mxu0 %v401
          %865 = vmatpush.msra.mxu0 %v398
          %866 = vmatpush.msra.mxu0 %v395
          %867 = vmatpush.msra.mxu0 %v392
          %868 = vmatpush.msra.mxu0 %v389
          %869 = vmatpush.msra.mxu0 %v386
          %870 = vmatpush.msra.mxu0 %v383
          %871 = vmatpush.msra.mxu0 %v380
          %872 = vmatpush.msra.mxu0 %v377
          %873 = vmatpush.msra.mxu0 %v374
          %874 = vmatpush.msra.mxu0 %v371
          %875 = vmatmul.f32.gmra.mxu0 %v846
          %v876 = vpop.f32.mrf.mxu0
          %v877 = vadd.f32 0.0, %v876
          %878 = vdwg.mxu0
          %879 = vmatpush.msra.mxu0 %v417
          %880 = vmatpush.msra.mxu0 %v414
          %881 = vmatpush.msra.mxu0 %v411
          %882 = vmatpush.msra.mxu0 %v408
          %883 = vmatpush.msra.mxu0 %v405
          %884 = vmatpush.msra.mxu0 %v402
          %885 = vmatpush.msra.mxu0 %v399
          %886 = vmatpush.msra.mxu0 %v396
          %887 = vmatpush.msra.mxu0 %v393
          %888 = vmatpush.msra.mxu0 %v390
          %889 = vmatpush.msra.mxu0 %v387
          %890 = vmatpush.msra.mxu0 %v384
          %891 = vmatpush.msra.mxu0 %v381
          %892 = vmatpush.msra.mxu0 %v378
          %893 = vmatpush.msra.mxu0 %v375
          %894 = vmatpush.msra.mxu0 %v372
          %895 = vmatmul.f32.gmra.mxu0 %v846
          %v896 = vpop.f32.mrf.mxu0
          %v897 = vadd.f32 0.0, %v896
          %898 = vdwg.mxu0
          %899 = vmatpush.msra.mxu0 %v418
          %900 = vmatpush.msra.mxu0 %v415
          %901 = vmatpush.msra.mxu0 %v412
          %902 = vmatpush.msra.mxu0 %v409
          %903 = vmatpush.msra.mxu0 %v406
          %904 = vmatpush.msra.mxu0 %v403
          %905 = vmatpush.msra.mxu0 %v400
          %906 = vmatpush.msra.mxu0 %v397
          %907 = vmatpush.msra.mxu0 %v394
          %908 = vmatpush.msra.mxu0 %v391
          %909 = vmatpush.msra.mxu0 %v388
          %910 = vmatpush.msra.mxu0 %v385
          %911 = vmatpush.msra.mxu0 %v382
          %912 = vmatpush.msra.mxu0 %v379
          %913 = vmatpush.msra.mxu0 %v376
          %914 = vmatpush.msra.mxu0 %v373
          %915 = vmatmul.f32.gmra.mxu0 %v846
          %v916 = vpop.f32.mrf.mxu0
          %v917 = vadd.f32 0.0, %v916
          %918 = vdwg.mxu0
          %v919 = vadd.f32 %v856, %v877
          %v920 = vxor.u32 %v919, 2147483648
          %v921 = vmul.f32 %v920, 1.442695
          %v922 = vpow.pop %v921
          %v923 = vadd.f32 %v922, 1.0
          %v924 = vrcp.pop %v923
          %v925 = vmul.f32 %v923, %v924
          %v926 = vsub.f32 1.0, %v925
          %v927 = vmul.f32 %v924, %v926
          %v928 = vadd.f32 %v924, %v927
          %vm929 = vweird.f32 %v923
          %vm930 = vweird.f32 %v924
          %vm931 = vmor %vm929, %vm930
          %v932 = vsel %vm931, %v924, %v928
          %v933 = vand.u32 2147483647, %v923
          %vm934 = vcmp.eq.f32.partialorder %v933, 8.507059e+37
          %v935 = vand.u32 %v923, 2147483648
          %v936 = vor.u32 1.1754944e-38, %v935
          %v937 = vsel %vm934, %v936, %v932
          %v938 = vmul.f32 1.0, %v937
          %v939 = vadd.f32 %v857, %v897
          %v940 = vxor.u32 %v939, 2147483648
          %v941 = vmul.f32 %v940, 1.442695
          %v942 = vpow.pop %v941
          %v943 = vadd.f32 %v942, 1.0
          %v944 = vrcp.pop %v943
          %v945 = vmul.f32 %v943, %v944
          %v946 = vsub.f32 1.0, %v945
          %v947 = vmul.f32 %v944, %v946
          %v948 = vadd.f32 %v944, %v947
          %vm949 = vweird.f32 %v943
          %vm950 = vweird.f32 %v944
          %vm951 = vmor %vm949, %vm950
          %v952 = vsel %vm951, %v944, %v948
          %v953 = vand.u32 2147483647, %v943
          %vm954 = vcmp.eq.f32.partialorder %v953, 8.507059e+37
          %v955 = vand.u32 %v943, 2147483648
          %v956 = vor.u32 1.1754944e-38, %v955
          %v957 = vsel %vm954, %v956, %v952
          %v958 = vmul.f32 1.0, %v957
          %v959 = vadd.f32 %v917, %v717
          %v960 = vmul.f32 %v938, %v959
          %v961 = vadd.f32 %v858, %v960
          %v962 = vtanh.pop %v961
          %v963 = vsub.f32 1.0, %v958
          %v964 = vmul.f32 %v963, %v962
          %v965 = vmul.f32 %v958, %v846
          %v966 = vadd.f32 %v964, %v965
          %vm967 = vcmp.gt.s32.totalorder %v421, 2
          %v968 = vmax.f32 %v854, %v966
          %v969 = vsel %vm967, 1, 0
          %970 = vset.pattern.permute.xlu0 0
          %971 = vperm.xlu0 %970, %v969
          %v972 = vpop.permute.xlu0 %971
          %vm973 = vcmp.eq.s32.totalorder %v972, 1
          %v974 = vsel %vm973, %v968, %v854
          %s975 = scalar_lea.vmem [#allocation2], 72
          %v976 = vld [vmem:[%s975] sm:$0xff]
          %v977 = vld [vmem:[%s975 + $0x8] sm:$0xff]
          %v978 = vld [vmem:[%s975 + $0x10] sm:$0xff]
          %979 = vmatpush.msra.mxu0 %v416
          %980 = vmatpush.msra.mxu0 %v413
          %981 = vmatpush.msra.mxu0 %v410
          %982 = vmatpush.msra.mxu0 %v407
          %983 = vmatpush.msra.mxu0 %v404
          %984 = vmatpush.msra.mxu0 %v401
          %985 = vmatpush.msra.mxu0 %v398
          %986 = vmatpush.msra.mxu0 %v395
          %987 = vmatpush.msra.mxu0 %v392
          %988 = vmatpush.msra.mxu0 %v389
          %989 = vmatpush.msra.mxu0 %v386
          %990 = vmatpush.msra.mxu0 %v383
          %991 = vmatpush.msra.mxu0 %v380
          %992 = vmatpush.msra.mxu0 %v377
          %993 = vmatpush.msra.mxu0 %v374
          %994 = vmatpush.msra.mxu0 %v371
          %995 = vmatmul.f32.gmra.mxu0 %v966
          %v996 = vpop.f32.mrf.mxu0
          %v997 = vadd.f32 0.0, %v996
          %998 = vdwg.mxu0
          %999 = vmatpush.msra.mxu0 %v417
          %1000 = vmatpush.msra.mxu0 %v414
          %1001 = vmatpush.msra.mxu0 %v411
          %1002 = vmatpush.msra.mxu0 %v408
          %1003 = vmatpush.msra.mxu0 %v405
          %1004 = vmatpush.msra.mxu0 %v402
          %1005 = vmatpush.msra.mxu0 %v399
          %1006 = vmatpush.msra.mxu0 %v396
          %1007 = vmatpush.msra.mxu0 %v393
          %1008 = vmatpush.msra.mxu0 %v390
          %1009 = vmatpush.msra.mxu0 %v387
          %1010 = vmatpush.msra.mxu0 %v384
          %1011 = vmatpush.msra.mxu0 %v381
          %1012 = vmatpush.msra.mxu0 %v378
          %1013 = vmatpush.msra.mxu0 %v375
          %1014 = vmatpush.msra.mxu0 %v372
          %1015 = vmatmul.f32.gmra.mxu0 %v966
          %v1016 = vpop.f32.mrf.mxu0
          %v1017 = vadd.f32 0.0, %v1016
          %1018 = vdwg.mxu0
          %1019 = vmatpush.msra.mxu0 %v418
          %1020 = vmatpush.msra.mxu0 %v415
          %1021 = vmatpush.msra.mxu0 %v412
          %1022 = vmatpush.msra.mxu0 %v409
          %1023 = vmatpush.msra.mxu0 %v406
          %1024 = vmatpush.msra.mxu0 %v403
          %1025 = vmatpush.msra.mxu0 %v400
          %1026 = vmatpush.msra.mxu0 %v397
          %1027 = vmatpush.msra.mxu0 %v394
          %1028 = vmatpush.msra.mxu0 %v391
          %1029 = vmatpush.msra.mxu0 %v388
          %1030 = vmatpush.msra.mxu0 %v385
          %1031 = vmatpush.msra.mxu0 %v382
          %1032 = vmatpush.msra.mxu0 %v379
          %1033 = vmatpush.msra.mxu0 %v376
          %1034 = vmatpush.msra.mxu0 %v373
          %1035 = vmatmul.f32.gmra.mxu0 %v966
          %v1036 = vpop.f32.mrf.mxu0
          %v1037 = vadd.f32 0.0, %v1036
          %1038 = vdwg.mxu0
          %v1039 = vadd.f32 %v976, %v997
          %v1040 = vxor.u32 %v1039, 2147483648
          %v1041 = vmul.f32 %v1040, 1.442695
          %v1042 = vpow.pop %v1041
          %v1043 = vadd.f32 %v1042, 1.0
          %v1044 = vrcp.pop %v1043
          %v1045 = vmul.f32 %v1043, %v1044
          %v1046 = vsub.f32 1.0, %v1045
          %v1047 = vmul.f32 %v1044, %v1046
          %v1048 = vadd.f32 %v1044, %v1047
          %vm1049 = vweird.f32 %v1043
          %vm1050 = vweird.f32 %v1044
          %vm1051 = vmor %vm1049, %vm1050
          %v1052 = vsel %vm1051, %v1044, %v1048
          %v1053 = vand.u32 2147483647, %v1043
          %vm1054 = vcmp.eq.f32.partialorder %v1053, 8.507059e+37
          %v1055 = vand.u32 %v1043, 2147483648
          %v1056 = vor.u32 1.1754944e-38, %v1055
          %v1057 = vsel %vm1054, %v1056, %v1052
          %v1058 = vmul.f32 1.0, %v1057
          %v1059 = vadd.f32 %v977, %v1017
          %v1060 = vxor.u32 %v1059, 2147483648
          %v1061 = vmul.f32 %v1060, 1.442695
          %v1062 = vpow.pop %v1061
          %v1063 = vadd.f32 %v1062, 1.0
          %v1064 = vrcp.pop %v1063
          %v1065 = vmul.f32 %v1063, %v1064
          %v1066 = vsub.f32 1.0, %v1065
          %v1067 = vmul.f32 %v1064, %v1066
          %v1068 = vadd.f32 %v1064, %v1067
          %vm1069 = vweird.f32 %v1063
          %vm1070 = vweird.f32 %v1064
          %vm1071 = vmor %vm1069, %vm1070
          %v1072 = vsel %vm1071, %v1064, %v1068
          %v1073 = vand.u32 2147483647, %v1063
          %vm1074 = vcmp.eq.f32.partialorder %v1073, 8.507059e+37
          %v1075 = vand.u32 %v1063, 2147483648
          %v1076 = vor.u32 1.1754944e-38, %v1075
          %v1077 = vsel %vm1074, %v1076, %v1072
          %v1078 = vmul.f32 1.0, %v1077
          %v1079 = vadd.f32 %v1037, %v717
          %v1080 = vmul.f32 %v1058, %v1079
          %v1081 = vadd.f32 %v978, %v1080
          %v1082 = vtanh.pop %v1081
          %v1083 = vsub.f32 1.0, %v1078
          %v1084 = vmul.f32 %v1083, %v1082
          %v1085 = vmul.f32 %v1078, %v966
          %v1086 = vadd.f32 %v1084, %v1085
          %vm1087 = vcmp.gt.s32.totalorder %v421, 3
          %v1088 = vmax.f32 %v974, %v1086
          %v1089 = vsel %vm1087, 1, 0
          %1090 = vset.pattern.permute.xlu0 0
          %1091 = vperm.xlu0 %1090, %v1089
          %v1092 = vpop.permute.xlu0 %1091
          %vm1093 = vcmp.eq.s32.totalorder %v1092, 1
          %v1094 = vsel %vm1093, %v1088, %v974
          %s1095 = scalar_lea.vmem [#allocation2], 96
          %v1096 = vld [vmem:[%s1095] sm:$0xff]
          %v1097 = vld [vmem:[%s1095 + $0x8] sm:$0xff]
          %v1098 = vld [vmem:[%s1095 + $0x10] sm:$0xff]
          %1099 = vmatpush.msra.mxu0 %v416
          %1100 = vmatpush.msra.mxu0 %v413
          %1101 = vmatpush.msra.mxu0 %v410
          %1102 = vmatpush.msra.mxu0 %v407
          %1103 = vmatpush.msra.mxu0 %v404
          %1104 = vmatpush.msra.mxu0 %v401
          %1105 = vmatpush.msra.mxu0 %v398
          %1106 = vmatpush.msra.mxu0 %v395
          %1107 = vmatpush.msra.mxu0 %v392
          %1108 = vmatpush.msra.mxu0 %v389
          %1109 = vmatpush.msra.mxu0 %v386
          %1110 = vmatpush.msra.mxu0 %v383
          %1111 = vmatpush.msra.mxu0 %v380
          %1112 = vmatpush.msra.mxu0 %v377
          %1113 = vmatpush.msra.mxu0 %v374
          %1114 = vmatpush.msra.mxu0 %v371
          %1115 = vmatmul.f32.gmra.mxu0 %v1086
          %v1116 = vpop.f32.mrf.mxu0
          %v1117 = vadd.f32 0.0, %v1116
          %1118 = vdwg.mxu0
          %1119 = vmatpush.msra.mxu0 %v417
          %1120 = vmatpush.msra.mxu0 %v414
          %1121 = vmatpush.msra.mxu0 %v411
          %1122 = vmatpush.msra.mxu0 %v408
          %1123 = vmatpush.msra.mxu0 %v405
          %1124 = vmatpush.msra.mxu0 %v402
          %1125 = vmatpush.msra.mxu0 %v399
          %1126 = vmatpush.msra.mxu0 %v396
          %1127 = vmatpush.msra.mxu0 %v393
          %1128 = vmatpush.msra.mxu0 %v390
          %1129 = vmatpush.msra.mxu0 %v387
          %1130 = vmatpush.msra.mxu0 %v384
          %1131 = vmatpush.msra.mxu0 %v381
          %1132 = vmatpush.msra.mxu0 %v378
          %1133 = vmatpush.msra.mxu0 %v375
          %1134 = vmatpush.msra.mxu0 %v372
          %1135 = vmatmul.f32.gmra.mxu0 %v1086
          %v1136 = vpop.f32.mrf.mxu0
          %v1137 = vadd.f32 0.0, %v1136
          %1138 = vdwg.mxu0
          %1139 = vmatpush.msra.mxu0 %v418
          %1140 = vmatpush.msra.mxu0 %v415
          %1141 = vmatpush.msra.mxu0 %v412
          %1142 = vmatpush.msra.mxu0 %v409
          %1143 = vmatpush.msra.mxu0 %v406
          %1144 = vmatpush.msra.mxu0 %v403
          %1145 = vmatpush.msra.mxu0 %v400
          %1146 = vmatpush.msra.mxu0 %v397
          %1147 = vmatpush.msra.mxu0 %v394
          %1148 = vmatpush.msra.mxu0 %v391
          %1149 = vmatpush.msra.mxu0 %v388
          %1150 = vmatpush.msra.mxu0 %v385
          %1151 = vmatpush.msra.mxu0 %v382
          %1152 = vmatpush.msra.mxu0 %v379
          %1153 = vmatpush.msra.mxu0 %v376
          %1154 = vmatpush.msra.mxu0 %v373
          %1155 = vmatmul.f32.gmra.mxu0 %v1086
          %v1156 = vpop.f32.mrf.mxu0
          %v1157 = vadd.f32 0.0, %v1156
          %1158 = vdwg.mxu0
          %v1159 = vadd.f32 %v1096, %v1117
          %v1160 = vxor.u32 %v1159, 2147483648
          %v1161 = vmul.f32 %v1160, 1.442695
          %v1162 = vpow.pop %v1161
          %v1163 = vadd.f32 %v1162, 1.0
          %v1164 = vrcp.pop %v1163
          %v1165 = vmul.f32 %v1163, %v1164
          %v1166 = vsub.f32 1.0, %v1165
          %v1167 = vmul.f32 %v1164, %v1166
          %v1168 = vadd.f32 %v1164, %v1167
          %vm1169 = vweird.f32 %v1163
          %vm1170 = vweird.f32 %v1164
          %vm1171 = vmor %vm1169, %vm1170
          %v1172 = vsel %vm1171, %v1164, %v1168
          %v1173 = vand.u32 2147483647, %v1163
          %vm1174 = vcmp.eq.f32.partialorder %v1173, 8.507059e+37
          %v1175 = vand.u32 %v1163, 2147483648
          %v1176 = vor.u32 1.1754944e-38, %v1175
          %v1177 = vsel %vm1174, %v1176, %v1172
          %v1178 = vmul.f32 1.0, %v1177
          %v1179 = vadd.f32 %v1097, %v1137
          %v1180 = vxor.u32 %v1179, 2147483648
          %v1181 = vmul.f32 %v1180, 1.442695
          %v1182 = vpow.pop %v1181
          %v1183 = vadd.f32 %v1182, 1.0
          %v1184 = vrcp.pop %v1183
          %v1185 = vmul.f32 %v1183, %v1184
          %v1186 = vsub.f32 1.0, %v1185
          %v1187 = vmul.f32 %v1184, %v1186
          %v1188 = vadd.f32 %v1184, %v1187
          %vm1189 = vweird.f32 %v1183
          %vm1190 = vweird.f32 %v1184
          %vm1191 = vmor %vm1189, %vm1190
          %v1192 = vsel %vm1191, %v1184, %v1188
          %v1193 = vand.u32 2147483647, %v1183
          %vm1194 = vcmp.eq.f32.partialorder %v1193, 8.507059e+37
          %v1195 = vand.u32 %v1183, 2147483648
          %v1196 = vor.u32 1.1754944e-38, %v1195
          %v1197 = vsel %vm1194, %v1196, %v1192
          %v1198 = vmul.f32 1.0, %v1197
          %v1199 = vadd.f32 %v1157, %v717
          %v1200 = vmul.f32 %v1178, %v1199
          %v1201 = vadd.f32 %v1098, %v1200
          %v1202 = vtanh.pop %v1201
          %v1203 = vsub.f32 1.0, %v1198
          %v1204 = vmul.f32 %v1203, %v1202
          %v1205 = vmul.f32 %v1198, %v1086
          %v1206 = vadd.f32 %v1204, %v1205
          %vm1207 = vcmp.gt.s32.totalorder %v421, 4
          %v1208 = vmax.f32 %v1094, %v1206
          %v1209 = vsel %vm1207, 1, 0
          %1210 = vset.pattern.permute.xlu0 0
          %1211 = vperm.xlu0 %1210, %v1209
          %v1212 = vpop.permute.xlu0 %1211
          %vm1213 = vcmp.eq.s32.totalorder %v1212, 1
          %v1214 = vsel %vm1213, %v1208, %v1094
          %s1215 = scalar_lea.vmem [#allocation2], 120
          %v1216 = vld [vmem:[%s1215] sm:$0xff]
          %v1217 = vld [vmem:[%s1215 + $0x8] sm:$0xff]
          %v1218 = vld [vmem:[%s1215 + $0x10] sm:$0xff]
          %1219 = vmatpush.msra.mxu0 %v416
          %1220 = vmatpush.msra.mxu0 %v413
          %1221 = vmatpush.msra.mxu0 %v410
          %1222 = vmatpush.msra.mxu0 %v407
          %1223 = vmatpush.msra.mxu0 %v404
          %1224 = vmatpush.msra.mxu0 %v401
          %1225 = vmatpush.msra.mxu0 %v398
          %1226 = vmatpush.msra.mxu0 %v395
          %1227 = vmatpush.msra.mxu0 %v392
          %1228 = vmatpush.msra.mxu0 %v389
          %1229 = vmatpush.msra.mxu0 %v386
          %1230 = vmatpush.msra.mxu0 %v383
          %1231 = vmatpush.msra.mxu0 %v380
          %1232 = vmatpush.msra.mxu0 %v377
          %1233 = vmatpush.msra.mxu0 %v374
          %1234 = vmatpush.msra.mxu0 %v371
          %1235 = vmatmul.f32.gmra.mxu0 %v1206
          %v1236 = vpop.f32.mrf.mxu0
          %v1237 = vadd.f32 0.0, %v1236
          %1238 = vdwg.mxu0
          %1239 = vmatpush.msra.mxu0 %v417
          %1240 = vmatpush.msra.mxu0 %v414
          %1241 = vmatpush.msra.mxu0 %v411
          %1242 = vmatpush.msra.mxu0 %v408
          %1243 = vmatpush.msra.mxu0 %v405
          %1244 = vmatpush.msra.mxu0 %v402
          %1245 = vmatpush.msra.mxu0 %v399
          %1246 = vmatpush.msra.mxu0 %v396
          %1247 = vmatpush.msra.mxu0 %v393
          %1248 = vmatpush.msra.mxu0 %v390
          %1249 = vmatpush.msra.mxu0 %v387
          %1250 = vmatpush.msra.mxu0 %v384
          %1251 = vmatpush.msra.mxu0 %v381
          %1252 = vmatpush.msra.mxu0 %v378
          %1253 = vmatpush.msra.mxu0 %v375
          %1254 = vmatpush.msra.mxu0 %v372
          %1255 = vmatmul.f32.gmra.mxu0 %v1206
          %v1256 = vpop.f32.mrf.mxu0
          %v1257 = vadd.f32 0.0, %v1256
          %1258 = vdwg.mxu0
          %1259 = vmatpush.msra.mxu0 %v418
          %1260 = vmatpush.msra.mxu0 %v415
          %1261 = vmatpush.msra.mxu0 %v412
          %1262 = vmatpush.msra.mxu0 %v409
          %1263 = vmatpush.msra.mxu0 %v406
          %1264 = vmatpush.msra.mxu0 %v403
          %1265 = vmatpush.msra.mxu0 %v400
          %1266 = vmatpush.msra.mxu0 %v397
          %1267 = vmatpush.msra.mxu0 %v394
          %1268 = vmatpush.msra.mxu0 %v391
          %1269 = vmatpush.msra.mxu0 %v388
          %1270 = vmatpush.msra.mxu0 %v385
          %1271 = vmatpush.msra.mxu0 %v382
          %1272 = vmatpush.msra.mxu0 %v379
          %1273 = vmatpush.msra.mxu0 %v376
          %1274 = vmatpush.msra.mxu0 %v373
          %1275 = vmatmul.f32.gmra.mxu0 %v1206
          %v1276 = vpop.f32.mrf.mxu0
          %v1277 = vadd.f32 0.0, %v1276
          %1278 = vdwg.mxu0
          %v1279 = vadd.f32 %v1216, %v1237
          %v1280 = vxor.u32 %v1279, 2147483648
          %v1281 = vmul.f32 %v1280, 1.442695
          %v1282 = vpow.pop %v1281
          %v1283 = vadd.f32 %v1282, 1.0
          %v1284 = vrcp.pop %v1283
          %v1285 = vmul.f32 %v1283, %v1284
          %v1286 = vsub.f32 1.0, %v1285
          %v1287 = vmul.f32 %v1284, %v1286
          %v1288 = vadd.f32 %v1284, %v1287
          %vm1289 = vweird.f32 %v1283
          %vm1290 = vweird.f32 %v1284
          %vm1291 = vmor %vm1289, %vm1290
          %v1292 = vsel %vm1291, %v1284, %v1288
          %v1293 = vand.u32 2147483647, %v1283
          %vm1294 = vcmp.eq.f32.partialorder %v1293, 8.507059e+37
          %v1295 = vand.u32 %v1283, 2147483648
          %v1296 = vor.u32 1.1754944e-38, %v1295
          %v1297 = vsel %vm1294, %v1296, %v1292
          %v1298 = vmul.f32 1.0, %v1297
          %v1299 = vadd.f32 %v1217, %v1257
          %v1300 = vxor.u32 %v1299, 2147483648
          %v1301 = vmul.f32 %v1300, 1.442695
          %v1302 = vpow.pop %v1301
          %v1303 = vadd.f32 %v1302, 1.0
          %v1304 = vrcp.pop %v1303
          %v1305 = vmul.f32 %v1303, %v1304
          %v1306 = vsub.f32 1.0, %v1305
          %v1307 = vmul.f32 %v1304, %v1306
          %v1308 = vadd.f32 %v1304, %v1307
          %vm1309 = vweird.f32 %v1303
          %vm1310 = vweird.f32 %v1304
          %vm1311 = vmor %vm1309, %vm1310
          %v1312 = vsel %vm1311, %v1304, %v1308
          %v1313 = vand.u32 2147483647, %v1303
          %vm1314 = vcmp.eq.f32.partialorder %v1313, 8.507059e+37
          %v1315 = vand.u32 %v1303, 2147483648
          %v1316 = vor.u32 1.1754944e-38, %v1315
          %v1317 = vsel %vm1314, %v1316, %v1312
          %v1318 = vmul.f32 1.0, %v1317
          %v1319 = vadd.f32 %v1277, %v717
          %v1320 = vmul.f32 %v1298, %v1319
          %v1321 = vadd.f32 %v1218, %v1320
          %v1322 = vtanh.pop %v1321
          %v1323 = vsub.f32 1.0, %v1318
          %v1324 = vmul.f32 %v1323, %v1322
          %v1325 = vmul.f32 %v1318, %v1206
          %v1326 = vadd.f32 %v1324, %v1325
          %vm1327 = vcmp.gt.s32.totalorder %v421, 5
          %v1328 = vmax.f32 %v1214, %v1326
          %v1329 = vsel %vm1327, 1, 0
          %1330 = vset.pattern.permute.xlu0 0
          %1331 = vperm.xlu0 %1330, %v1329
          %v1332 = vpop.permute.xlu0 %1331
          %vm1333 = vcmp.eq.s32.totalorder %v1332, 1
          %v1334 = vsel %vm1333, %v1328, %v1214
          %s1335 = scalar_lea.vmem [#allocation2], 144
          %v1336 = vld [vmem:[%s1335] sm:$0xff]
          %v1337 = vld [vmem:[%s1335 + $0x8] sm:$0xff]
          %v1338 = vld [vmem:[%s1335 + $0x10] sm:$0xff]
          %1339 = vmatpush.msra.mxu0 %v416
          %1340 = vmatpush.msra.mxu0 %v413
          %1341 = vmatpush.msra.mxu0 %v410
          %1342 = vmatpush.msra.mxu0 %v407
          %1343 = vmatpush.msra.mxu0 %v404
          %1344 = vmatpush.msra.mxu0 %v401
          %1345 = vmatpush.msra.mxu0 %v398
          %1346 = vmatpush.msra.mxu0 %v395
          %1347 = vmatpush.msra.mxu0 %v392
          %1348 = vmatpush.msra.mxu0 %v389
          %1349 = vmatpush.msra.mxu0 %v386
          %1350 = vmatpush.msra.mxu0 %v383
          %1351 = vmatpush.msra.mxu0 %v380
          %1352 = vmatpush.msra.mxu0 %v377
          %1353 = vmatpush.msra.mxu0 %v374
          %1354 = vmatpush.msra.mxu0 %v371
          %1355 = vmatmul.f32.gmra.mxu0 %v1326
          %v1356 = vpop.f32.mrf.mxu0
          %v1357 = vadd.f32 0.0, %v1356
          %1358 = vdwg.mxu0
          %1359 = vmatpush.msra.mxu0 %v417
          %1360 = vmatpush.msra.mxu0 %v414
          %1361 = vmatpush.msra.mxu0 %v411
          %1362 = vmatpush.msra.mxu0 %v408
          %1363 = vmatpush.msra.mxu0 %v405
          %1364 = vmatpush.msra.mxu0 %v402
          %1365 = vmatpush.msra.mxu0 %v399
          %1366 = vmatpush.msra.mxu0 %v396
          %1367 = vmatpush.msra.mxu0 %v393
          %1368 = vmatpush.msra.mxu0 %v390
          %1369 = vmatpush.msra.mxu0 %v387
          %1370 = vmatpush.msra.mxu0 %v384
          %1371 = vmatpush.msra.mxu0 %v381
          %1372 = vmatpush.msra.mxu0 %v378
          %1373 = vmatpush.msra.mxu0 %v375
          %1374 = vmatpush.msra.mxu0 %v372
          %1375 = vmatmul.f32.gmra.mxu0 %v1326
          %v1376 = vpop.f32.mrf.mxu0
          %v1377 = vadd.f32 0.0, %v1376
          %1378 = vdwg.mxu0
          %1379 = vmatpush.msra.mxu0 %v418
          %1380 = vmatpush.msra.mxu0 %v415
          %1381 = vmatpush.msra.mxu0 %v412
          %1382 = vmatpush.msra.mxu0 %v409
          %1383 = vmatpush.msra.mxu0 %v406
          %1384 = vmatpush.msra.mxu0 %v403
          %1385 = vmatpush.msra.mxu0 %v400
          %1386 = vmatpush.msra.mxu0 %v397
          %1387 = vmatpush.msra.mxu0 %v394
          %1388 = vmatpush.msra.mxu0 %v391
          %1389 = vmatpush.msra.mxu0 %v388
          %1390 = vmatpush.msra.mxu0 %v385
          %1391 = vmatpush.msra.mxu0 %v382
          %1392 = vmatpush.msra.mxu0 %v379
          %1393 = vmatpush.msra.mxu0 %v376
          %1394 = vmatpush.msra.mxu0 %v373
          %1395 = vmatmul.f32.gmra.mxu0 %v1326
          %v1396 = vpop.f32.mrf.mxu0
          %v1397 = vadd.f32 0.0, %v1396
          %1398 = vdwg.mxu0
          %v1399 = vadd.f32 %v1336, %v1357
          %v1400 = vxor.u32 %v1399, 2147483648
          %v1401 = vmul.f32 %v1400, 1.442695
          %v1402 = vpow.pop %v1401
          %v1403 = vadd.f32 %v1402, 1.0
          %v1404 = vrcp.pop %v1403
          %v1405 = vmul.f32 %v1403, %v1404
          %v1406 = vsub.f32 1.0, %v1405
          %v1407 = vmul.f32 %v1404, %v1406
          %v1408 = vadd.f32 %v1404, %v1407
          %vm1409 = vweird.f32 %v1403
          %vm1410 = vweird.f32 %v1404
          %vm1411 = vmor %vm1409, %vm1410
          %v1412 = vsel %vm1411, %v1404, %v1408
          %v1413 = vand.u32 2147483647, %v1403
          %vm1414 = vcmp.eq.f32.partialorder %v1413, 8.507059e+37
          %v1415 = vand.u32 %v1403, 2147483648
          %v1416 = vor.u32 1.1754944e-38, %v1415
          %v1417 = vsel %vm1414, %v1416, %v1412
          %v1418 = vmul.f32 1.0, %v1417
          %v1419 = vadd.f32 %v1337, %v1377
          %v1420 = vxor.u32 %v1419, 2147483648
          %v1421 = vmul.f32 %v1420, 1.442695
          %v1422 = vpow.pop %v1421
          %v1423 = vadd.f32 %v1422, 1.0
          %v1424 = vrcp.pop %v1423
          %v1425 = vmul.f32 %v1423, %v1424
          %v1426 = vsub.f32 1.0, %v1425
          %v1427 = vmul.f32 %v1424, %v1426
          %v1428 = vadd.f32 %v1424, %v1427
          %vm1429 = vweird.f32 %v1423
          %vm1430 = vweird.f32 %v1424
          %vm1431 = vmor %vm1429, %vm1430
          %v1432 = vsel %vm1431, %v1424, %v1428
          %v1433 = vand.u32 2147483647, %v1423
          %vm1434 = vcmp.eq.f32.partialorder %v1433, 8.507059e+37
          %v1435 = vand.u32 %v1423, 2147483648
          %v1436 = vor.u32 1.1754944e-38, %v1435
          %v1437 = vsel %vm1434, %v1436, %v1432
          %v1438 = vmul.f32 1.0, %v1437
          %v1439 = vadd.f32 %v1397, %v717
          %v1440 = vmul.f32 %v1418, %v1439
          %v1441 = vadd.f32 %v1338, %v1440
          %v1442 = vtanh.pop %v1441
          %v1443 = vsub.f32 1.0, %v1438
          %v1444 = vmul.f32 %v1443, %v1442
          %v1445 = vmul.f32 %v1438, %v1326
          %v1446 = vadd.f32 %v1444, %v1445
          %vm1447 = vcmp.gt.s32.totalorder %v421, 6
          %v1448 = vmax.f32 %v1334, %v1446
          %v1449 = vsel %vm1447, 1, 0
          %1450 = vset.pattern.permute.xlu0 0
          %1451 = vperm.xlu0 %1450, %v1449
          %v1452 = vpop.permute.xlu0 %1451
          %vm1453 = vcmp.eq.s32.totalorder %v1452, 1
          %v1454 = vsel %vm1453, %v1448, %v1334
          %s1455 = scalar_lea.vmem [#allocation2], 168
          %v1456 = vld [vmem:[%s1455] sm:$0xff]
          %v1457 = vld [vmem:[%s1455 + $0x8] sm:$0xff]
          %v1458 = vld [vmem:[%s1455 + $0x10] sm:$0xff]
          %1459 = vmatpush.msra.mxu0 %v416
          %1460 = vmatpush.msra.mxu0 %v413
          %1461 = vmatpush.msra.mxu0 %v410
          %1462 = vmatpush.msra.mxu0 %v407
          %1463 = vmatpush.msra.mxu0 %v404
          %1464 = vmatpush.msra.mxu0 %v401
          %1465 = vmatpush.msra.mxu0 %v398
          %1466 = vmatpush.msra.mxu0 %v395
          %1467 = vmatpush.msra.mxu0 %v392
          %1468 = vmatpush.msra.mxu0 %v389
          %1469 = vmatpush.msra.mxu0 %v386
          %1470 = vmatpush.msra.mxu0 %v383
          %1471 = vmatpush.msra.mxu0 %v380
          %1472 = vmatpush.msra.mxu0 %v377
          %1473 = vmatpush.msra.mxu0 %v374
          %1474 = vmatpush.msra.mxu0 %v371
          %1475 = vmatmul.f32.gmra.mxu0 %v1446
          %v1476 = vpop.f32.mrf.mxu0
          %v1477 = vadd.f32 0.0, %v1476
          %1478 = vdwg.mxu0
          %1479 = vmatpush.msra.mxu0 %v417
          %1480 = vmatpush.msra.mxu0 %v414
          %1481 = vmatpush.msra.mxu0 %v411
          %1482 = vmatpush.msra.mxu0 %v408
          %1483 = vmatpush.msra.mxu0 %v405
          %1484 = vmatpush.msra.mxu0 %v402
          %1485 = vmatpush.msra.mxu0 %v399
          %1486 = vmatpush.msra.mxu0 %v396
          %1487 = vmatpush.msra.mxu0 %v393
          %1488 = vmatpush.msra.mxu0 %v390
          %1489 = vmatpush.msra.mxu0 %v387
          %1490 = vmatpush.msra.mxu0 %v384
          %1491 = vmatpush.msra.mxu0 %v381
          %1492 = vmatpush.msra.mxu0 %v378
          %1493 = vmatpush.msra.mxu0 %v375
          %1494 = vmatpush.msra.mxu0 %v372
          %1495 = vmatmul.f32.gmra.mxu0 %v1446
          %v1496 = vpop.f32.mrf.mxu0
          %v1497 = vadd.f32 0.0, %v1496
          %1498 = vdwg.mxu0
          %1499 = vmatpush.msra.mxu0 %v418
          %1500 = vmatpush.msra.mxu0 %v415
          %1501 = vmatpush.msra.mxu0 %v412
          %1502 = vmatpush.msra.mxu0 %v409
          %1503 = vmatpush.msra.mxu0 %v406
          %1504 = vmatpush.msra.mxu0 %v403
          %1505 = vmatpush.msra.mxu0 %v400
          %1506 = vmatpush.msra.mxu0 %v397
          %1507 = vmatpush.msra.mxu0 %v394
          %1508 = vmatpush.msra.mxu0 %v391
          %1509 = vmatpush.msra.mxu0 %v388
          %1510 = vmatpush.msra.mxu0 %v385
          %1511 = vmatpush.msra.mxu0 %v382
          %1512 = vmatpush.msra.mxu0 %v379
          %1513 = vmatpush.msra.mxu0 %v376
          %1514 = vmatpush.msra.mxu0 %v373
          %1515 = vmatmul.f32.gmra.mxu0 %v1446
          %v1516 = vpop.f32.mrf.mxu0
          %v1517 = vadd.f32 0.0, %v1516
          %1518 = vdwg.mxu0
          %v1519 = vadd.f32 %v1456, %v1477
          %v1520 = vxor.u32 %v1519, 2147483648
          %v1521 = vmul.f32 %v1520, 1.442695
          %v1522 = vpow.pop %v1521
          %v1523 = vadd.f32 %v1522, 1.0
          %v1524 = vrcp.pop %v1523
          %v1525 = vmul.f32 %v1523, %v1524
          %v1526 = vsub.f32 1.0, %v1525
          %v1527 = vmul.f32 %v1524, %v1526
          %v1528 = vadd.f32 %v1524, %v1527
          %vm1529 = vweird.f32 %v1523
          %vm1530 = vweird.f32 %v1524
          %vm1531 = vmor %vm1529, %vm1530
          %v1532 = vsel %vm1531, %v1524, %v1528
          %v1533 = vand.u32 2147483647, %v1523
          %vm1534 = vcmp.eq.f32.partialorder %v1533, 8.507059e+37
          %v1535 = vand.u32 %v1523, 2147483648
          %v1536 = vor.u32 1.1754944e-38, %v1535
          %v1537 = vsel %vm1534, %v1536, %v1532
          %v1538 = vmul.f32 1.0, %v1537
          %v1539 = vadd.f32 %v1457, %v1497
          %v1540 = vxor.u32 %v1539, 2147483648
          %v1541 = vmul.f32 %v1540, 1.442695
          %v1542 = vpow.pop %v1541
          %v1543 = vadd.f32 %v1542, 1.0
          %v1544 = vrcp.pop %v1543
          %v1545 = vmul.f32 %v1543, %v1544
          %v1546 = vsub.f32 1.0, %v1545
          %v1547 = vmul.f32 %v1544, %v1546
          %v1548 = vadd.f32 %v1544, %v1547
          %vm1549 = vweird.f32 %v1543
          %vm1550 = vweird.f32 %v1544
          %vm1551 = vmor %vm1549, %vm1550
          %v1552 = vsel %vm1551, %v1544, %v1548
          %v1553 = vand.u32 2147483647, %v1543
          %vm1554 = vcmp.eq.f32.partialorder %v1553, 8.507059e+37
          %v1555 = vand.u32 %v1543, 2147483648
          %v1556 = vor.u32 1.1754944e-38, %v1555
          %v1557 = vsel %vm1554, %v1556, %v1552
          %v1558 = vmul.f32 1.0, %v1557
          %v1559 = vadd.f32 %v1517, %v717
          %v1560 = vmul.f32 %v1538, %v1559
          %v1561 = vadd.f32 %v1458, %v1560
          %v1562 = vtanh.pop %v1561
          %v1563 = vsub.f32 1.0, %v1558
          %v1564 = vmul.f32 %v1563, %v1562
          %v1565 = vmul.f32 %v1558, %v1446
          %v1566 = vadd.f32 %v1564, %v1565
          %vm1567 = vcmp.gt.s32.totalorder %v421, 7
          %v1568 = vmax.f32 %v1454, %v1566
          %v1569 = vsel %vm1567, 1, 0
          %1570 = vset.pattern.permute.xlu0 0
          %1571 = vperm.xlu0 %1570, %v1569
          %v1572 = vpop.permute.xlu0 %1571
          %vm1573 = vcmp.eq.s32.totalorder %v1572, 1
          %v1574 = vsel %vm1573, %v1568, %v1454
          %1575 = vst [vmem:[%s351] sm:$0xff] %v1574
        $region60: #{tpu_custom_call.1} parent=43 // pred_fallthru
          _
        %p1576 = scmp.eq.s32.totalorder %s24, 1
        // Predicated region
        $region61: #{tpu_custom_call.1} parent=43 // pred_check
          %p1577 = pneg %p1576
        $region62: #{tpu_custom_call.1} parent=43 // pred_check_branch
          %1579 = sbr.rel (%p1577) target = $region64
        $region63: #{tpu_custom_call.1} parent=43 // pred_region
          %s1580 = scalar_lea.vmem [#allocation2], 168
          %v1581 = vld [vmem:[%s1580] sm:$0xff]
          %v1582 = vld [vmem:[%s1580 + $0x8] sm:$0xff]
          %v1583 = vld [vmem:[%s1580 + $0x10] sm:$0xff]
          %1584 = vmatpush.msra.mxu0 %v416
          %1585 = vmatpush.msra.mxu0 %v413
          %1586 = vmatpush.msra.mxu0 %v410
          %1587 = vmatpush.msra.mxu0 %v407
          %1588 = vmatpush.msra.mxu0 %v404
          %1589 = vmatpush.msra.mxu0 %v401
          %1590 = vmatpush.msra.mxu0 %v398
          %1591 = vmatpush.msra.mxu0 %v395
          %1592 = vmatpush.msra.mxu0 %v392
          %1593 = vmatpush.msra.mxu0 %v389
          %1594 = vmatpush.msra.mxu0 %v386
          %1595 = vmatpush.msra.mxu0 %v383
          %1596 = vmatpush.msra.mxu0 %v380
          %1597 = vmatpush.msra.mxu0 %v377
          %1598 = vmatpush.msra.mxu0 %v374
          %1599 = vmatpush.msra.mxu0 %v371
          %1600 = vmatmul.f32.gmra.mxu0 0.0
          %v1601 = vpop.f32.mrf.mxu0
          %v1602 = vadd.f32 0.0, %v1601
          %1603 = vdwg.mxu0
          %1604 = vmatpush.msra.mxu0 %v417
          %1605 = vmatpush.msra.mxu0 %v414
          %1606 = vmatpush.msra.mxu0 %v411
          %1607 = vmatpush.msra.mxu0 %v408
          %1608 = vmatpush.msra.mxu0 %v405
          %1609 = vmatpush.msra.mxu0 %v402
          %1610 = vmatpush.msra.mxu0 %v399
          %1611 = vmatpush.msra.mxu0 %v396
          %1612 = vmatpush.msra.mxu0 %v393
          %1613 = vmatpush.msra.mxu0 %v390
          %1614 = vmatpush.msra.mxu0 %v387
          %1615 = vmatpush.msra.mxu0 %v384
          %1616 = vmatpush.msra.mxu0 %v381
          %1617 = vmatpush.msra.mxu0 %v378
          %1618 = vmatpush.msra.mxu0 %v375
          %1619 = vmatpush.msra.mxu0 %v372
          %1620 = vmatmul.f32.gmra.mxu0 0.0
          %v1621 = vpop.f32.mrf.mxu0
          %v1622 = vadd.f32 0.0, %v1621
          %1623 = vdwg.mxu0
          %1624 = vmatpush.msra.mxu0 %v418
          %1625 = vmatpush.msra.mxu0 %v415
          %1626 = vmatpush.msra.mxu0 %v412
          %1627 = vmatpush.msra.mxu0 %v409
          %1628 = vmatpush.msra.mxu0 %v406
          %1629 = vmatpush.msra.mxu0 %v403
          %1630 = vmatpush.msra.mxu0 %v400
          %1631 = vmatpush.msra.mxu0 %v397
          %1632 = vmatpush.msra.mxu0 %v394
          %1633 = vmatpush.msra.mxu0 %v391
          %1634 = vmatpush.msra.mxu0 %v388
          %1635 = vmatpush.msra.mxu0 %v385
          %1636 = vmatpush.msra.mxu0 %v382
          %1637 = vmatpush.msra.mxu0 %v379
          %1638 = vmatpush.msra.mxu0 %v376
          %1639 = vmatpush.msra.mxu0 %v373
          %1640 = vmatmul.f32.gmra.mxu0 0.0
          %v1641 = vpop.f32.mrf.mxu0
          %v1642 = vadd.f32 0.0, %v1641
          %1643 = vdwg.mxu0
          %v1644 = vadd.f32 %v1581, %v1602
          %v1645 = vxor.u32 %v1644, 2147483648
          %v1646 = vmul.f32 %v1645, 1.442695
          %v1647 = vpow.pop %v1646
          %v1648 = vadd.f32 %v1647, 1.0
          %v1649 = vrcp.pop %v1648
          %v1650 = vmul.f32 %v1648, %v1649
          %v1651 = vsub.f32 1.0, %v1650
          %v1652 = vmul.f32 %v1649, %v1651
          %v1653 = vadd.f32 %v1649, %v1652
          %vm1654 = vweird.f32 %v1648
          %vm1655 = vweird.f32 %v1649
          %vm1656 = vmor %vm1654, %vm1655
          %v1657 = vsel %vm1656, %v1649, %v1653
          %v1658 = vand.u32 2147483647, %v1648
          %vm1659 = vcmp.eq.f32.partialorder %v1658, 8.507059e+37
          %v1660 = vand.u32 %v1648, 2147483648
          %v1661 = vor.u32 1.1754944e-38, %v1660
          %v1662 = vsel %vm1659, %v1661, %v1657
          %v1663 = vmul.f32 1.0, %v1662
          %v1664 = vadd.f32 %v1582, %v1622
          %v1665 = vxor.u32 %v1664, 2147483648
          %v1666 = vmul.f32 %v1665, 1.442695
          %v1667 = vpow.pop %v1666
          %v1668 = vadd.f32 %v1667, 1.0
          %v1669 = vrcp.pop %v1668
          %v1670 = vmul.f32 %v1668, %v1669
          %v1671 = vsub.f32 1.0, %v1670
          %v1672 = vmul.f32 %v1669, %v1671
          %v1673 = vadd.f32 %v1669, %v1672
          %vm1674 = vweird.f32 %v1668
          %vm1675 = vweird.f32 %v1669
          %vm1676 = vmor %vm1674, %vm1675
          %v1677 = vsel %vm1676, %v1669, %v1673
          %v1678 = vand.u32 2147483647, %v1668
          %vm1679 = vcmp.eq.f32.partialorder %v1678, 8.507059e+37
          %v1680 = vand.u32 %v1668, 2147483648
          %v1681 = vor.u32 1.1754944e-38, %v1680
          %v1682 = vsel %vm1679, %v1681, %v1677
          %v1683 = vmul.f32 1.0, %v1682
          %v1685 = vperm.slane %v420, 0
          %v1687 = vadd.f32 %v1642, %v1685
          %v1688 = vmul.f32 %v1663, %v1687
          %v1689 = vadd.f32 %v1583, %v1688
          %v1690 = vtanh.pop %v1689
          %v1691 = vsub.f32 1.0, %v1683
          %v1692 = vmul.f32 %v1691, %v1690
          %v1693 = vmul.f32 %v1683, 0.0
          %v1694 = vadd.f32 %v1692, %v1693
          %vm1695 = vcmp.gt.s32.totalorder %v421, 7
          %v1696 = vmax.f32 %v1694, -1e+30
          %v1697 = vsel %vm1695, 1, 0
          %1698 = vset.pattern.permute.xlu0 0
          %1699 = vperm.xlu0 %1698, %v1697
          %v1700 = vpop.permute.xlu0 %1699
          %vm1701 = vcmp.eq.s32.totalorder %v1700, 1
          %v1702 = vsel %vm1701, %v1696, -1e+30
          %s1703 = scalar_lea.vmem [#allocation2], 144
          %v1704 = vld [vmem:[%s1703] sm:$0xff]
          %v1705 = vld [vmem:[%s1703 + $0x8] sm:$0xff]
          %v1706 = vld [vmem:[%s1703 + $0x10] sm:$0xff]
          %1707 = vmatpush.msra.mxu0 %v416
          %1708 = vmatpush.msra.mxu0 %v413
          %1709 = vmatpush.msra.mxu0 %v410
          %1710 = vmatpush.msra.mxu0 %v407
          %1711 = vmatpush.msra.mxu0 %v404
          %1712 = vmatpush.msra.mxu0 %v401
          %1713 = vmatpush.msra.mxu0 %v398
          %1714 = vmatpush.msra.mxu0 %v395
          %1715 = vmatpush.msra.mxu0 %v392
          %1716 = vmatpush.msra.mxu0 %v389
          %1717 = vmatpush.msra.mxu0 %v386
          %1718 = vmatpush.msra.mxu0 %v383
          %1719 = vmatpush.msra.mxu0 %v380
          %1720 = vmatpush.msra.mxu0 %v377
          %1721 = vmatpush.msra.mxu0 %v374
          %1722 = vmatpush.msra.mxu0 %v371
          %1723 = vmatmul.f32.gmra.mxu0 %v1694
          %v1724 = vpop.f32.mrf.mxu0
          %v1725 = vadd.f32 0.0, %v1724
          %1726 = vdwg.mxu0
          %1727 = vmatpush.msra.mxu0 %v417
          %1728 = vmatpush.msra.mxu0 %v414
          %1729 = vmatpush.msra.mxu0 %v411
          %1730 = vmatpush.msra.mxu0 %v408
          %1731 = vmatpush.msra.mxu0 %v405
          %1732 = vmatpush.msra.mxu0 %v402
          %1733 = vmatpush.msra.mxu0 %v399
          %1734 = vmatpush.msra.mxu0 %v396
          %1735 = vmatpush.msra.mxu0 %v393
          %1736 = vmatpush.msra.mxu0 %v390
          %1737 = vmatpush.msra.mxu0 %v387
          %1738 = vmatpush.msra.mxu0 %v384
          %1739 = vmatpush.msra.mxu0 %v381
          %1740 = vmatpush.msra.mxu0 %v378
          %1741 = vmatpush.msra.mxu0 %v375
          %1742 = vmatpush.msra.mxu0 %v372
          %1743 = vmatmul.f32.gmra.mxu0 %v1694
          %v1744 = vpop.f32.mrf.mxu0
          %v1745 = vadd.f32 0.0, %v1744
          %1746 = vdwg.mxu0
          %1747 = vmatpush.msra.mxu0 %v418
          %1748 = vmatpush.msra.mxu0 %v415
          %1749 = vmatpush.msra.mxu0 %v412
          %1750 = vmatpush.msra.mxu0 %v409
          %1751 = vmatpush.msra.mxu0 %v406
          %1752 = vmatpush.msra.mxu0 %v403
          %1753 = vmatpush.msra.mxu0 %v400
          %1754 = vmatpush.msra.mxu0 %v397
          %1755 = vmatpush.msra.mxu0 %v394
          %1756 = vmatpush.msra.mxu0 %v391
          %1757 = vmatpush.msra.mxu0 %v388
          %1758 = vmatpush.msra.mxu0 %v385
          %1759 = vmatpush.msra.mxu0 %v382
          %1760 = vmatpush.msra.mxu0 %v379
          %1761 = vmatpush.msra.mxu0 %v376
          %1762 = vmatpush.msra.mxu0 %v373
          %1763 = vmatmul.f32.gmra.mxu0 %v1694
          %v1764 = vpop.f32.mrf.mxu0
          %v1765 = vadd.f32 0.0, %v1764
          %1766 = vdwg.mxu0
          %v1767 = vadd.f32 %v1704, %v1725
          %v1768 = vxor.u32 %v1767, 2147483648
          %v1769 = vmul.f32 %v1768, 1.442695
          %v1770 = vpow.pop %v1769
          %v1771 = vadd.f32 %v1770, 1.0
          %v1772 = vrcp.pop %v1771
          %v1773 = vmul.f32 %v1771, %v1772
          %v1774 = vsub.f32 1.0, %v1773
          %v1775 = vmul.f32 %v1772, %v1774
          %v1776 = vadd.f32 %v1772, %v1775
          %vm1777 = vweird.f32 %v1771
          %vm1778 = vweird.f32 %v1772
          %vm1779 = vmor %vm1777, %vm1778
          %v1780 = vsel %vm1779, %v1772, %v1776
          %v1781 = vand.u32 2147483647, %v1771
          %vm1782 = vcmp.eq.f32.partialorder %v1781, 8.507059e+37
          %v1783 = vand.u32 %v1771, 2147483648
          %v1784 = vor.u32 1.1754944e-38, %v1783
          %v1785 = vsel %vm1782, %v1784, %v1780
          %v1786 = vmul.f32 1.0, %v1785
          %v1787 = vadd.f32 %v1705, %v1745
          %v1788 = vxor.u32 %v1787, 2147483648
          %v1789 = vmul.f32 %v1788, 1.442695
          %v1790 = vpow.pop %v1789
          %v1791 = vadd.f32 %v1790, 1.0
          %v1792 = vrcp.pop %v1791
          %v1793 = vmul.f32 %v1791, %v1792
          %v1794 = vsub.f32 1.0, %v1793
          %v1795 = vmul.f32 %v1792, %v1794
          %v1796 = vadd.f32 %v1792, %v1795
          %vm1797 = vweird.f32 %v1791
          %vm1798 = vweird.f32 %v1792
          %vm1799 = vmor %vm1797, %vm1798
          %v1800 = vsel %vm1799, %v1792, %v1796
          %v1801 = vand.u32 2147483647, %v1791
          %vm1802 = vcmp.eq.f32.partialorder %v1801, 8.507059e+37
          %v1803 = vand.u32 %v1791, 2147483648
          %v1804 = vor.u32 1.1754944e-38, %v1803
          %v1805 = vsel %vm1802, %v1804, %v1800
          %v1806 = vmul.f32 1.0, %v1805
          %v1807 = vadd.f32 %v1765, %v1685
          %v1808 = vmul.f32 %v1786, %v1807
          %v1809 = vadd.f32 %v1706, %v1808
          %v1810 = vtanh.pop %v1809
          %v1811 = vsub.f32 1.0, %v1806
          %v1812 = vmul.f32 %v1811, %v1810
          %v1813 = vmul.f32 %v1806, %v1694
          %v1814 = vadd.f32 %v1812, %v1813
          %vm1815 = vcmp.gt.s32.totalorder %v421, 6
          %v1816 = vmax.f32 %v1702, %v1814
          %v1817 = vsel %vm1815, 1, 0
          %1818 = vset.pattern.permute.xlu0 0
          %1819 = vperm.xlu0 %1818, %v1817
          %v1820 = vpop.permute.xlu0 %1819
          %vm1821 = vcmp.eq.s32.totalorder %v1820, 1
          %v1822 = vsel %vm1821, %v1816, %v1702
          %s1823 = scalar_lea.vmem [#allocation2], 120
          %v1824 = vld [vmem:[%s1823] sm:$0xff]
          %v1825 = vld [vmem:[%s1823 + $0x8] sm:$0xff]
          %v1826 = vld [vmem:[%s1823 + $0x10] sm:$0xff]
          %1827 = vmatpush.msra.mxu0 %v416
          %1828 = vmatpush.msra.mxu0 %v413
          %1829 = vmatpush.msra.mxu0 %v410
          %1830 = vmatpush.msra.mxu0 %v407
          %1831 = vmatpush.msra.mxu0 %v404
          %1832 = vmatpush.msra.mxu0 %v401
          %1833 = vmatpush.msra.mxu0 %v398
          %1834 = vmatpush.msra.mxu0 %v395
          %1835 = vmatpush.msra.mxu0 %v392
          %1836 = vmatpush.msra.mxu0 %v389
          %1837 = vmatpush.msra.mxu0 %v386
          %1838 = vmatpush.msra.mxu0 %v383
          %1839 = vmatpush.msra.mxu0 %v380
          %1840 = vmatpush.msra.mxu0 %v377
          %1841 = vmatpush.msra.mxu0 %v374
          %1842 = vmatpush.msra.mxu0 %v371
          %1843 = vmatmul.f32.gmra.mxu0 %v1814
          %v1844 = vpop.f32.mrf.mxu0
          %v1845 = vadd.f32 0.0, %v1844
          %1846 = vdwg.mxu0
          %1847 = vmatpush.msra.mxu0 %v417
          %1848 = vmatpush.msra.mxu0 %v414
          %1849 = vmatpush.msra.mxu0 %v411
          %1850 = vmatpush.msra.mxu0 %v408
          %1851 = vmatpush.msra.mxu0 %v405
          %1852 = vmatpush.msra.mxu0 %v402
          %1853 = vmatpush.msra.mxu0 %v399
          %1854 = vmatpush.msra.mxu0 %v396
          %1855 = vmatpush.msra.mxu0 %v393
          %1856 = vmatpush.msra.mxu0 %v390
          %1857 = vmatpush.msra.mxu0 %v387
          %1858 = vmatpush.msra.mxu0 %v384
          %1859 = vmatpush.msra.mxu0 %v381
          %1860 = vmatpush.msra.mxu0 %v378
          %1861 = vmatpush.msra.mxu0 %v375
          %1862 = vmatpush.msra.mxu0 %v372
          %1863 = vmatmul.f32.gmra.mxu0 %v1814
          %v1864 = vpop.f32.mrf.mxu0
          %v1865 = vadd.f32 0.0, %v1864
          %1866 = vdwg.mxu0
          %1867 = vmatpush.msra.mxu0 %v418
          %1868 = vmatpush.msra.mxu0 %v415
          %1869 = vmatpush.msra.mxu0 %v412
          %1870 = vmatpush.msra.mxu0 %v409
          %1871 = vmatpush.msra.mxu0 %v406
          %1872 = vmatpush.msra.mxu0 %v403
          %1873 = vmatpush.msra.mxu0 %v400
          %1874 = vmatpush.msra.mxu0 %v397
          %1875 = vmatpush.msra.mxu0 %v394
          %1876 = vmatpush.msra.mxu0 %v391
          %1877 = vmatpush.msra.mxu0 %v388
          %1878 = vmatpush.msra.mxu0 %v385
          %1879 = vmatpush.msra.mxu0 %v382
          %1880 = vmatpush.msra.mxu0 %v379
          %1881 = vmatpush.msra.mxu0 %v376
          %1882 = vmatpush.msra.mxu0 %v373
          %1883 = vmatmul.f32.gmra.mxu0 %v1814
          %v1884 = vpop.f32.mrf.mxu0
          %v1885 = vadd.f32 0.0, %v1884
          %1886 = vdwg.mxu0
          %v1887 = vadd.f32 %v1824, %v1845
          %v1888 = vxor.u32 %v1887, 2147483648
          %v1889 = vmul.f32 %v1888, 1.442695
          %v1890 = vpow.pop %v1889
          %v1891 = vadd.f32 %v1890, 1.0
          %v1892 = vrcp.pop %v1891
          %v1893 = vmul.f32 %v1891, %v1892
          %v1894 = vsub.f32 1.0, %v1893
          %v1895 = vmul.f32 %v1892, %v1894
          %v1896 = vadd.f32 %v1892, %v1895
          %vm1897 = vweird.f32 %v1891
          %vm1898 = vweird.f32 %v1892
          %vm1899 = vmor %vm1897, %vm1898
          %v1900 = vsel %vm1899, %v1892, %v1896
          %v1901 = vand.u32 2147483647, %v1891
          %vm1902 = vcmp.eq.f32.partialorder %v1901, 8.507059e+37
          %v1903 = vand.u32 %v1891, 2147483648
          %v1904 = vor.u32 1.1754944e-38, %v1903
          %v1905 = vsel %vm1902, %v1904, %v1900
          %v1906 = vmul.f32 1.0, %v1905
          %v1907 = vadd.f32 %v1825, %v1865
          %v1908 = vxor.u32 %v1907, 2147483648
          %v1909 = vmul.f32 %v1908, 1.442695
          %v1910 = vpow.pop %v1909
          %v1911 = vadd.f32 %v1910, 1.0
          %v1912 = vrcp.pop %v1911
          %v1913 = vmul.f32 %v1911, %v1912
          %v1914 = vsub.f32 1.0, %v1913
          %v1915 = vmul.f32 %v1912, %v1914
          %v1916 = vadd.f32 %v1912, %v1915
          %vm1917 = vweird.f32 %v1911
          %vm1918 = vweird.f32 %v1912
          %vm1919 = vmor %vm1917, %vm1918
          %v1920 = vsel %vm1919, %v1912, %v1916
          %v1921 = vand.u32 2147483647, %v1911
          %vm1922 = vcmp.eq.f32.partialorder %v1921, 8.507059e+37
          %v1923 = vand.u32 %v1911, 2147483648
          %v1924 = vor.u32 1.1754944e-38, %v1923
          %v1925 = vsel %vm1922, %v1924, %v1920
          %v1926 = vmul.f32 1.0, %v1925
          %v1927 = vadd.f32 %v1885, %v1685
          %v1928 = vmul.f32 %v1906, %v1927
          %v1929 = vadd.f32 %v1826, %v1928
          %v1930 = vtanh.pop %v1929
          %v1931 = vsub.f32 1.0, %v1926
          %v1932 = vmul.f32 %v1931, %v1930
          %v1933 = vmul.f32 %v1926, %v1814
          %v1934 = vadd.f32 %v1932, %v1933
          %vm1935 = vcmp.gt.s32.totalorder %v421, 5
          %v1936 = vmax.f32 %v1822, %v1934
          %v1937 = vsel %vm1935, 1, 0
          %1938 = vset.pattern.permute.xlu0 0
          %1939 = vperm.xlu0 %1938, %v1937
          %v1940 = vpop.permute.xlu0 %1939
          %vm1941 = vcmp.eq.s32.totalorder %v1940, 1
          %v1942 = vsel %vm1941, %v1936, %v1822
          %s1943 = scalar_lea.vmem [#allocation2], 96
          %v1944 = vld [vmem:[%s1943] sm:$0xff]
          %v1945 = vld [vmem:[%s1943 + $0x8] sm:$0xff]
          %v1946 = vld [vmem:[%s1943 + $0x10] sm:$0xff]
          %1947 = vmatpush.msra.mxu0 %v416
          %1948 = vmatpush.msra.mxu0 %v413
          %1949 = vmatpush.msra.mxu0 %v410
          %1950 = vmatpush.msra.mxu0 %v407
          %1951 = vmatpush.msra.mxu0 %v404
          %1952 = vmatpush.msra.mxu0 %v401
          %1953 = vmatpush.msra.mxu0 %v398
          %1954 = vmatpush.msra.mxu0 %v395
          %1955 = vmatpush.msra.mxu0 %v392
          %1956 = vmatpush.msra.mxu0 %v389
          %1957 = vmatpush.msra.mxu0 %v386
          %1958 = vmatpush.msra.mxu0 %v383
          %1959 = vmatpush.msra.mxu0 %v380
          %1960 = vmatpush.msra.mxu0 %v377
          %1961 = vmatpush.msra.mxu0 %v374
          %1962 = vmatpush.msra.mxu0 %v371
          %1963 = vmatmul.f32.gmra.mxu0 %v1934
          %v1964 = vpop.f32.mrf.mxu0
          %v1965 = vadd.f32 0.0, %v1964
          %1966 = vdwg.mxu0
          %1967 = vmatpush.msra.mxu0 %v417
          %1968 = vmatpush.msra.mxu0 %v414
          %1969 = vmatpush.msra.mxu0 %v411
          %1970 = vmatpush.msra.mxu0 %v408
          %1971 = vmatpush.msra.mxu0 %v405
          %1972 = vmatpush.msra.mxu0 %v402
          %1973 = vmatpush.msra.mxu0 %v399
          %1974 = vmatpush.msra.mxu0 %v396
          %1975 = vmatpush.msra.mxu0 %v393
          %1976 = vmatpush.msra.mxu0 %v390
          %1977 = vmatpush.msra.mxu0 %v387
          %1978 = vmatpush.msra.mxu0 %v384
          %1979 = vmatpush.msra.mxu0 %v381
          %1980 = vmatpush.msra.mxu0 %v378
          %1981 = vmatpush.msra.mxu0 %v375
          %1982 = vmatpush.msra.mxu0 %v372
          %1983 = vmatmul.f32.gmra.mxu0 %v1934
          %v1984 = vpop.f32.mrf.mxu0
          %v1985 = vadd.f32 0.0, %v1984
          %1986 = vdwg.mxu0
          %1987 = vmatpush.msra.mxu0 %v418
          %1988 = vmatpush.msra.mxu0 %v415
          %1989 = vmatpush.msra.mxu0 %v412
          %1990 = vmatpush.msra.mxu0 %v409
          %1991 = vmatpush.msra.mxu0 %v406
          %1992 = vmatpush.msra.mxu0 %v403
          %1993 = vmatpush.msra.mxu0 %v400
          %1994 = vmatpush.msra.mxu0 %v397
          %1995 = vmatpush.msra.mxu0 %v394
          %1996 = vmatpush.msra.mxu0 %v391
          %1997 = vmatpush.msra.mxu0 %v388
          %1998 = vmatpush.msra.mxu0 %v385
          %1999 = vmatpush.msra.mxu0 %v382
          %2000 = vmatpush.msra.mxu0 %v379
          %2001 = vmatpush.msra.mxu0 %v376
          %2002 = vmatpush.msra.mxu0 %v373
          %2003 = vmatmul.f32.gmra.mxu0 %v1934
          %v2004 = vpop.f32.mrf.mxu0
          %v2005 = vadd.f32 0.0, %v2004
          %2006 = vdwg.mxu0
          %v2007 = vadd.f32 %v1944, %v1965
          %v2008 = vxor.u32 %v2007, 2147483648
          %v2009 = vmul.f32 %v2008, 1.442695
          %v2010 = vpow.pop %v2009
          %v2011 = vadd.f32 %v2010, 1.0
          %v2012 = vrcp.pop %v2011
          %v2013 = vmul.f32 %v2011, %v2012
          %v2014 = vsub.f32 1.0, %v2013
          %v2015 = vmul.f32 %v2012, %v2014
          %v2016 = vadd.f32 %v2012, %v2015
          %vm2017 = vweird.f32 %v2011
          %vm2018 = vweird.f32 %v2012
          %vm2019 = vmor %vm2017, %vm2018
          %v2020 = vsel %vm2019, %v2012, %v2016
          %v2021 = vand.u32 2147483647, %v2011
          %vm2022 = vcmp.eq.f32.partialorder %v2021, 8.507059e+37
          %v2023 = vand.u32 %v2011, 2147483648
          %v2024 = vor.u32 1.1754944e-38, %v2023
          %v2025 = vsel %vm2022, %v2024, %v2020
          %v2026 = vmul.f32 1.0, %v2025
          %v2027 = vadd.f32 %v1945, %v1985
          %v2028 = vxor.u32 %v2027, 2147483648
          %v2029 = vmul.f32 %v2028, 1.442695
          %v2030 = vpow.pop %v2029
          %v2031 = vadd.f32 %v2030, 1.0
          %v2032 = vrcp.pop %v2031
          %v2033 = vmul.f32 %v2031, %v2032
          %v2034 = vsub.f32 1.0, %v2033
          %v2035 = vmul.f32 %v2032, %v2034
          %v2036 = vadd.f32 %v2032, %v2035
          %vm2037 = vweird.f32 %v2031
          %vm2038 = vweird.f32 %v2032
          %vm2039 = vmor %vm2037, %vm2038
          %v2040 = vsel %vm2039, %v2032, %v2036
          %v2041 = vand.u32 2147483647, %v2031
          %vm2042 = vcmp.eq.f32.partialorder %v2041, 8.507059e+37
          %v2043 = vand.u32 %v2031, 2147483648
          %v2044 = vor.u32 1.1754944e-38, %v2043
          %v2045 = vsel %vm2042, %v2044, %v2040
          %v2046 = vmul.f32 1.0, %v2045
          %v2047 = vadd.f32 %v2005, %v1685
          %v2048 = vmul.f32 %v2026, %v2047
          %v2049 = vadd.f32 %v1946, %v2048
          %v2050 = vtanh.pop %v2049
          %v2051 = vsub.f32 1.0, %v2046
          %v2052 = vmul.f32 %v2051, %v2050
          %v2053 = vmul.f32 %v2046, %v1934
          %v2054 = vadd.f32 %v2052, %v2053
          %vm2055 = vcmp.gt.s32.totalorder %v421, 4
          %v2056 = vmax.f32 %v1942, %v2054
          %v2057 = vsel %vm2055, 1, 0
          %2058 = vset.pattern.permute.xlu0 0
          %2059 = vperm.xlu0 %2058, %v2057
          %v2060 = vpop.permute.xlu0 %2059
          %vm2061 = vcmp.eq.s32.totalorder %v2060, 1
          %v2062 = vsel %vm2061, %v2056, %v1942
          %s2063 = scalar_lea.vmem [#allocation2], 72
          %v2064 = vld [vmem:[%s2063] sm:$0xff]
          %v2065 = vld [vmem:[%s2063 + $0x8] sm:$0xff]
          %v2066 = vld [vmem:[%s2063 + $0x10] sm:$0xff]
          %2067 = vmatpush.msra.mxu0 %v416
          %2068 = vmatpush.msra.mxu0 %v413
          %2069 = vmatpush.msra.mxu0 %v410
          %2070 = vmatpush.msra.mxu0 %v407
          %2071 = vmatpush.msra.mxu0 %v404
          %2072 = vmatpush.msra.mxu0 %v401
          %2073 = vmatpush.msra.mxu0 %v398
          %2074 = vmatpush.msra.mxu0 %v395
          %2075 = vmatpush.msra.mxu0 %v392
          %2076 = vmatpush.msra.mxu0 %v389
          %2077 = vmatpush.msra.mxu0 %v386
          %2078 = vmatpush.msra.mxu0 %v383
          %2079 = vmatpush.msra.mxu0 %v380
          %2080 = vmatpush.msra.mxu0 %v377
          %2081 = vmatpush.msra.mxu0 %v374
          %2082 = vmatpush.msra.mxu0 %v371
          %2083 = vmatmul.f32.gmra.mxu0 %v2054
          %v2084 = vpop.f32.mrf.mxu0
          %v2085 = vadd.f32 0.0, %v2084
          %2086 = vdwg.mxu0
          %2087 = vmatpush.msra.mxu0 %v417
          %2088 = vmatpush.msra.mxu0 %v414
          %2089 = vmatpush.msra.mxu0 %v411
          %2090 = vmatpush.msra.mxu0 %v408
          %2091 = vmatpush.msra.mxu0 %v405
          %2092 = vmatpush.msra.mxu0 %v402
          %2093 = vmatpush.msra.mxu0 %v399
          %2094 = vmatpush.msra.mxu0 %v396
          %2095 = vmatpush.msra.mxu0 %v393
          %2096 = vmatpush.msra.mxu0 %v390
          %2097 = vmatpush.msra.mxu0 %v387
          %2098 = vmatpush.msra.mxu0 %v384
          %2099 = vmatpush.msra.mxu0 %v381
          %2100 = vmatpush.msra.mxu0 %v378
          %2101 = vmatpush.msra.mxu0 %v375
          %2102 = vmatpush.msra.mxu0 %v372
          %2103 = vmatmul.f32.gmra.mxu0 %v2054
          %v2104 = vpop.f32.mrf.mxu0
          %v2105 = vadd.f32 0.0, %v2104
          %2106 = vdwg.mxu0
          %2107 = vmatpush.msra.mxu0 %v418
          %2108 = vmatpush.msra.mxu0 %v415
          %2109 = vmatpush.msra.mxu0 %v412
          %2110 = vmatpush.msra.mxu0 %v409
          %2111 = vmatpush.msra.mxu0 %v406
          %2112 = vmatpush.msra.mxu0 %v403
          %2113 = vmatpush.msra.mxu0 %v400
          %2114 = vmatpush.msra.mxu0 %v397
          %2115 = vmatpush.msra.mxu0 %v394
          %2116 = vmatpush.msra.mxu0 %v391
          %2117 = vmatpush.msra.mxu0 %v388
          %2118 = vmatpush.msra.mxu0 %v385
          %2119 = vmatpush.msra.mxu0 %v382
          %2120 = vmatpush.msra.mxu0 %v379
          %2121 = vmatpush.msra.mxu0 %v376
          %2122 = vmatpush.msra.mxu0 %v373
          %2123 = vmatmul.f32.gmra.mxu0 %v2054
          %v2124 = vpop.f32.mrf.mxu0
          %v2125 = vadd.f32 0.0, %v2124
          %2126 = vdwg.mxu0
          %v2127 = vadd.f32 %v2064, %v2085
          %v2128 = vxor.u32 %v2127, 2147483648
          %v2129 = vmul.f32 %v2128, 1.442695
          %v2130 = vpow.pop %v2129
          %v2131 = vadd.f32 %v2130, 1.0
          %v2132 = vrcp.pop %v2131
          %v2133 = vmul.f32 %v2131, %v2132
          %v2134 = vsub.f32 1.0, %v2133
          %v2135 = vmul.f32 %v2132, %v2134
          %v2136 = vadd.f32 %v2132, %v2135
          %vm2137 = vweird.f32 %v2131
          %vm2138 = vweird.f32 %v2132
          %vm2139 = vmor %vm2137, %vm2138
          %v2140 = vsel %vm2139, %v2132, %v2136
          %v2141 = vand.u32 2147483647, %v2131
          %vm2142 = vcmp.eq.f32.partialorder %v2141, 8.507059e+37
          %v2143 = vand.u32 %v2131, 2147483648
          %v2144 = vor.u32 1.1754944e-38, %v2143
          %v2145 = vsel %vm2142, %v2144, %v2140
          %v2146 = vmul.f32 1.0, %v2145
          %v2147 = vadd.f32 %v2065, %v2105
          %v2148 = vxor.u32 %v2147, 2147483648
          %v2149 = vmul.f32 %v2148, 1.442695
          %v2150 = vpow.pop %v2149
          %v2151 = vadd.f32 %v2150, 1.0
          %v2152 = vrcp.pop %v2151
          %v2153 = vmul.f32 %v2151, %v2152
          %v2154 = vsub.f32 1.0, %v2153
          %v2155 = vmul.f32 %v2152, %v2154
          %v2156 = vadd.f32 %v2152, %v2155
          %vm2157 = vweird.f32 %v2151
          %vm2158 = vweird.f32 %v2152
          %vm2159 = vmor %vm2157, %vm2158
          %v2160 = vsel %vm2159, %v2152, %v2156
          %v2161 = vand.u32 2147483647, %v2151
          %vm2162 = vcmp.eq.f32.partialorder %v2161, 8.507059e+37
          %v2163 = vand.u32 %v2151, 2147483648
          %v2164 = vor.u32 1.1754944e-38, %v2163
          %v2165 = vsel %vm2162, %v2164, %v2160
          %v2166 = vmul.f32 1.0, %v2165
          %v2167 = vadd.f32 %v2125, %v1685
          %v2168 = vmul.f32 %v2146, %v2167
          %v2169 = vadd.f32 %v2066, %v2168
          %v2170 = vtanh.pop %v2169
          %v2171 = vsub.f32 1.0, %v2166
          %v2172 = vmul.f32 %v2171, %v2170
          %v2173 = vmul.f32 %v2166, %v2054
          %v2174 = vadd.f32 %v2172, %v2173
          %vm2175 = vcmp.gt.s32.totalorder %v421, 3
          %v2176 = vmax.f32 %v2062, %v2174
          %v2177 = vsel %vm2175, 1, 0
          %2178 = vset.pattern.permute.xlu0 0
          %2179 = vperm.xlu0 %2178, %v2177
          %v2180 = vpop.permute.xlu0 %2179
          %vm2181 = vcmp.eq.s32.totalorder %v2180, 1
          %v2182 = vsel %vm2181, %v2176, %v2062
          %s2183 = scalar_lea.vmem [#allocation2], 48
          %v2184 = vld [vmem:[%s2183] sm:$0xff]
          %v2185 = vld [vmem:[%s2183 + $0x8] sm:$0xff]
          %v2186 = vld [vmem:[%s2183 + $0x10] sm:$0xff]
          %2187 = vmatpush.msra.mxu0 %v416
          %2188 = vmatpush.msra.mxu0 %v413
          %2189 = vmatpush.msra.mxu0 %v410
          %2190 = vmatpush.msra.mxu0 %v407
          %2191 = vmatpush.msra.mxu0 %v404
          %2192 = vmatpush.msra.mxu0 %v401
          %2193 = vmatpush.msra.mxu0 %v398
          %2194 = vmatpush.msra.mxu0 %v395
          %2195 = vmatpush.msra.mxu0 %v392
          %2196 = vmatpush.msra.mxu0 %v389
          %2197 = vmatpush.msra.mxu0 %v386
          %2198 = vmatpush.msra.mxu0 %v383
          %2199 = vmatpush.msra.mxu0 %v380
          %2200 = vmatpush.msra.mxu0 %v377
          %2201 = vmatpush.msra.mxu0 %v374
          %2202 = vmatpush.msra.mxu0 %v371
          %2203 = vmatmul.f32.gmra.mxu0 %v2174
          %v2204 = vpop.f32.mrf.mxu0
          %v2205 = vadd.f32 0.0, %v2204
          %2206 = vdwg.mxu0
          %2207 = vmatpush.msra.mxu0 %v417
          %2208 = vmatpush.msra.mxu0 %v414
          %2209 = vmatpush.msra.mxu0 %v411
          %2210 = vmatpush.msra.mxu0 %v408
          %2211 = vmatpush.msra.mxu0 %v405
          %2212 = vmatpush.msra.mxu0 %v402
          %2213 = vmatpush.msra.mxu0 %v399
          %2214 = vmatpush.msra.mxu0 %v396
          %2215 = vmatpush.msra.mxu0 %v393
          %2216 = vmatpush.msra.mxu0 %v390
          %2217 = vmatpush.msra.mxu0 %v387
          %2218 = vmatpush.msra.mxu0 %v384
          %2219 = vmatpush.msra.mxu0 %v381
          %2220 = vmatpush.msra.mxu0 %v378
          %2221 = vmatpush.msra.mxu0 %v375
          %2222 = vmatpush.msra.mxu0 %v372
          %2223 = vmatmul.f32.gmra.mxu0 %v2174
          %v2224 = vpop.f32.mrf.mxu0
          %v2225 = vadd.f32 0.0, %v2224
          %2226 = vdwg.mxu0
          %2227 = vmatpush.msra.mxu0 %v418
          %2228 = vmatpush.msra.mxu0 %v415
          %2229 = vmatpush.msra.mxu0 %v412
          %2230 = vmatpush.msra.mxu0 %v409
          %2231 = vmatpush.msra.mxu0 %v406
          %2232 = vmatpush.msra.mxu0 %v403
          %2233 = vmatpush.msra.mxu0 %v400
          %2234 = vmatpush.msra.mxu0 %v397
          %2235 = vmatpush.msra.mxu0 %v394
          %2236 = vmatpush.msra.mxu0 %v391
          %2237 = vmatpush.msra.mxu0 %v388
          %2238 = vmatpush.msra.mxu0 %v385
          %2239 = vmatpush.msra.mxu0 %v382
          %2240 = vmatpush.msra.mxu0 %v379
          %2241 = vmatpush.msra.mxu0 %v376
          %2242 = vmatpush.msra.mxu0 %v373
          %2243 = vmatmul.f32.gmra.mxu0 %v2174
          %v2244 = vpop.f32.mrf.mxu0
          %v2245 = vadd.f32 0.0, %v2244
          %2246 = vdwg.mxu0
          %v2247 = vadd.f32 %v2184, %v2205
          %v2248 = vxor.u32 %v2247, 2147483648
          %v2249 = vmul.f32 %v2248, 1.442695
          %v2250 = vpow.pop %v2249
          %v2251 = vadd.f32 %v2250, 1.0
          %v2252 = vrcp.pop %v2251
          %v2253 = vmul.f32 %v2251, %v2252
          %v2254 = vsub.f32 1.0, %v2253
          %v2255 = vmul.f32 %v2252, %v2254
          %v2256 = vadd.f32 %v2252, %v2255
          %vm2257 = vweird.f32 %v2251
          %vm2258 = vweird.f32 %v2252
          %vm2259 = vmor %vm2257, %vm2258
          %v2260 = vsel %vm2259, %v2252, %v2256
          %v2261 = vand.u32 2147483647, %v2251
          %vm2262 = vcmp.eq.f32.partialorder %v2261, 8.507059e+37
          %v2263 = vand.u32 %v2251, 2147483648
          %v2264 = vor.u32 1.1754944e-38, %v2263
          %v2265 = vsel %vm2262, %v2264, %v2260
          %v2266 = vmul.f32 1.0, %v2265
          %v2267 = vadd.f32 %v2185, %v2225
          %v2268 = vxor.u32 %v2267, 2147483648
          %v2269 = vmul.f32 %v2268, 1.442695
          %v2270 = vpow.pop %v2269
          %v2271 = vadd.f32 %v2270, 1.0
          %v2272 = vrcp.pop %v2271
          %v2273 = vmul.f32 %v2271, %v2272
          %v2274 = vsub.f32 1.0, %v2273
          %v2275 = vmul.f32 %v2272, %v2274
          %v2276 = vadd.f32 %v2272, %v2275
          %vm2277 = vweird.f32 %v2271
          %vm2278 = vweird.f32 %v2272
          %vm2279 = vmor %vm2277, %vm2278
          %v2280 = vsel %vm2279, %v2272, %v2276
          %v2281 = vand.u32 2147483647, %v2271
          %vm2282 = vcmp.eq.f32.partialorder %v2281, 8.507059e+37
          %v2283 = vand.u32 %v2271, 2147483648
          %v2284 = vor.u32 1.1754944e-38, %v2283
          %v2285 = vsel %vm2282, %v2284, %v2280
          %v2286 = vmul.f32 1.0, %v2285
          %v2287 = vadd.f32 %v2245, %v1685
          %v2288 = vmul.f32 %v2266, %v2287
          %v2289 = vadd.f32 %v2186, %v2288
          %v2290 = vtanh.pop %v2289
          %v2291 = vsub.f32 1.0, %v2286
          %v2292 = vmul.f32 %v2291, %v2290
          %v2293 = vmul.f32 %v2286, %v2174
          %v2294 = vadd.f32 %v2292, %v2293
          %vm2295 = vcmp.gt.s32.totalorder %v421, 2
          %v2296 = vmax.f32 %v2182, %v2294
          %v2297 = vsel %vm2295, 1, 0
          %2298 = vset.pattern.permute.xlu0 0
          %2299 = vperm.xlu0 %2298, %v2297
          %v2300 = vpop.permute.xlu0 %2299
          %vm2301 = vcmp.eq.s32.totalorder %v2300, 1
          %v2302 = vsel %vm2301, %v2296, %v2182
          %s2303 = scalar_lea.vmem [#allocation2], 24
          %v2304 = vld [vmem:[%s2303] sm:$0xff]
          %v2305 = vld [vmem:[%s2303 + $0x8] sm:$0xff]
          %v2306 = vld [vmem:[%s2303 + $0x10] sm:$0xff]
          %2307 = vmatpush.msra.mxu0 %v416
          %2308 = vmatpush.msra.mxu0 %v413
          %2309 = vmatpush.msra.mxu0 %v410
          %2310 = vmatpush.msra.mxu0 %v407
          %2311 = vmatpush.msra.mxu0 %v404
          %2312 = vmatpush.msra.mxu0 %v401
          %2313 = vmatpush.msra.mxu0 %v398
          %2314 = vmatpush.msra.mxu0 %v395
          %2315 = vmatpush.msra.mxu0 %v392
          %2316 = vmatpush.msra.mxu0 %v389
          %2317 = vmatpush.msra.mxu0 %v386
          %2318 = vmatpush.msra.mxu0 %v383
          %2319 = vmatpush.msra.mxu0 %v380
          %2320 = vmatpush.msra.mxu0 %v377
          %2321 = vmatpush.msra.mxu0 %v374
          %2322 = vmatpush.msra.mxu0 %v371
          %2323 = vmatmul.f32.gmra.mxu0 %v2294
          %v2324 = vpop.f32.mrf.mxu0
          %v2325 = vadd.f32 0.0, %v2324
          %2326 = vdwg.mxu0
          %2327 = vmatpush.msra.mxu0 %v417
          %2328 = vmatpush.msra.mxu0 %v414
          %2329 = vmatpush.msra.mxu0 %v411
          %2330 = vmatpush.msra.mxu0 %v408
          %2331 = vmatpush.msra.mxu0 %v405
          %2332 = vmatpush.msra.mxu0 %v402
          %2333 = vmatpush.msra.mxu0 %v399
          %2334 = vmatpush.msra.mxu0 %v396
          %2335 = vmatpush.msra.mxu0 %v393
          %2336 = vmatpush.msra.mxu0 %v390
          %2337 = vmatpush.msra.mxu0 %v387
          %2338 = vmatpush.msra.mxu0 %v384
          %2339 = vmatpush.msra.mxu0 %v381
          %2340 = vmatpush.msra.mxu0 %v378
          %2341 = vmatpush.msra.mxu0 %v375
          %2342 = vmatpush.msra.mxu0 %v372
          %2343 = vmatmul.f32.gmra.mxu0 %v2294
          %v2344 = vpop.f32.mrf.mxu0
          %v2345 = vadd.f32 0.0, %v2344
          %2346 = vdwg.mxu0
          %2347 = vmatpush.msra.mxu0 %v418
          %2348 = vmatpush.msra.mxu0 %v415
          %2349 = vmatpush.msra.mxu0 %v412
          %2350 = vmatpush.msra.mxu0 %v409
          %2351 = vmatpush.msra.mxu0 %v406
          %2352 = vmatpush.msra.mxu0 %v403
          %2353 = vmatpush.msra.mxu0 %v400
          %2354 = vmatpush.msra.mxu0 %v397
          %2355 = vmatpush.msra.mxu0 %v394
          %2356 = vmatpush.msra.mxu0 %v391
          %2357 = vmatpush.msra.mxu0 %v388
          %2358 = vmatpush.msra.mxu0 %v385
          %2359 = vmatpush.msra.mxu0 %v382
          %2360 = vmatpush.msra.mxu0 %v379
          %2361 = vmatpush.msra.mxu0 %v376
          %2362 = vmatpush.msra.mxu0 %v373
          %2363 = vmatmul.f32.gmra.mxu0 %v2294
          %v2364 = vpop.f32.mrf.mxu0
          %v2365 = vadd.f32 0.0, %v2364
          %2366 = vdwg.mxu0
          %v2367 = vadd.f32 %v2304, %v2325
          %v2368 = vxor.u32 %v2367, 2147483648
          %v2369 = vmul.f32 %v2368, 1.442695
          %v2370 = vpow.pop %v2369
          %v2371 = vadd.f32 %v2370, 1.0
          %v2372 = vrcp.pop %v2371
          %v2373 = vmul.f32 %v2371, %v2372
          %v2374 = vsub.f32 1.0, %v2373
          %v2375 = vmul.f32 %v2372, %v2374
          %v2376 = vadd.f32 %v2372, %v2375
          %vm2377 = vweird.f32 %v2371
          %vm2378 = vweird.f32 %v2372
          %vm2379 = vmor %vm2377, %vm2378
          %v2380 = vsel %vm2379, %v2372, %v2376
          %v2381 = vand.u32 2147483647, %v2371
          %vm2382 = vcmp.eq.f32.partialorder %v2381, 8.507059e+37
          %v2383 = vand.u32 %v2371, 2147483648
          %v2384 = vor.u32 1.1754944e-38, %v2383
          %v2385 = vsel %vm2382, %v2384, %v2380
          %v2386 = vmul.f32 1.0, %v2385
          %v2387 = vadd.f32 %v2305, %v2345
          %v2388 = vxor.u32 %v2387, 2147483648
          %v2389 = vmul.f32 %v2388, 1.442695
          %v2390 = vpow.pop %v2389
          %v2391 = vadd.f32 %v2390, 1.0
          %v2392 = vrcp.pop %v2391
          %v2393 = vmul.f32 %v2391, %v2392
          %v2394 = vsub.f32 1.0, %v2393
          %v2395 = vmul.f32 %v2392, %v2394
          %v2396 = vadd.f32 %v2392, %v2395
          %vm2397 = vweird.f32 %v2391
          %vm2398 = vweird.f32 %v2392
          %vm2399 = vmor %vm2397, %vm2398
          %v2400 = vsel %vm2399, %v2392, %v2396
          %v2401 = vand.u32 2147483647, %v2391
          %vm2402 = vcmp.eq.f32.partialorder %v2401, 8.507059e+37
          %v2403 = vand.u32 %v2391, 2147483648
          %v2404 = vor.u32 1.1754944e-38, %v2403
          %v2405 = vsel %vm2402, %v2404, %v2400
          %v2406 = vmul.f32 1.0, %v2405
          %v2407 = vadd.f32 %v2365, %v1685
          %v2408 = vmul.f32 %v2386, %v2407
          %v2409 = vadd.f32 %v2306, %v2408
          %v2410 = vtanh.pop %v2409
          %v2411 = vsub.f32 1.0, %v2406
          %v2412 = vmul.f32 %v2411, %v2410
          %v2413 = vmul.f32 %v2406, %v2294
          %v2414 = vadd.f32 %v2412, %v2413
          %vm2415 = vcmp.gt.s32.totalorder %v421, 1
          %v2416 = vmax.f32 %v2302, %v2414
          %v2417 = vsel %vm2415, 1, 0
          %2418 = vset.pattern.permute.xlu0 0
          %2419 = vperm.xlu0 %2418, %v2417
          %v2420 = vpop.permute.xlu0 %2419
          %vm2421 = vcmp.eq.s32.totalorder %v2420, 1
          %v2422 = vsel %vm2421, %v2416, %v2302
          %v2423 = vld [vmem:[#allocation2] sm:$0xff]
          %v2424 = vld [vmem:[#allocation2 + $0x8] sm:$0xff]
          %v2425 = vld [vmem:[#allocation2 + $0x10] sm:$0xff]
          %2426 = vmatpush.msra.mxu0 %v416
          %2427 = vmatpush.msra.mxu0 %v413
          %2428 = vmatpush.msra.mxu0 %v410
          %2429 = vmatpush.msra.mxu0 %v407
          %2430 = vmatpush.msra.mxu0 %v404
          %2431 = vmatpush.msra.mxu0 %v401
          %2432 = vmatpush.msra.mxu0 %v398
          %2433 = vmatpush.msra.mxu0 %v395
          %2434 = vmatpush.msra.mxu0 %v392
          %2435 = vmatpush.msra.mxu0 %v389
          %2436 = vmatpush.msra.mxu0 %v386
          %2437 = vmatpush.msra.mxu0 %v383
          %2438 = vmatpush.msra.mxu0 %v380
          %2439 = vmatpush.msra.mxu0 %v377
          %2440 = vmatpush.msra.mxu0 %v374
          %2441 = vmatpush.msra.mxu0 %v371
          %2442 = vmatmul.f32.gmra.mxu0 %v2414
          %v2443 = vpop.f32.mrf.mxu0
          %v2444 = vadd.f32 0.0, %v2443
          %2445 = vdwg.mxu0
          %2446 = vmatpush.msra.mxu0 %v417
          %2447 = vmatpush.msra.mxu0 %v414
          %2448 = vmatpush.msra.mxu0 %v411
          %2449 = vmatpush.msra.mxu0 %v408
          %2450 = vmatpush.msra.mxu0 %v405
          %2451 = vmatpush.msra.mxu0 %v402
          %2452 = vmatpush.msra.mxu0 %v399
          %2453 = vmatpush.msra.mxu0 %v396
          %2454 = vmatpush.msra.mxu0 %v393
          %2455 = vmatpush.msra.mxu0 %v390
          %2456 = vmatpush.msra.mxu0 %v387
          %2457 = vmatpush.msra.mxu0 %v384
          %2458 = vmatpush.msra.mxu0 %v381
          %2459 = vmatpush.msra.mxu0 %v378
          %2460 = vmatpush.msra.mxu0 %v375
          %2461 = vmatpush.msra.mxu0 %v372
          %2462 = vmatmul.f32.gmra.mxu0 %v2414
          %v2463 = vpop.f32.mrf.mxu0
          %v2464 = vadd.f32 0.0, %v2463
          %2465 = vdwg.mxu0
          %2466 = vmatpush.msra.mxu0 %v418
          %2467 = vmatpush.msra.mxu0 %v415
          %2468 = vmatpush.msra.mxu0 %v412
          %2469 = vmatpush.msra.mxu0 %v409
          %2470 = vmatpush.msra.mxu0 %v406
          %2471 = vmatpush.msra.mxu0 %v403
          %2472 = vmatpush.msra.mxu0 %v400
          %2473 = vmatpush.msra.mxu0 %v397
          %2474 = vmatpush.msra.mxu0 %v394
          %2475 = vmatpush.msra.mxu0 %v391
          %2476 = vmatpush.msra.mxu0 %v388
          %2477 = vmatpush.msra.mxu0 %v385
          %2478 = vmatpush.msra.mxu0 %v382
          %2479 = vmatpush.msra.mxu0 %v379
          %2480 = vmatpush.msra.mxu0 %v376
          %2481 = vmatpush.msra.mxu0 %v373
          %2482 = vmatmul.f32.gmra.mxu0 %v2414
          %v2483 = vpop.f32.mrf.mxu0
          %v2484 = vadd.f32 0.0, %v2483
          %2485 = vdwg.mxu0
          %v2486 = vadd.f32 %v2423, %v2444
          %v2487 = vxor.u32 %v2486, 2147483648
          %v2488 = vmul.f32 %v2487, 1.442695
          %v2489 = vpow.pop %v2488
          %v2490 = vadd.f32 %v2489, 1.0
          %v2491 = vrcp.pop %v2490
          %v2492 = vmul.f32 %v2490, %v2491
          %v2493 = vsub.f32 1.0, %v2492
          %v2494 = vmul.f32 %v2491, %v2493
          %v2495 = vadd.f32 %v2491, %v2494
          %vm2496 = vweird.f32 %v2490
          %vm2497 = vweird.f32 %v2491
          %vm2498 = vmor %vm2496, %vm2497
          %v2499 = vsel %vm2498, %v2491, %v2495
          %v2500 = vand.u32 2147483647, %v2490
          %vm2501 = vcmp.eq.f32.partialorder %v2500, 8.507059e+37
          %v2502 = vand.u32 %v2490, 2147483648
          %v2503 = vor.u32 1.1754944e-38, %v2502
          %v2504 = vsel %vm2501, %v2503, %v2499
          %v2505 = vmul.f32 1.0, %v2504
          %v2506 = vadd.f32 %v2424, %v2464
          %v2507 = vxor.u32 %v2506, 2147483648
          %v2508 = vmul.f32 %v2507, 1.442695
          %v2509 = vpow.pop %v2508
          %v2510 = vadd.f32 %v2509, 1.0
          %v2511 = vrcp.pop %v2510
          %v2512 = vmul.f32 %v2510, %v2511
          %v2513 = vsub.f32 1.0, %v2512
          %v2514 = vmul.f32 %v2511, %v2513
          %v2515 = vadd.f32 %v2511, %v2514
          %vm2516 = vweird.f32 %v2510
          %vm2517 = vweird.f32 %v2511
          %vm2518 = vmor %vm2516, %vm2517
          %v2519 = vsel %vm2518, %v2511, %v2515
          %v2520 = vand.u32 2147483647, %v2510
          %vm2521 = vcmp.eq.f32.partialorder %v2520, 8.507059e+37
          %v2522 = vand.u32 %v2510, 2147483648
          %v2523 = vor.u32 1.1754944e-38, %v2522
          %v2524 = vsel %vm2521, %v2523, %v2519
          %v2525 = vmul.f32 1.0, %v2524
          %v2526 = vadd.f32 %v2484, %v1685
          %v2527 = vmul.f32 %v2505, %v2526
          %v2528 = vadd.f32 %v2425, %v2527
          %v2529 = vtanh.pop %v2528
          %v2530 = vsub.f32 1.0, %v2525
          %v2531 = vmul.f32 %v2530, %v2529
          %v2532 = vmul.f32 %v2525, %v2414
          %v2533 = vadd.f32 %v2531, %v2532
          %vm2534 = vcmp.gt.s32.totalorder %v421, 0
          %v2535 = vmax.f32 %v2422, %v2533
          %v2536 = vsel %vm2534, 1, 0
          %2537 = vset.pattern.permute.xlu0 0
          %2538 = vperm.xlu0 %2537, %v2536
          %v2539 = vpop.permute.xlu0 %2538
          %vm2540 = vcmp.eq.s32.totalorder %v2539, 1
          %v2541 = vsel %vm2540, %v2535, %v2422
          %2542 = vst [vmem:[%s351] sm:$0xff] %v2541
        $region64: #{tpu_custom_call.1} parent=43 // pred_fallthru
          _
        %s2543 = sand.u32 %s178, 1
        %s2544 = scalar_lea.sflag [#allocation5], %s2543
        %s2545 = sand.u32 %s178, 1
        %s2546 = smul.addr %s2545, 8
        %s2547 = scalar_lea.vmem [#allocation9], %s2546
        // Predicated region
        $region65: #{tpu_custom_call.1} parent=43 // pred_check
          %p2548 = pneg %p188
        $region66: #{tpu_custom_call.1} parent=43 // pred_check_branch
          %2550 = sbr.rel (%p2548) target = $region68
        $region67: #{tpu_custom_call.1} parent=43 // pred_region
          %2552 = vsyncadd %s2544, 0
          %s2553 = smul.addr %s24, 8
          %s2554 = scalar_lea.hbm %s6, %s2553
          %s2556 = sshll.u32 %s2547, 4
          %s2557 = int_to_ptr.vmem [resolvable:$true] %s2556
          %s2558 = sshll.u32 %s2554, 4
          %s2559 = int_to_ptr.hbm [resolvable:$true] %s2558
          %2561 = dma.vmem_to_hbm [thread:$0]  %s2557, 128, %s2559, %s2544
        $region68: #{tpu_custom_call.1} parent=43 // pred_fallthru
          _
      $region44: #{tpu_custom_call.1} parent=5 // pred_fallthru
        _
      %p2562 = scmp.le.s32.totalorder 2, %s19
      // Predicated region
      $region69: #{tpu_custom_call.1} parent=5 // pred_check
        %p2563 = pneg %p2562
      $region70: #{tpu_custom_call.1} parent=5 // pred_check_branch
        %2565 = sbr.rel (%p2563) target = $region72
      $region71: #{tpu_custom_call.1} parent=5 // pred_region
        %s2566 = ssub.s32 %s19, 2
        // Predicated region
        $region73: #{tpu_custom_call.1} parent=71 // pred_check
          %p2567 = pneg %p194
        $region74: #{tpu_custom_call.1} parent=71 // pred_check_branch
          %2569 = sbr.rel (%p2567) target = $region76
        $region75: #{tpu_custom_call.1} parent=71 // pred_region
          %s2570 = sand.u32 %s179, 1
          %s2571 = scalar_lea.sflag [#allocation5], %s2570
          %s2572 = sand.u32 %s179, 1
          %s2573 = smul.addr %s2572, 8
          %s2574 = scalar_lea.vmem [#allocation9], %s2573
          %2576 = dma.done %s2571, 128
        $region76: #{tpu_custom_call.1} parent=71 // pred_fallthru
          _
      $region72: #{tpu_custom_call.1} parent=5 // pred_fallthru
        _
    $region6: #{tpu_custom_call.1} parent=1 // loop_footer
      %s23 = sadd.s32 1, %s19
    $region7: #{tpu_custom_call.1} parent=1 // loop_footer_branch
      %18 = sbr.rel target = $region3
    $region8: #{tpu_custom_call.1} parent=1 // loop_exit
      _
    %2577 = vsyncpa [#allocation4], 1
    %s2578 = scalar_lea.sflag [#allocation4], 1
    %2579 = vsyncpa %s2578, 1
    %2580 = vsyncpa [#allocation7], 1
    %s2581 = scalar_lea.sflag [#allocation7], 1
    %2582 = vsyncpa %s2581, 1
    %2583 = vsyncpa [#allocation5], 1
    %s2584 = scalar_lea.sflag [#allocation5], 1
    %2585 = vsyncpa %s2584, 1

</llo_original>
